<compile_context>
chip_gen: v5e
topology: v5e:2x2
jax: 0.10.0
libtpu: 0.0.40
codegen_flags: <defaults>
</compile_context>

<pallas_src>
import functools
import math

import jax
import jax.numpy as jnp
from jax import lax
from jax.experimental import pallas as pl
from jax.experimental.pallas import tpu as pltpu

_LANES = 128


def _rup(n, m=_LANES):
    return ((n + m - 1) // m) * m


def _pad_to(a, shape):
    return jnp.pad(a, [(0, s - d) for d, s in zip(a.shape, shape)])


def _silu(v, approx=True):
    den = 1.0 + jnp.exp(-v)
    if approx:
        # sigmoid via EUP exp + approximate reciprocal (EUP slot, nearly free).
        return v * pl.reciprocal(den, approx=True)
    return v / den


def _leaky(v):
    return jnp.where(v >= 0, v, 0.1 * v)


# ---------------------------------------------------------------------------
# Fused kernel: one grid step = `TH` rows of one image (channels-last,
# channel dims padded to 128 lanes).  The input block carries a +/-1 row halo.
# ---------------------------------------------------------------------------
def _fused_csp_kernel(x_ref, wpre_ref, b1_ref, wb1_ref, w3_ref, wbc_ref,
                      sh1_ref, sh2_ref, wo_ref, out_ref, tpad_ref, *, TH, W):
    c1p = b1_ref.shape[1]
    c2p = wb1_ref.shape[1]
    Rh = (TH + 2) * W            # rows incl. halo
    Rm = TH * W                  # rows written out
    bf16 = jnp.bfloat16
    f32 = jnp.float32
    tile = pl.program_id(1)
    n_tiles = pl.num_programs(1)

    x = x_ref[...].reshape(Rh, x_ref.shape[-1])          # bf16 already

    # conv_1 (with bias) and skip_conv (BN scale pre-folded) share x -> one
    # K=128, N=256 matmul; the split at lane offset 128 is tile-aligned.
    yz = jnp.dot(x, wpre_ref[...], preferred_element_type=f32)
    y = yz[:, :c1p] + b1_ref[...]                         # conv_1 output (f32)
    skip = yz[:, c1p:]                                    # skip_conv * sc2

    # Bottleneck.conv_1: 1x1 + SiLU (computed for the halo rows too).
    t = _silu(jnp.dot(y.astype(bf16), wb1_ref[...], preferred_element_type=f32))

    # Bottleneck.conv_2: 3x3 SAME conv via an in-VMEM halo buffer.  Payload at
    # sublane offset 8 (aligned store); only the two 8-wide W-padding column
    # slabs are re-zeroed each step (never the payload area).
    ring = jnp.zeros((TH + 2, 8, c2p), f32)
    tpad_ref[:, 0:8, :] = ring
    tpad_ref[:, 8 + W:16 + W, :] = ring
    tpad_ref[:, 8:8 + W, :] = t.reshape(TH + 2, W, c2p)

    # SAME padding in H: at the image top/bottom the halo row must be zero
    # (the 3x3 pads t, not x), so overwrite it for the boundary tiles only.
    zrow = jnp.zeros((1, W, c2p), f32)

    @pl.when(tile == 0)
    def _():
        tpad_ref[0:1, 8:8 + W, :] = zrow

    @pl.when(tile == n_tiles - 1)
    def _():
        tpad_ref[TH + 1:TH + 2, 8:8 + W, :] = zrow

    # 9 accumulated dots on shifted halo views (no (R, 9*c2) concat).
    acc = jnp.zeros((Rm, c1p), f32)
    for ky in range(3):
        for kx in range(3):
            v = tpad_ref[ky:ky + TH, 7 + kx:7 + kx + W, :]
            v = v.reshape(Rm, c2p).astype(bf16)
            acc = acc + jnp.dot(v, w3_ref[ky * 3 + kx],
                                preferred_element_type=f32)

    y_mid = y.reshape(TH + 2, W, c1p)[1:TH + 1].reshape(Rm, c1p)
    skip_mid = skip.reshape(TH + 2, W, c1p)[1:TH + 1].reshape(Rm, c1p)

    b = _silu(acc) + y_mid                                # shortcut add

    # bottle_conv (BN scale folded in) + BN shift + LeakyReLU(0.1).
    z1 = _leaky(jnp.dot(b.astype(bf16), wbc_ref[...],
                        preferred_element_type=f32) + sh1_ref[...])
    z2 = _leaky(skip_mid + sh2_ref[...])

    # out_conv split into two dots (no (R, 2*c1) concat materialisation).
    o = (jnp.dot(z1.astype(bf16), wo_ref[0], preferred_element_type=f32)
         + jnp.dot(z2.astype(bf16), wo_ref[1], preferred_element_type=f32))
    # Final SiLU uses the exact reciprocal (output-path accuracy).
    out_ref[...] = _silu(o, approx=False).reshape(1, TH, W, c1p).astype(out_ref.dtype)


# ---------------------------------------------------------------------------
# Wrapper (NCHW f32 in / NCHW f32 out to match the PyTorch module).
# ---------------------------------------------------------------------------
def bottleneck_csp_forward(x_nchw, p, row_tile=8):
    N, c_in, H, W = x_nchw.shape
    c1 = p["w1"].shape[1]          # _c = int(c_out * exp)
    c2 = p["wb1"].shape[1]         # Bottleneck hidden width
    c_in_p, c1p, c2p = _rup(c_in), _rup(c1), _rup(c2)
    bf16 = jnp.bfloat16

    # Row tile: size per generation so (TH+2)*W*(channels) fits the VMEM
    # budget (v7x has 64 MiB/TC).  Falls back to one tile if not divisible.
    TH = row_tile if (H % row_tile == 0) else H
    n_tiles = H // TH

    # Channels-last, bf16 (halves input DMA), lane-padded channels.
    x = jnp.transpose(x_nchw, (0, 2, 3, 1)).astype(bf16)
    x = _pad_to(x, (N, H, W, c_in_p))
    # Pre-haloed row tiles: +/-1 row of overlap; boundary halo rows are zero x
    # (the kernel re-zeros the corresponding t halo rows, so their content is
    # irrelevant).  Layout plumbing only.
    xh = jnp.pad(x, ((0, 0), (1, 1), (0, 0), (0, 0)))
    x_tiles = jnp.concatenate(
        [xh[:, i * TH:i * TH + TH + 2][:, None] for i in range(n_tiles)], axis=1)
    x_tiles = x_tiles.reshape(N * n_tiles, TH + 2, W, c_in_p)

    # Trace-time weight prep: merge conv_1/skip, fold BN scales, zero-pad
    # channel dims to 128 lanes, cast MXU operands to bf16.
    w1 = _pad_to(p["w1"], (c_in_p, c1p))
    ws = _pad_to(p["ws"] * p["sc2"], (c_in_p, c1p))
    wpre = jnp.concatenate([w1, ws], axis=1).astype(bf16)        # (c_in_p, 2*c1p)
    b1 = _pad_to(p["b1"], (1, c1p))
    wb1 = _pad_to(p["wb1"], (c1p, c2p)).astype(bf16)
    w3 = _pad_to(p["w3"], (3, 3, c2p, c1p)).reshape(9, c2p, c1p).astype(bf16)
    wbc = _pad_to(p["wbc"] * p["sc1"], (c1p, c1p)).astype(bf16)
    sh1 = _pad_to(p["sh1"], (1, c1p))
    sh2 = _pad_to(p["sh2"], (1, c1p))
    wo = jnp.stack([_pad_to(p["wo"][:c1], (c1p, c1p)),
                    _pad_to(p["wo"][c1:], (c1p, c1p))]).astype(bf16)

    kernel = functools.partial(_fused_csp_kernel, TH=TH, W=W)

    def _rep(a):
        return pl.BlockSpec(a.shape, lambda n, i, _nd=a.ndim: (0,) * _nd)

    out = pl.pallas_call(
        kernel,
        grid=(N, n_tiles),
        in_specs=[pl.BlockSpec((1, TH + 2, W, c_in_p),
                               lambda n, i, _nt=n_tiles: (n * _nt + i, 0, 0, 0)),
                  _rep(wpre), _rep(b1), _rep(wb1), _rep(w3), _rep(wbc),
                  _rep(sh1), _rep(sh2), _rep(wo)],
        out_specs=pl.BlockSpec((1, TH, W, c1p), lambda n, i: (n, i, 0, 0)),
        out_shape=jax.ShapeDtypeStruct((N, H, W, c1p), bf16),
        scratch_shapes=[pltpu.VMEM((TH + 2, W + 16, c2p), jnp.float32)],
        compiler_params=pltpu.CompilerParams(
            dimension_semantics=("parallel", "parallel"),
            # Raise per generation when row tiles grow (v5e scoped default is
            # only 16 MiB); 32 MiB is safely below physical on all parts.
            vmem_limit_bytes=32 * 1024 * 1024),
    )(x_tiles, wpre, b1, wb1, w3, wbc, sh1, sh2, wo)

    # Slice away the lane padding, back to NCHW f32 (module interface).
    return jnp.transpose(out[..., :c1].astype(jnp.float32), (0, 3, 1, 2))


# ---------------------------------------------------------------------------
# Deterministic parameter initialization (shapes from BottleneckCSP.__init__)
# ---------------------------------------------------------------------------
def init_params(key, c_in, c_out, exp=0.5):
    c1 = int(c_out * exp)       # _c
    c2 = int(exp * c1)          # Bottleneck hidden width
    ks = jax.random.split(key, 12)

    def w(k, shape, fan_in):
        return jax.random.normal(k, shape, jnp.float32) / math.sqrt(fan_in)

    p = {}
    p["w1"] = w(ks[0], (c_in, c1), c_in)           # conv_1 (with bias)
    p["b1"] = w(ks[1], (1, c1), c_in)
    p["ws"] = w(ks[2], (c_in, c1), c_in)           # skip_conv
    p["wb1"] = w(ks[3], (c1, c2), c1)              # Bottleneck.conv_1
    p["w3"] = w(ks[4], (3, 3, c2, c1), 9 * c2)     # Bottleneck.conv_2, HWIO
    p["wbc"] = w(ks[5], (c1, c1), c1)              # bottle_conv
    # BatchNorm2d(2*_c) eval-mode parameters folded to scale/shift.
    gamma = 1.0 + 0.1 * jax.random.normal(ks[6], (2 * c1,), jnp.float32)
    beta = 0.1 * jax.random.normal(ks[7], (2 * c1,), jnp.float32)
    rmean = 0.1 * jax.random.normal(ks[8], (2 * c1,), jnp.float32)
    rvar = 1.0 + 0.5 * jax.random.uniform(ks[9], (2 * c1,), jnp.float32)
    scale = gamma / jnp.sqrt(rvar + 1e-5)
    shift = beta - rmean * scale
    p["sc1"] = scale[:c1].reshape(1, c1)
    p["sc2"] = scale[c1:].reshape(1, c1)
    p["sh1"] = shift[:c1].reshape(1, c1)
    p["sh2"] = shift[c1:].reshape(1, c1)
    p["wo"] = w(ks[10], (2 * c1, c1), 2 * c1)      # out_conv
    return p


# ---------------------------------------------------------------------------
# Pure-JAX f32 reference (same eval-mode semantics) for correctness check.
# ---------------------------------------------------------------------------
def reference_forward(x_nchw, p):
    hp = lax.Precision.HIGHEST
    x = jnp.transpose(x_nchw, (0, 2, 3, 1))

    def conv1x1(t, wmat, b=None):
        y = jnp.einsum("nhwc,cd->nhwd", t, wmat, precision=hp)
        return y if b is None else y + b.reshape(1, 1, 1, -1)

    silu = lambda v: v * (1.0 / (1.0 + jnp.exp(-v)))
    skip = conv1x1(x, p["ws"])
    y = conv1x1(x, p["w1"], p["b1"])
    t = silu(conv1x1(y, p["wb1"]))
    t2 = lax.conv_general_dilated(t, p["w3"], (1, 1), "SAME",
                                  dimension_numbers=("NHWC", "HWIO", "NHWC"),
                                  precision=hp)
    b = silu(t2) + y
    ybc = conv1x1(b, p["wbc"])
    sc = jnp.concatenate([p["sc1"], p["sc2"]], axis=-1).reshape(1, 1, 1, -1)
    sh = jnp.concatenate([p["sh1"], p["sh2"]], axis=-1).reshape(1, 1, 1, -1)
    z = jnp.concatenate([ybc, skip], axis=-1) * sc + sh
    z = jnp.where(z >= 0, z, 0.1 * z)
    o = silu(conv1x1(z, p["wo"]))
    return jnp.transpose(o, (0, 3, 1, 2))


if __name__ == "__main__":
    N, C_IN, H, W = 2, 8, 16, 16
    C_OUT = 8                                    # -> _c = 4, hidden = 2
    key = jax.random.PRNGKey(0)
    kx, kp = jax.random.split(key)
    x = jax.random.normal(kx, (N, C_IN, H, W), jnp.float32)
    params = init_params(kp, C_IN, C_OUT)

    # row_tile=8 -> 2 row tiles per image (exercises the halo path).
    out = jax.jit(bottleneck_csp_forward)(x, params)
    out = jax.block_until_ready(out)

    ref = reference_forward(x, params)
    assert out.shape == (N, int(C_OUT * 0.5), H, W)
    # bf16 matmuls / bf16 output + approx intermediates vs f32 HIGHEST ref.
    assert jnp.allclose(out, ref, atol=5e-2, rtol=5e-2), \
        float(jnp.max(jnp.abs(out - ref)))
    print("KERNEL_OK")
</pallas_src>

<mosaic_0001>
module attributes {stable_mosaic.version = 11 : i64} {
  func.func @_fused_csp_kernel(%arg0: i32, %arg1: i32, %arg2: memref<1x10x16x128xbf16, #tpu.memory_space<vmem>>, %arg3: memref<128x256xbf16, #tpu.memory_space<vmem>>, %arg4: memref<1x128xf32, #tpu.memory_space<vmem>>, %arg5: memref<128x128xbf16, #tpu.memory_space<vmem>>, %arg6: memref<9x128x128xbf16, #tpu.memory_space<vmem>>, %arg7: memref<128x128xbf16, #tpu.memory_space<vmem>>, %arg8: memref<1x128xf32, #tpu.memory_space<vmem>>, %arg9: memref<1x128xf32, #tpu.memory_space<vmem>>, %arg10: memref<2x128x128xbf16, #tpu.memory_space<vmem>>, %arg11: memref<1x8x16x128xbf16, #tpu.memory_space<vmem>>, %arg12: memref<10x32x128xf32, #tpu.memory_space<vmem>>) attributes {dimension_semantics = [#tpu.dimension_semantics<parallel>, #tpu.dimension_semantics<parallel>], iteration_bounds = array<i64: 2, 2>, scalar_prefetch = 0 : i64, scratch_operands = 1 : i64, tpu.core_type = #tpu.core_type<tc>, window_params = [{transform_indices = @transform_0, window_bounds = array<i64: 1, 10, 16, 128>}, {pipeline_mode = #tpu.pipeline_mode<synchronous>, transform_indices = @transform_1, window_bounds = array<i64: 128, 256>}, {pipeline_mode = #tpu.pipeline_mode<synchronous>, transform_indices = @transform_2, window_bounds = array<i64: 1, 128>}, {pipeline_mode = #tpu.pipeline_mode<synchronous>, transform_indices = @transform_3, window_bounds = array<i64: 128, 128>}, {pipeline_mode = #tpu.pipeline_mode<synchronous>, transform_indices = @transform_4, window_bounds = array<i64: 9, 128, 128>}, {pipeline_mode = #tpu.pipeline_mode<synchronous>, transform_indices = @transform_5, window_bounds = array<i64: 128, 128>}, {pipeline_mode = #tpu.pipeline_mode<synchronous>, transform_indices = @transform_6, window_bounds = array<i64: 1, 128>}, {pipeline_mode = #tpu.pipeline_mode<synchronous>, transform_indices = @transform_7, window_bounds = array<i64: 1, 128>}, {pipeline_mode = #tpu.pipeline_mode<synchronous>, transform_indices = @transform_8, window_bounds = array<i64: 2, 128, 128>}, {transform_indices = @transform_9, window_bounds = array<i64: 1, 8, 16, 128>}]} {
    %c0 = arith.constant 0 : index
    %c0_0 = arith.constant 0 : index
    %c0_1 = arith.constant 0 : index
    %c0_2 = arith.constant 0 : index
    %0 = vector.load %arg2[%c0, %c0_0, %c0_1, %c0_2] : memref<1x10x16x128xbf16, #tpu.memory_space<vmem>>, vector<1x10x16x128xbf16>
    %1 = vector.shape_cast %0 : vector<1x10x16x128xbf16> to vector<160x128xbf16>
    %c0_3 = arith.constant 0 : index
    %c0_4 = arith.constant 0 : index
    %2 = vector.load %arg3[%c0_3, %c0_4] : memref<128x256xbf16, #tpu.memory_space<vmem>>, vector<128x256xbf16>
    %cst = arith.constant dense<0.000000e+00> : vector<160x256xf32>
    %3 = tpu.matmul %1, %2, %cst {dimension_numbers = #tpu.dot_dimension_numbers<[1], [0], [0], [1], [0, 0, 1, 1], [], []>} : vector<160x128xbf16>, vector<128x256xbf16>, vector<160x256xf32> -> vector<160x256xf32>
    %4 = vector.extract_strided_slice %3 {offsets = [0, 0], sizes = [160, 128], strides = [1, 1]} : vector<160x256xf32> to vector<160x128xf32>
    %c0_5 = arith.constant 0 : index
    %c0_6 = arith.constant 0 : index
    %5 = vector.load %arg4[%c0_5, %c0_6] : memref<1x128xf32, #tpu.memory_space<vmem>>, vector<1x128xf32>
    %6 = vector.broadcast %5 : vector<1x128xf32> to vector<160x128xf32>
    %7 = arith.addf %4, %6 : vector<160x128xf32>
    %8 = vector.extract_strided_slice %3 {offsets = [0, 128], sizes = [160, 128], strides = [1, 1]} : vector<160x256xf32> to vector<160x128xf32>
    %9 = arith.truncf %7 : vector<160x128xf32> to vector<160x128xbf16>
    %c0_7 = arith.constant 0 : index
    %c0_8 = arith.constant 0 : index
    %10 = vector.load %arg5[%c0_7, %c0_8] : memref<128x128xbf16, #tpu.memory_space<vmem>>, vector<128x128xbf16>
    %cst_9 = arith.constant dense<0.000000e+00> : vector<160x128xf32>
    %11 = tpu.matmul %9, %10, %cst_9 {dimension_numbers = #tpu.dot_dimension_numbers<[1], [0], [0], [1], [0, 0, 1, 1], [], []>} : vector<160x128xbf16>, vector<128x128xbf16>, vector<160x128xf32> -> vector<160x128xf32>
    %cst_10 = arith.constant 0.000000e+00 : f32
    %12 = vector.broadcast %cst_10 : f32 to vector<160x128xf32>
    %13 = arith.subf %12, %11 : vector<160x128xf32>
    %14 = math.exp %13 : vector<160x128xf32>
    %cst_11 = arith.constant 1.000000e+00 : f32
    %15 = vector.broadcast %cst_11 : f32 to vector<160x128xf32>
    %16 = arith.addf %15, %14 : vector<160x128xf32>
    %17 = tpu.reciprocal %16 {approx = true} : vector<160x128xf32> -> vector<160x128xf32>
    %18 = arith.mulf %11, %17 : vector<160x128xf32>
    %cst_12 = arith.constant 0.000000e+00 : f32
    %19 = vector.broadcast %cst_12 : f32 to vector<10x8x128xf32>
    %c0_13 = arith.constant 0 : index
    %c0_14 = arith.constant 0 : index
    %c0_15 = arith.constant 0 : index
    %20 = vector.load %arg12[%c0_13, %c0_14, %c0_15] : memref<10x32x128xf32, #tpu.memory_space<vmem>>, vector<10x8x128xf32>
    tpu.vector_store %arg12[%c0_13, %c0_14, %c0_15], %19 {strides = array<i32>} : memref<10x32x128xf32, #tpu.memory_space<vmem>>, vector<10x8x128xf32>,
    %c0_16 = arith.constant 0 : index
    %c24 = arith.constant 24 : index
    %c0_17 = arith.constant 0 : index
    %21 = vector.load %arg12[%c0_16, %c24, %c0_17] : memref<10x32x128xf32, #tpu.memory_space<vmem>>, vector<10x8x128xf32>
    tpu.vector_store %arg12[%c0_16, %c24, %c0_17], %19 {strides = array<i32>} : memref<10x32x128xf32, #tpu.memory_space<vmem>>, vector<10x8x128xf32>,
    %22 = vector.shape_cast %18 : vector<160x128xf32> to vector<10x16x128xf32>
    %c0_18 = arith.constant 0 : index
    %c8 = arith.constant 8 : index
    %c0_19 = arith.constant 0 : index
    %23 = vector.load %arg12[%c0_18, %c8, %c0_19] : memref<10x32x128xf32, #tpu.memory_space<vmem>>, vector<10x16x128xf32>
    tpu.vector_store %arg12[%c0_18, %c8, %c0_19], %22 {strides = array<i32>} : memref<10x32x128xf32, #tpu.memory_space<vmem>>, vector<10x16x128xf32>,
    %cst_20 = arith.constant 0.000000e+00 : f32
    %24 = vector.broadcast %cst_20 : f32 to vector<1x16x128xf32>
    %c0_i32 = arith.constant 0 : i32
    %25 = arith.cmpi eq, %arg1, %c0_i32 : i32
    %26 = arith.extui %25 : i1 to i32
    %c0_i32_21 = arith.constant 0 : i32
    %27 = arith.cmpi ne, %26, %c0_i32_21 : i32
    scf.if %27 {
      %c0_106 = arith.constant 0 : index
      %c8_107 = arith.constant 8 : index
      %c0_108 = arith.constant 0 : index
      %146 = vector.load %arg12[%c0_106, %c8_107, %c0_108] : memref<10x32x128xf32, #tpu.memory_space<vmem>>, vector<1x16x128xf32>
      tpu.vector_store %arg12[%c0_106, %c8_107, %c0_108], %24 {strides = array<i32>} : memref<10x32x128xf32, #tpu.memory_space<vmem>>, vector<1x16x128xf32>,
    } else {
    }
    %c1_i32 = arith.constant 1 : i32
    %28 = arith.cmpi eq, %arg1, %c1_i32 : i32
    %29 = arith.extui %28 : i1 to i32
    %c0_i32_22 = arith.constant 0 : i32
    %30 = arith.cmpi ne, %29, %c0_i32_22 : i32
    scf.if %30 {
      %c9_106 = arith.constant 9 : index
      %c8_107 = arith.constant 8 : index
      %c0_108 = arith.constant 0 : index
      %146 = vector.load %arg12[%c9_106, %c8_107, %c0_108] : memref<10x32x128xf32, #tpu.memory_space<vmem>>, vector<1x16x128xf32>
      tpu.vector_store %arg12[%c9_106, %c8_107, %c0_108], %24 {strides = array<i32>} : memref<10x32x128xf32, #tpu.memory_space<vmem>>, vector<1x16x128xf32>,
    } else {
    }
    %cst_23 = arith.constant 0.000000e+00 : f32
    %31 = vector.broadcast %cst_23 : f32 to vector<128x128xf32>
    %c0_24 = arith.constant 0 : index
    %c7 = arith.constant 7 : index
    %c0_25 = arith.constant 0 : index
    %32 = vector.load %arg12[%c0_24, %c7, %c0_25] : memref<10x32x128xf32, #tpu.memory_space<vmem>>, vector<8x16x128xf32>
    %33 = vector.shape_cast %32 : vector<8x16x128xf32> to vector<128x128xf32>
    %34 = arith.truncf %33 : vector<128x128xf32> to vector<128x128xbf16>
    %c0_26 = arith.constant 0 : index
    %c0_27 = arith.constant 0 : index
    %c0_28 = arith.constant 0 : index
    %35 = vector.load %arg6[%c0_26, %c0_27, %c0_28] : memref<9x128x128xbf16, #tpu.memory_space<vmem>>, vector<1x128x128xbf16>
    %36 = vector.shape_cast %35 : vector<1x128x128xbf16> to vector<128x128xbf16>
    %cst_29 = arith.constant dense<0.000000e+00> : vector<128x128xf32>
    %37 = tpu.matmul %34, %36, %cst_29 {dimension_numbers = #tpu.dot_dimension_numbers<[1], [0], [0], [1], [0, 0, 1, 1], [], []>} : vector<128x128xbf16>, vector<128x128xbf16>, vector<128x128xf32> -> vector<128x128xf32>
    %38 = arith.addf %31, %37 : vector<128x128xf32>
    %c0_30 = arith.constant 0 : index
    %c8_31 = arith.constant 8 : index
    %c0_32 = arith.constant 0 : index
    %39 = vector.load %arg12[%c0_30, %c8_31, %c0_32] : memref<10x32x128xf32, #tpu.memory_space<vmem>>, vector<8x16x128xf32>
    %40 = vector.shape_cast %39 : vector<8x16x128xf32> to vector<128x128xf32>
    %41 = arith.truncf %40 : vector<128x128xf32> to vector<128x128xbf16>
    %c1 = arith.constant 1 : index
    %c0_33 = arith.constant 0 : index
    %c0_34 = arith.constant 0 : index
    %42 = vector.load %arg6[%c1, %c0_33, %c0_34] : memref<9x128x128xbf16, #tpu.memory_space<vmem>>, vector<1x128x128xbf16>
    %43 = vector.shape_cast %42 : vector<1x128x128xbf16> to vector<128x128xbf16>
    %cst_35 = arith.constant dense<0.000000e+00> : vector<128x128xf32>
    %44 = tpu.matmul %41, %43, %cst_35 {dimension_numbers = #tpu.dot_dimension_numbers<[1], [0], [0], [1], [0, 0, 1, 1], [], []>} : vector<128x128xbf16>, vector<128x128xbf16>, vector<128x128xf32> -> vector<128x128xf32>
    %45 = arith.addf %38, %44 : vector<128x128xf32>
    %c0_36 = arith.constant 0 : index
    %c9 = arith.constant 9 : index
    %c0_37 = arith.constant 0 : index
    %46 = vector.load %arg12[%c0_36, %c9, %c0_37] : memref<10x32x128xf32, #tpu.memory_space<vmem>>, vector<8x16x128xf32>
    %47 = vector.shape_cast %46 : vector<8x16x128xf32> to vector<128x128xf32>
    %48 = arith.truncf %47 : vector<128x128xf32> to vector<128x128xbf16>
    %c2 = arith.constant 2 : index
    %c0_38 = arith.constant 0 : index
    %c0_39 = arith.constant 0 : index
    %49 = vector.load %arg6[%c2, %c0_38, %c0_39] : memref<9x128x128xbf16, #tpu.memory_space<vmem>>, vector<1x128x128xbf16>
    %50 = vector.shape_cast %49 : vector<1x128x128xbf16> to vector<128x128xbf16>
    %cst_40 = arith.constant dense<0.000000e+00> : vector<128x128xf32>
    %51 = tpu.matmul %48, %50, %cst_40 {dimension_numbers = #tpu.dot_dimension_numbers<[1], [0], [0], [1], [0, 0, 1, 1], [], []>} : vector<128x128xbf16>, vector<128x128xbf16>, vector<128x128xf32> -> vector<128x128xf32>
    %52 = arith.addf %45, %51 : vector<128x128xf32>
    %c1_41 = arith.constant 1 : index
    %c7_42 = arith.constant 7 : index
    %c0_43 = arith.constant 0 : index
    %53 = vector.load %arg12[%c1_41, %c7_42, %c0_43] : memref<10x32x128xf32, #tpu.memory_space<vmem>>, vector<8x16x128xf32>
    %54 = vector.shape_cast %53 : vector<8x16x128xf32> to vector<128x128xf32>
    %55 = arith.truncf %54 : vector<128x128xf32> to vector<128x128xbf16>
    %c3 = arith.constant 3 : index
    %c0_44 = arith.constant 0 : index
    %c0_45 = arith.constant 0 : index
    %56 = vector.load %arg6[%c3, %c0_44, %c0_45] : memref<9x128x128xbf16, #tpu.memory_space<vmem>>, vector<1x128x128xbf16>
    %57 = vector.shape_cast %56 : vector<1x128x128xbf16> to vector<128x128xbf16>
    %cst_46 = arith.constant dense<0.000000e+00> : vector<128x128xf32>
    %58 = tpu.matmul %55, %57, %cst_46 {dimension_numbers = #tpu.dot_dimension_numbers<[1], [0], [0], [1], [0, 0, 1, 1], [], []>} : vector<128x128xbf16>, vector<128x128xbf16>, vector<128x128xf32> -> vector<128x128xf32>
    %59 = arith.addf %52, %58 : vector<128x128xf32>
    %c1_47 = arith.constant 1 : index
    %c8_48 = arith.constant 8 : index
    %c0_49 = arith.constant 0 : index
    %60 = vector.load %arg12[%c1_47, %c8_48, %c0_49] : memref<10x32x128xf32, #tpu.memory_space<vmem>>, vector<8x16x128xf32>
    %61 = vector.shape_cast %60 : vector<8x16x128xf32> to vector<128x128xf32>
    %62 = arith.truncf %61 : vector<128x128xf32> to vector<128x128xbf16>
    %c4 = arith.constant 4 : index
    %c0_50 = arith.constant 0 : index
    %c0_51 = arith.constant 0 : index
    %63 = vector.load %arg6[%c4, %c0_50, %c0_51] : memref<9x128x128xbf16, #tpu.memory_space<vmem>>, vector<1x128x128xbf16>
    %64 = vector.shape_cast %63 : vector<1x128x128xbf16> to vector<128x128xbf16>
    %cst_52 = arith.constant dense<0.000000e+00> : vector<128x128xf32>
    %65 = tpu.matmul %62, %64, %cst_52 {dimension_numbers = #tpu.dot_dimension_numbers<[1], [0], [0], [1], [0, 0, 1, 1], [], []>} : vector<128x128xbf16>, vector<128x128xbf16>, vector<128x128xf32> -> vector<128x128xf32>
    %66 = arith.addf %59, %65 : vector<128x128xf32>
    %c1_53 = arith.constant 1 : index
    %c9_54 = arith.constant 9 : index
    %c0_55 = arith.constant 0 : index
    %67 = vector.load %arg12[%c1_53, %c9_54, %c0_55] : memref<10x32x128xf32, #tpu.memory_space<vmem>>, vector<8x16x128xf32>
    %68 = vector.shape_cast %67 : vector<8x16x128xf32> to vector<128x128xf32>
    %69 = arith.truncf %68 : vector<128x128xf32> to vector<128x128xbf16>
    %c5 = arith.constant 5 : index
    %c0_56 = arith.constant 0 : index
    %c0_57 = arith.constant 0 : index
    %70 = vector.load %arg6[%c5, %c0_56, %c0_57] : memref<9x128x128xbf16, #tpu.memory_space<vmem>>, vector<1x128x128xbf16>
    %71 = vector.shape_cast %70 : vector<1x128x128xbf16> to vector<128x128xbf16>
    %cst_58 = arith.constant dense<0.000000e+00> : vector<128x128xf32>
    %72 = tpu.matmul %69, %71, %cst_58 {dimension_numbers = #tpu.dot_dimension_numbers<[1], [0], [0], [1], [0, 0, 1, 1], [], []>} : vector<128x128xbf16>, vector<128x128xbf16>, vector<128x128xf32> -> vector<128x128xf32>
    %73 = arith.addf %66, %72 : vector<128x128xf32>
    %c2_59 = arith.constant 2 : index
    %c7_60 = arith.constant 7 : index
    %c0_61 = arith.constant 0 : index
    %74 = vector.load %arg12[%c2_59, %c7_60, %c0_61] : memref<10x32x128xf32, #tpu.memory_space<vmem>>, vector<8x16x128xf32>
    %75 = vector.shape_cast %74 : vector<8x16x128xf32> to vector<128x128xf32>
    %76 = arith.truncf %75 : vector<128x128xf32> to vector<128x128xbf16>
    %c6 = arith.constant 6 : index
    %c0_62 = arith.constant 0 : index
    %c0_63 = arith.constant 0 : index
    %77 = vector.load %arg6[%c6, %c0_62, %c0_63] : memref<9x128x128xbf16, #tpu.memory_space<vmem>>, vector<1x128x128xbf16>
    %78 = vector.shape_cast %77 : vector<1x128x128xbf16> to vector<128x128xbf16>
    %cst_64 = arith.constant dense<0.000000e+00> : vector<128x128xf32>
    %79 = tpu.matmul %76, %78, %cst_64 {dimension_numbers = #tpu.dot_dimension_numbers<[1], [0], [0], [1], [0, 0, 1, 1], [], []>} : vector<128x128xbf16>, vector<128x128xbf16>, vector<128x128xf32> -> vector<128x128xf32>
    %80 = arith.addf %73, %79 : vector<128x128xf32>
    %c2_65 = arith.constant 2 : index
    %c8_66 = arith.constant 8 : index
    %c0_67 = arith.constant 0 : index
    %81 = vector.load %arg12[%c2_65, %c8_66, %c0_67] : memref<10x32x128xf32, #tpu.memory_space<vmem>>, vector<8x16x128xf32>
    %82 = vector.shape_cast %81 : vector<8x16x128xf32> to vector<128x128xf32>
    %83 = arith.truncf %82 : vector<128x128xf32> to vector<128x128xbf16>
    %c7_68 = arith.constant 7 : index
    %c0_69 = arith.constant 0 : index
    %c0_70 = arith.constant 0 : index
    %84 = vector.load %arg6[%c7_68, %c0_69, %c0_70] : memref<9x128x128xbf16, #tpu.memory_space<vmem>>, vector<1x128x128xbf16>
    %85 = vector.shape_cast %84 : vector<1x128x128xbf16> to vector<128x128xbf16>
    %cst_71 = arith.constant dense<0.000000e+00> : vector<128x128xf32>
    %86 = tpu.matmul %83, %85, %cst_71 {dimension_numbers = #tpu.dot_dimension_numbers<[1], [0], [0], [1], [0, 0, 1, 1], [], []>} : vector<128x128xbf16>, vector<128x128xbf16>, vector<128x128xf32> -> vector<128x128xf32>
    %87 = arith.addf %80, %86 : vector<128x128xf32>
    %c2_72 = arith.constant 2 : index
    %c9_73 = arith.constant 9 : index
    %c0_74 = arith.constant 0 : index
    %88 = vector.load %arg12[%c2_72, %c9_73, %c0_74] : memref<10x32x128xf32, #tpu.memory_space<vmem>>, vector<8x16x128xf32>
    %89 = vector.shape_cast %88 : vector<8x16x128xf32> to vector<128x128xf32>
    %90 = arith.truncf %89 : vector<128x128xf32> to vector<128x128xbf16>
    %c8_75 = arith.constant 8 : index
    %c0_76 = arith.constant 0 : index
    %c0_77 = arith.constant 0 : index
    %91 = vector.load %arg6[%c8_75, %c0_76, %c0_77] : memref<9x128x128xbf16, #tpu.memory_space<vmem>>, vector<1x128x128xbf16>
    %92 = vector.shape_cast %91 : vector<1x128x128xbf16> to vector<128x128xbf16>
    %cst_78 = arith.constant dense<0.000000e+00> : vector<128x128xf32>
    %93 = tpu.matmul %90, %92, %cst_78 {dimension_numbers = #tpu.dot_dimension_numbers<[1], [0], [0], [1], [0, 0, 1, 1], [], []>} : vector<128x128xbf16>, vector<128x128xbf16>, vector<128x128xf32> -> vector<128x128xf32>
    %94 = arith.addf %87, %93 : vector<128x128xf32>
    %95 = vector.shape_cast %7 : vector<160x128xf32> to vector<10x16x128xf32>
    %96 = vector.extract_strided_slice %95 {offsets = [1, 0, 0], sizes = [8, 16, 128], strides = [1, 1, 1]} : vector<10x16x128xf32> to vector<8x16x128xf32>
    %97 = vector.shape_cast %96 : vector<8x16x128xf32> to vector<128x128xf32>
    %98 = vector.shape_cast %8 : vector<160x128xf32> to vector<10x16x128xf32>
    %99 = vector.extract_strided_slice %98 {offsets = [1, 0, 0], sizes = [8, 16, 128], strides = [1, 1, 1]} : vector<10x16x128xf32> to vector<8x16x128xf32>
    %100 = vector.shape_cast %99 : vector<8x16x128xf32> to vector<128x128xf32>
    %cst_79 = arith.constant 0.000000e+00 : f32
    %101 = vector.broadcast %cst_79 : f32 to vector<128x128xf32>
    %102 = arith.subf %101, %94 : vector<128x128xf32>
    %103 = math.exp %102 : vector<128x128xf32>
    %cst_80 = arith.constant 1.000000e+00 : f32
    %104 = vector.broadcast %cst_80 : f32 to vector<128x128xf32>
    %105 = arith.addf %104, %103 : vector<128x128xf32>
    %106 = tpu.reciprocal %105 {approx = true} : vector<128x128xf32> -> vector<128x128xf32>
    %107 = arith.mulf %94, %106 : vector<128x128xf32>
    %108 = arith.addf %107, %97 : vector<128x128xf32>
    %109 = arith.truncf %108 : vector<128x128xf32> to vector<128x128xbf16>
    %c0_81 = arith.constant 0 : index
    %c0_82 = arith.constant 0 : index
    %110 = vector.load %arg7[%c0_81, %c0_82] : memref<128x128xbf16, #tpu.memory_space<vmem>>, vector<128x128xbf16>
    %cst_83 = arith.constant dense<0.000000e+00> : vector<128x128xf32>
    %111 = tpu.matmul %109, %110, %cst_83 {dimension_numbers = #tpu.dot_dimension_numbers<[1], [0], [0], [1], [0, 0, 1, 1], [], []>} : vector<128x128xbf16>, vector<128x128xbf16>, vector<128x128xf32> -> vector<128x128xf32>
    %c0_84 = arith.constant 0 : index
    %c0_85 = arith.constant 0 : index
    %112 = vector.load %arg8[%c0_84, %c0_85] : memref<1x128xf32, #tpu.memory_space<vmem>>, vector<1x128xf32>
    %113 = vector.broadcast %112 : vector<1x128xf32> to vector<128x128xf32>
    %114 = arith.addf %111, %113 : vector<128x128xf32>
    %cst_86 = arith.constant 0.000000e+00 : f32
    %115 = vector.broadcast %cst_86 : f32 to vector<128x128xf32>
    %116 = arith.cmpf oge, %114, %115 : vector<128x128xf32>
    %cst_87 = arith.constant 1.000000e-01 : f32
    %117 = vector.broadcast %cst_87 : f32 to vector<128x128xf32>
    %118 = arith.mulf %117, %114 : vector<128x128xf32>
    %119 = arith.select %116, %114, %118 : vector<128x128xi1>, vector<128x128xf32>
    %c0_88 = arith.constant 0 : index
    %c0_89 = arith.constant 0 : index
    %120 = vector.load %arg9[%c0_88, %c0_89] : memref<1x128xf32, #tpu.memory_space<vmem>>, vector<1x128xf32>
    %121 = vector.broadcast %120 : vector<1x128xf32> to vector<128x128xf32>
    %122 = arith.addf %100, %121 : vector<128x128xf32>
    %cst_90 = arith.constant 0.000000e+00 : f32
    %123 = vector.broadcast %cst_90 : f32 to vector<128x128xf32>
    %124 = arith.cmpf oge, %122, %123 : vector<128x128xf32>
    %cst_91 = arith.constant 1.000000e-01 : f32
    %125 = vector.broadcast %cst_91 : f32 to vector<128x128xf32>
    %126 = arith.mulf %125, %122 : vector<128x128xf32>
    %127 = arith.select %124, %122, %126 : vector<128x128xi1>, vector<128x128xf32>
    %128 = arith.truncf %119 : vector<128x128xf32> to vector<128x128xbf16>
    %c0_92 = arith.constant 0 : index
    %c0_93 = arith.constant 0 : index
    %c0_94 = arith.constant 0 : index
    %129 = vector.load %arg10[%c0_92, %c0_93, %c0_94] : memref<2x128x128xbf16, #tpu.memory_space<vmem>>, vector<1x128x128xbf16>
    %130 = vector.shape_cast %129 : vector<1x128x128xbf16> to vector<128x128xbf16>
    %cst_95 = arith.constant dense<0.000000e+00> : vector<128x128xf32>
    %131 = tpu.matmul %128, %130, %cst_95 {dimension_numbers = #tpu.dot_dimension_numbers<[1], [0], [0], [1], [0, 0, 1, 1], [], []>} : vector<128x128xbf16>, vector<128x128xbf16>, vector<128x128xf32> -> vector<128x128xf32>
    %132 = arith.truncf %127 : vector<128x128xf32> to vector<128x128xbf16>
    %c1_96 = arith.constant 1 : index
    %c0_97 = arith.constant 0 : index
    %c0_98 = arith.constant 0 : index
    %133 = vector.load %arg10[%c1_96, %c0_97, %c0_98] : memref<2x128x128xbf16, #tpu.memory_space<vmem>>, vector<1x128x128xbf16>
    %134 = vector.shape_cast %133 : vector<1x128x128xbf16> to vector<128x128xbf16>
    %cst_99 = arith.constant dense<0.000000e+00> : vector<128x128xf32>
    %135 = tpu.matmul %132, %134, %cst_99 {dimension_numbers = #tpu.dot_dimension_numbers<[1], [0], [0], [1], [0, 0, 1, 1], [], []>} : vector<128x128xbf16>, vector<128x128xbf16>, vector<128x128xf32> -> vector<128x128xf32>
    %136 = arith.addf %131, %135 : vector<128x128xf32>
    %cst_100 = arith.constant 0.000000e+00 : f32
    %137 = vector.broadcast %cst_100 : f32 to vector<128x128xf32>
    %138 = arith.subf %137, %136 : vector<128x128xf32>
    %139 = math.exp %138 : vector<128x128xf32>
    %cst_101 = arith.constant 1.000000e+00 : f32
    %140 = vector.broadcast %cst_101 : f32 to vector<128x128xf32>
    %141 = arith.addf %140, %139 : vector<128x128xf32>
    %142 = arith.divf %136, %141 : vector<128x128xf32>
    %143 = vector.shape_cast %142 : vector<128x128xf32> to vector<1x8x16x128xf32>
    %144 = arith.truncf %143 : vector<1x8x16x128xf32> to vector<1x8x16x128xbf16>
    %c0_102 = arith.constant 0 : index
    %c0_103 = arith.constant 0 : index
    %c0_104 = arith.constant 0 : index
    %c0_105 = arith.constant 0 : index
    %145 = vector.load %arg11[%c0_102, %c0_103, %c0_104, %c0_105] : memref<1x8x16x128xbf16, #tpu.memory_space<vmem>>, vector<1x8x16x128xbf16>
    tpu.vector_store %arg11[%c0_102, %c0_103, %c0_104, %c0_105], %144 {strides = array<i32>} : memref<1x8x16x128xbf16, #tpu.memory_space<vmem>>, vector<1x8x16x128xbf16>,
    return
  }
  func.func @transform_0(%arg0: i32, %arg1: i32) -> (i32, i32, i32, i32) {
    %c2_i32 = arith.constant 2 : i32
    %0 = arith.muli %arg0, %c2_i32 : i32
    %1 = arith.addi %0, %arg1 : i32
    %c0_i32 = arith.constant 0 : i32
    %c0_i32_0 = arith.constant 0 : i32
    %c0_i32_1 = arith.constant 0 : i32
    %c0_i32_2 = arith.constant 0 : i32
    return %1, %c0_i32, %c0_i32_0, %c0_i32_1 : i32, i32, i32, i32
  }
  func.func @transform_1(%arg0: i32, %arg1: i32) -> (i32, i32) {
    %c0_i32 = arith.constant 0 : i32
    %c0_i32_0 = arith.constant 0 : i32
    %c0_i32_1 = arith.constant 0 : i32
    return %c0_i32, %c0_i32_0 : i32, i32
  }
  func.func @transform_2(%arg0: i32, %arg1: i32) -> (i32, i32) {
    %c0_i32 = arith.constant 0 : i32
    %c0_i32_0 = arith.constant 0 : i32
    %c0_i32_1 = arith.constant 0 : i32
    return %c0_i32, %c0_i32_0 : i32, i32
  }
  func.func @transform_3(%arg0: i32, %arg1: i32) -> (i32, i32) {
    %c0_i32 = arith.constant 0 : i32
    %c0_i32_0 = arith.constant 0 : i32
    %c0_i32_1 = arith.constant 0 : i32
    return %c0_i32, %c0_i32_0 : i32, i32
  }
  func.func @transform_4(%arg0: i32, %arg1: i32) -> (i32, i32, i32) {
    %c0_i32 = arith.constant 0 : i32
    %c0_i32_0 = arith.constant 0 : i32
    %c0_i32_1 = arith.constant 0 : i32
    %c0_i32_2 = arith.constant 0 : i32
    return %c0_i32, %c0_i32_0, %c0_i32_1 : i32, i32, i32
  }
  func.func @transform_5(%arg0: i32, %arg1: i32) -> (i32, i32) {
    %c0_i32 = arith.constant 0 : i32
    %c0_i32_0 = arith.constant 0 : i32
    %c0_i32_1 = arith.constant 0 : i32
    return %c0_i32, %c0_i32_0 : i32, i32
  }
  func.func @transform_6(%arg0: i32, %arg1: i32) -> (i32, i32) {
    %c0_i32 = arith.constant 0 : i32
    %c0_i32_0 = arith.constant 0 : i32
    %c0_i32_1 = arith.constant 0 : i32
    return %c0_i32, %c0_i32_0 : i32, i32
  }
  func.func @transform_7(%arg0: i32, %arg1: i32) -> (i32, i32) {
    %c0_i32 = arith.constant 0 : i32
    %c0_i32_0 = arith.constant 0 : i32
    %c0_i32_1 = arith.constant 0 : i32
    return %c0_i32, %c0_i32_0 : i32, i32
  }
  func.func @transform_8(%arg0: i32, %arg1: i32) -> (i32, i32, i32) {
    %c0_i32 = arith.constant 0 : i32
    %c0_i32_0 = arith.constant 0 : i32
    %c0_i32_1 = arith.constant 0 : i32
    %c0_i32_2 = arith.constant 0 : i32
    return %c0_i32, %c0_i32_0, %c0_i32_1 : i32, i32, i32
  }
  func.func @transform_9(%arg0: i32, %arg1: i32) -> (i32, i32, i32, i32) {
    %c0_i32 = arith.constant 0 : i32
    %c0_i32_0 = arith.constant 0 : i32
    %c0_i32_1 = arith.constant 0 : i32
    return %arg0, %arg1, %c0_i32, %c0_i32_0 : i32, i32, i32, i32
  }
}

</mosaic_0001>

<llo_original>
// kernel: bottleneck_csp_forward.1
$region0: #{bottleneck_csp_forward.1}
  #allocation0 [shape = 'u32[]', space=smem, size = 0x4, offset = 0x4, fixed_abs, tag = 'smem constant byte address 0x4 - core index']
  #allocation1 [shape = 'u32[72,128]{1,0:T(1,128)}', space=vmem, size = 0x9000, scoped, tag = 'internal scratch']
  #allocation2 [shape = 'f32[10,32,128]{2,1,0:T(8,128)}', space=vmem, size = 0x28000, scoped, tag = 'scratch operand']
  %s0 = inlined_call_operand.vmem [shape: bf16[4,10,16,128], index: 0, kind: input, shape index: {}]
  %s1 = inlined_call_operand.vmem [shape: bf16[128,256], index: 1, kind: input, shape index: {}]
  %s2 = inlined_call_operand.vmem [shape: f32[1,128], index: 2, kind: input, shape index: {}]
  %s3 = inlined_call_operand.vmem [shape: bf16[128,128], index: 3, kind: input, shape index: {}]
  %s4 = inlined_call_operand.vmem [shape: bf16[9,128,128], index: 4, kind: input, shape index: {}]
  %s5 = inlined_call_operand.vmem [shape: bf16[128,128], index: 5, kind: input, shape index: {}]
  %s6 = inlined_call_operand.vmem [shape: f32[1,128], index: 6, kind: input, shape index: {}]
  %s7 = inlined_call_operand.vmem [shape: f32[1,128], index: 7, kind: input, shape index: {}]
  %s8 = inlined_call_operand.vmem [shape: bf16[2,128,128], index: 8, kind: input, shape index: {}]
  %s9 = inlined_call_operand.vmem [shape: bf16[2,16,16,128], index: 9, kind: output, shape index: {}]
  %s10 = sld [smem:[#allocation0]]
  $region77: #{bottleneck_csp_forward.1} parent=0
    _
  %s12 = ssub.s32 1, %s10
  %s13 = scalar_select 0, %s12, %s10
  loop: start=0, step=1, limit=6
  $region2: #{bottleneck_csp_forward.1} parent=0 // loop_pre_header
    _
  $region3: #{bottleneck_csp_forward.1} parent=0 // loop_header
    %s15 = sphi 0, %s19
    %p16 = scmp.ge.s32.totalorder %s15, 6
    %s22 = sphi 0, %s34
    %s23 = sphi 0, %s30
    %s24 = sphi 0, %s22
    %s25 = sphi 0, %s23
    %s26 = sphi 0, %s24
    %s27 = sphi 0, %s25
    %s41 = sphi 0, %s43
    %s44 = sphi 0, %s41
    %s45 = sphi 0, %s44
    %s61 = sphi 0, %s45
    %s65 = sphi 0, %s65
    %s67 = sphi 0, %s65
    %s68 = sphi 0, %s67
    %s82 = sphi 0, %s68
    %s86 = sphi 0, %s86
    %s88 = sphi 0, %s86
    %s89 = sphi 0, %s88
    %s103 = sphi 0, %s89
    %s107 = sphi 0, %s107
    %s109 = sphi 0, %s107
    %s110 = sphi 0, %s109
    %s124 = sphi 0, %s110
    %s128 = sphi 0, %s128
    %s130 = sphi 0, %s128
    %s131 = sphi 0, %s130
    %s145 = sphi 0, %s131
    %s149 = sphi 0, %s149
    %s151 = sphi 0, %s149
    %s152 = sphi 0, %s151
    %s166 = sphi 0, %s152
    %s170 = sphi 0, %s170
    %s172 = sphi 0, %s170
    %s173 = sphi 0, %s172
    %s187 = sphi 0, %s173
    %s191 = sphi 0, %s191
    %s193 = sphi 0, %s191
    %s194 = sphi 0, %s193
    %s208 = sphi 0, %s194
    %s212 = sphi 0, %s212
    %s214 = sphi 0, %s212
    %s215 = sphi 0, %s214
    %s229 = sphi 0, %s215
    %s237 = sphi 0, %s239
    %s240 = sphi 0, %s237
    %s241 = sphi 0, %s240
    %s257 = sphi 0, %s241
  $region4: #{bottleneck_csp_forward.1} parent=0 // loop_header_branch
    %18 = sbr.rel (%p16) target = $region8
  $region5: #{bottleneck_csp_forward.1} parent=0 // loop_body
    %s20 = ssub.s32 %s15, 1
    %s21 = ssub.s32 %s15, 2
    %s28 = sadd.s32 1, %s23
    %p29 = scmp.ge.s32.totalorder %s28, 2
    %s30 = scalar_select %p29, 0, %s28
    %s31 = sadd.s32 1, %s22
    %s32 = scalar_select %p29, %s31, %s22
    %p33 = scmp.ge.s32.totalorder %s32, 2
    %s34 = scalar_select %p33, 0, %s32
    %s35 = smul.u32 %s22, 2
    %s36 = sadd.s32 %s35, %s23
    %s37 = smul.u32 %s34, 2
    %s38 = sadd.s32 %s37, %s30
    %s39 = ssub.s32 %s36, %s38
    %p40 = scmp.eq.s32.totalorder %s39, 0
    %s42 = sadd.s32 %s41, 1
    %s43 = scalar_select %p40, %s41, %s42
    %p46 = pneg %p40
    %p47 = scmp.eq.s32.totalorder %s15, 3
    %p48 = por %p46, %p47
    %p49 = scmp.ne.s32.totalorder %s41, %s44
    %p50 = scmp.eq.s32.totalorder %s15, 0
    %p51 = por %p49, %p50
    %p52 = scmp.ne.s32.totalorder %s41, %s44
    %p53 = scmp.eq.s32.totalorder %s20, 3
    %p54 = por %p52, %p53
    %p55 = scmp.ne.s32.totalorder %s44, %s45
    %p56 = scmp.eq.s32.totalorder %s20, 0
    %p57 = por %p55, %p56
    %p58 = scmp.ne.s32.totalorder %s44, %s45
    %p59 = scmp.eq.s32.totalorder %s21, 3
    %p60 = por %p58, %p59
    %p62 = scmp.ne.s32.totalorder %s45, %s61
    %p63 = scmp.eq.s32.totalorder %s21, 0
    %p64 = por %p62, %p63
    %s66 = sadd.s32 %s65, 1
    %p69 = scmp.eq.s32.totalorder %s15, 3
    %p70 = scmp.ne.s32.totalorder %s65, %s67
    %p71 = scmp.eq.s32.totalorder %s15, 0
    %p72 = por %p70, %p71
    %p73 = scmp.ne.s32.totalorder %s65, %s67
    %p74 = scmp.eq.s32.totalorder %s20, 3
    %p75 = por %p73, %p74
    %p76 = scmp.ne.s32.totalorder %s67, %s68
    %p77 = scmp.eq.s32.totalorder %s20, 0
    %p78 = por %p76, %p77
    %p79 = scmp.ne.s32.totalorder %s67, %s68
    %p80 = scmp.eq.s32.totalorder %s21, 3
    %p81 = por %p79, %p80
    %p83 = scmp.ne.s32.totalorder %s68, %s82
    %p84 = scmp.eq.s32.totalorder %s21, 0
    %p85 = por %p83, %p84
    %s87 = sadd.s32 %s86, 1
    %p90 = scmp.eq.s32.totalorder %s15, 3
    %p91 = scmp.ne.s32.totalorder %s86, %s88
    %p92 = scmp.eq.s32.totalorder %s15, 0
    %p93 = por %p91, %p92
    %p94 = scmp.ne.s32.totalorder %s86, %s88
    %p95 = scmp.eq.s32.totalorder %s20, 3
    %p96 = por %p94, %p95
    %p97 = scmp.ne.s32.totalorder %s88, %s89
    %p98 = scmp.eq.s32.totalorder %s20, 0
    %p99 = por %p97, %p98
    %p100 = scmp.ne.s32.totalorder %s88, %s89
    %p101 = scmp.eq.s32.totalorder %s21, 3
    %p102 = por %p100, %p101
    %p104 = scmp.ne.s32.totalorder %s89, %s103
    %p105 = scmp.eq.s32.totalorder %s21, 0
    %p106 = por %p104, %p105
    %s108 = sadd.s32 %s107, 1
    %p111 = scmp.eq.s32.totalorder %s15, 3
    %p112 = scmp.ne.s32.totalorder %s107, %s109
    %p113 = scmp.eq.s32.totalorder %s15, 0
    %p114 = por %p112, %p113
    %p115 = scmp.ne.s32.totalorder %s107, %s109
    %p116 = scmp.eq.s32.totalorder %s20, 3
    %p117 = por %p115, %p116
    %p118 = scmp.ne.s32.totalorder %s109, %s110
    %p119 = scmp.eq.s32.totalorder %s20, 0
    %p120 = por %p118, %p119
    %p121 = scmp.ne.s32.totalorder %s109, %s110
    %p122 = scmp.eq.s32.totalorder %s21, 3
    %p123 = por %p121, %p122
    %p125 = scmp.ne.s32.totalorder %s110, %s124
    %p126 = scmp.eq.s32.totalorder %s21, 0
    %p127 = por %p125, %p126
    %s129 = sadd.s32 %s128, 1
    %p132 = scmp.eq.s32.totalorder %s15, 3
    %p133 = scmp.ne.s32.totalorder %s128, %s130
    %p134 = scmp.eq.s32.totalorder %s15, 0
    %p135 = por %p133, %p134
    %p136 = scmp.ne.s32.totalorder %s128, %s130
    %p137 = scmp.eq.s32.totalorder %s20, 3
    %p138 = por %p136, %p137
    %p139 = scmp.ne.s32.totalorder %s130, %s131
    %p140 = scmp.eq.s32.totalorder %s20, 0
    %p141 = por %p139, %p140
    %p142 = scmp.ne.s32.totalorder %s130, %s131
    %p143 = scmp.eq.s32.totalorder %s21, 3
    %p144 = por %p142, %p143
    %p146 = scmp.ne.s32.totalorder %s131, %s145
    %p147 = scmp.eq.s32.totalorder %s21, 0
    %p148 = por %p146, %p147
    %s150 = sadd.s32 %s149, 1
    %p153 = scmp.eq.s32.totalorder %s15, 3
    %p154 = scmp.ne.s32.totalorder %s149, %s151
    %p155 = scmp.eq.s32.totalorder %s15, 0
    %p156 = por %p154, %p155
    %p157 = scmp.ne.s32.totalorder %s149, %s151
    %p158 = scmp.eq.s32.totalorder %s20, 3
    %p159 = por %p157, %p158
    %p160 = scmp.ne.s32.totalorder %s151, %s152
    %p161 = scmp.eq.s32.totalorder %s20, 0
    %p162 = por %p160, %p161
    %p163 = scmp.ne.s32.totalorder %s151, %s152
    %p164 = scmp.eq.s32.totalorder %s21, 3
    %p165 = por %p163, %p164
    %p167 = scmp.ne.s32.totalorder %s152, %s166
    %p168 = scmp.eq.s32.totalorder %s21, 0
    %p169 = por %p167, %p168
    %s171 = sadd.s32 %s170, 1
    %p174 = scmp.eq.s32.totalorder %s15, 3
    %p175 = scmp.ne.s32.totalorder %s170, %s172
    %p176 = scmp.eq.s32.totalorder %s15, 0
    %p177 = por %p175, %p176
    %p178 = scmp.ne.s32.totalorder %s170, %s172
    %p179 = scmp.eq.s32.totalorder %s20, 3
    %p180 = por %p178, %p179
    %p181 = scmp.ne.s32.totalorder %s172, %s173
    %p182 = scmp.eq.s32.totalorder %s20, 0
    %p183 = por %p181, %p182
    %p184 = scmp.ne.s32.totalorder %s172, %s173
    %p185 = scmp.eq.s32.totalorder %s21, 3
    %p186 = por %p184, %p185
    %p188 = scmp.ne.s32.totalorder %s173, %s187
    %p189 = scmp.eq.s32.totalorder %s21, 0
    %p190 = por %p188, %p189
    %s192 = sadd.s32 %s191, 1
    %p195 = scmp.eq.s32.totalorder %s15, 3
    %p196 = scmp.ne.s32.totalorder %s191, %s193
    %p197 = scmp.eq.s32.totalorder %s15, 0
    %p198 = por %p196, %p197
    %p199 = scmp.ne.s32.totalorder %s191, %s193
    %p200 = scmp.eq.s32.totalorder %s20, 3
    %p201 = por %p199, %p200
    %p202 = scmp.ne.s32.totalorder %s193, %s194
    %p203 = scmp.eq.s32.totalorder %s20, 0
    %p204 = por %p202, %p203
    %p205 = scmp.ne.s32.totalorder %s193, %s194
    %p206 = scmp.eq.s32.totalorder %s21, 3
    %p207 = por %p205, %p206
    %p209 = scmp.ne.s32.totalorder %s194, %s208
    %p210 = scmp.eq.s32.totalorder %s21, 0
    %p211 = por %p209, %p210
    %s213 = sadd.s32 %s212, 1
    %p216 = scmp.eq.s32.totalorder %s15, 3
    %p217 = scmp.ne.s32.totalorder %s212, %s214
    %p218 = scmp.eq.s32.totalorder %s15, 0
    %p219 = por %p217, %p218
    %p220 = scmp.ne.s32.totalorder %s212, %s214
    %p221 = scmp.eq.s32.totalorder %s20, 3
    %p222 = por %p220, %p221
    %p223 = scmp.ne.s32.totalorder %s214, %s215
    %p224 = scmp.eq.s32.totalorder %s20, 0
    %p225 = por %p223, %p224
    %p226 = scmp.ne.s32.totalorder %s214, %s215
    %p227 = scmp.eq.s32.totalorder %s21, 3
    %p228 = por %p226, %p227
    %p230 = scmp.ne.s32.totalorder %s215, %s229
    %p231 = scmp.eq.s32.totalorder %s21, 0
    %p232 = por %p230, %p231
    %s233 = ssub.s32 %s22, %s34
    %s234 = ssub.s32 %s23, %s30
    %s235 = sor.u32 %s233, %s234
    %p236 = scmp.eq.s32.totalorder %s235, 0
    %s238 = sadd.s32 %s237, 1
    %s239 = scalar_select %p236, %s237, %s238
    %p242 = pneg %p236
    %p243 = scmp.eq.s32.totalorder %s15, 3
    %p244 = por %p242, %p243
    %p245 = scmp.ne.s32.totalorder %s237, %s240
    %p246 = scmp.eq.s32.totalorder %s15, 0
    %p247 = por %p245, %p246
    %p248 = scmp.ne.s32.totalorder %s237, %s240
    %p249 = scmp.eq.s32.totalorder %s20, 3
    %p250 = por %p248, %p249
    %p251 = scmp.ne.s32.totalorder %s240, %s241
    %p252 = scmp.eq.s32.totalorder %s20, 0
    %p253 = por %p251, %p252
    %p254 = scmp.ne.s32.totalorder %s240, %s241
    %p255 = scmp.eq.s32.totalorder %s21, 3
    %p256 = por %p254, %p255
    %p258 = scmp.ne.s32.totalorder %s241, %s257
    %p259 = scmp.eq.s32.totalorder %s21, 0
    %p260 = por %p258, %p259
    %p261 = scmp.le.s32.totalorder 1, %s15
    %p262 = scmp.lt.s32.totalorder %s15, 5
    %p263 = pnand %p261, %p262
    %p264 = pneg %p263
    // Predicated region
    $region9: #{bottleneck_csp_forward.1} parent=5 // pred_check
      _
    $region10: #{bottleneck_csp_forward.1} parent=5 // pred_check_branch
      %266 = sbr.rel (%p263) target = $region12
    $region11: #{bottleneck_csp_forward.1} parent=5 // pred_region
      %s267 = ssub.s32 %s15, 1
      // Predicated region
      $region13: #{bottleneck_csp_forward.1} parent=11 // pred_check
        %p268 = pneg %p78
      $region14: #{bottleneck_csp_forward.1} parent=11 // pred_check_branch
        %270 = sbr.rel (%p268) target = $region16
      $region15: #{bottleneck_csp_forward.1} parent=11 // pred_region
        _
      $region16: #{bottleneck_csp_forward.1} parent=11 // pred_fallthru
        _
      // Predicated region
      $region17: #{bottleneck_csp_forward.1} parent=11 // pred_check
        %p271 = pneg %p99
      $region18: #{bottleneck_csp_forward.1} parent=11 // pred_check_branch
        %273 = sbr.rel (%p271) target = $region20
      $region19: #{bottleneck_csp_forward.1} parent=11 // pred_region
        _
      $region20: #{bottleneck_csp_forward.1} parent=11 // pred_fallthru
        _
      // Predicated region
      $region21: #{bottleneck_csp_forward.1} parent=11 // pred_check
        %p274 = pneg %p120
      $region22: #{bottleneck_csp_forward.1} parent=11 // pred_check_branch
        %276 = sbr.rel (%p274) target = $region24
      $region23: #{bottleneck_csp_forward.1} parent=11 // pred_region
        _
      $region24: #{bottleneck_csp_forward.1} parent=11 // pred_fallthru
        _
      // Predicated region
      $region25: #{bottleneck_csp_forward.1} parent=11 // pred_check
        %p277 = pneg %p141
      $region26: #{bottleneck_csp_forward.1} parent=11 // pred_check_branch
        %279 = sbr.rel (%p277) target = $region28
      $region27: #{bottleneck_csp_forward.1} parent=11 // pred_region
        _
      $region28: #{bottleneck_csp_forward.1} parent=11 // pred_fallthru
        _
      // Predicated region
      $region29: #{bottleneck_csp_forward.1} parent=11 // pred_check
        %p280 = pneg %p162
      $region30: #{bottleneck_csp_forward.1} parent=11 // pred_check_branch
        %282 = sbr.rel (%p280) target = $region32
      $region31: #{bottleneck_csp_forward.1} parent=11 // pred_region
        _
      $region32: #{bottleneck_csp_forward.1} parent=11 // pred_fallthru
        _
      // Predicated region
      $region33: #{bottleneck_csp_forward.1} parent=11 // pred_check
        %p283 = pneg %p183
      $region34: #{bottleneck_csp_forward.1} parent=11 // pred_check_branch
        %285 = sbr.rel (%p283) target = $region36
      $region35: #{bottleneck_csp_forward.1} parent=11 // pred_region
        _
      $region36: #{bottleneck_csp_forward.1} parent=11 // pred_fallthru
        _
      // Predicated region
      $region37: #{bottleneck_csp_forward.1} parent=11 // pred_check
        %p286 = pneg %p204
      $region38: #{bottleneck_csp_forward.1} parent=11 // pred_check_branch
        %288 = sbr.rel (%p286) target = $region40
      $region39: #{bottleneck_csp_forward.1} parent=11 // pred_region
        _
      $region40: #{bottleneck_csp_forward.1} parent=11 // pred_fallthru
        _
      // Predicated region
      $region41: #{bottleneck_csp_forward.1} parent=11 // pred_check
        %p289 = pneg %p225
      $region42: #{bottleneck_csp_forward.1} parent=11 // pred_check_branch
        %291 = sbr.rel (%p289) target = $region44
      $region43: #{bottleneck_csp_forward.1} parent=11 // pred_region
        _
      $region44: #{bottleneck_csp_forward.1} parent=11 // pred_fallthru
        _
    $region12: #{bottleneck_csp_forward.1} parent=5 // pred_fallthru
      _
    %p292 = scmp.lt.s32.totalorder %s15, 4
    // Predicated region
    $region45: #{bottleneck_csp_forward.1} parent=5 // pred_check
      %p293 = pneg %p292
    $region46: #{bottleneck_csp_forward.1} parent=5 // pred_check_branch
      %295 = sbr.rel (%p293) target = $region48
    $region47: #{bottleneck_csp_forward.1} parent=5 // pred_region
      // Predicated region
      $region49: #{bottleneck_csp_forward.1} parent=47 // pred_check
        %p296 = pneg %p51
      $region50: #{bottleneck_csp_forward.1} parent=47 // pred_check_branch
        %298 = sbr.rel (%p296) target = $region52
      $region51: #{bottleneck_csp_forward.1} parent=47 // pred_region
        %s299 = smul.u32 %s22, 2
        %s300 = sadd.s32 %s299, %s23
        %p301 = scmp.lt.s32.totalorder %s300, 3
        %s302 = scalar_select %p301, %s300, 3
        %s303 = smul.addr %s302, 20
        %s304 = smul.addr %s303, 4
        %s305 = scalar_lea.vmem %s0, %s304
        %s306 = smul.u32 %s22, 2
        %s307 = sadd.s32 %s306, %s23
      $region52: #{bottleneck_csp_forward.1} parent=47 // pred_fallthru
        _
    $region48: #{bottleneck_csp_forward.1} parent=5 // pred_fallthru
      _
    %p308 = scmp.le.s32.totalorder 1, %s15
    %p309 = scmp.lt.s32.totalorder %s15, 5
    %p310 = pnand %p308, %p309
    %p311 = pneg %p310
    // Predicated region
    $region53: #{bottleneck_csp_forward.1} parent=5 // pred_check
      _
    $region54: #{bottleneck_csp_forward.1} parent=5 // pred_check_branch
      %313 = sbr.rel (%p310) target = $region56
    $region55: #{bottleneck_csp_forward.1} parent=5 // pred_region
      %s314 = ssub.s32 %s15, 1
      %s315 = smul.u32 %s24, 2
      %s316 = sadd.s32 %s315, %s25
      %p317 = scmp.lt.s32.totalorder %s316, 3
      %s318 = scalar_select %p317, %s316, 3
      %s319 = smul.addr %s318, 20
      %s320 = smul.addr %s319, 4
      %s321 = scalar_lea.vmem %s0, %s320
      %p322 = pneg %p57
      %p323 = pneg %p54
      %p324 = pneg %p78
      %p325 = pneg %p75
      %p326 = pneg %p99
      %p327 = pneg %p96
      %p328 = pneg %p120
      %p329 = pneg %p117
      %p330 = pneg %p141
      %p331 = pneg %p138
      %p332 = pneg %p162
      %p333 = pneg %p159
      %p334 = pneg %p183
      %p335 = pneg %p180
      %p336 = pneg %p204
      %p337 = pneg %p201
      %p338 = pneg %p225
      %p339 = pneg %p222
      %p340 = pneg %p253
      %p341 = pneg %p250
      %s342 = smul.u32 8, %s25
      %p343 = scmp.lt.s32.totalorder %s24, 1
      %s344 = scalar_select %p343, %s24, 1
      %p345 = scmp.lt.s32.totalorder %s342, 15
      %s346 = scalar_select %p345, %s342, 15
      %s347 = smul.addr %s346, 2
      %s348 = smul.addr %s344, 32
      %s349 = sadd.s32 %s347, %s348
      %s350 = smul.addr %s349, 4
      %s351 = scalar_lea.vmem %s9, %s350
      %s352 = smul.u32 %s24, 2
      %s353 = sadd.s32 %s352, %s25
      %p354 = scmp.lt.s32.totalorder %s353, 3
      %s355 = scalar_select %p354, %s353, 3
      %s356 = smul.addr %s355, 20
      %s357 = smul.addr %s356, 4
      %s358 = scalar_lea.vmem %s0, %s357
      %s359 = smul.u32 %s24, 2
      %s360 = sadd.s32 %s359, %s25
      %s361 = smul.u32 8, %s25
      %p362 = scmp.lt.s32.totalorder %s24, 1
      %s363 = scalar_select %p362, %s24, 1
      %p364 = scmp.lt.s32.totalorder %s361, 15
      %s365 = scalar_select %p364, %s361, 15
      %s366 = smul.addr %s365, 2
      %s367 = smul.addr %s363, 32
      %s368 = sadd.s32 %s366, %s367
      %s369 = smul.addr %s368, 4
      %s370 = scalar_lea.vmem %s9, %s369
      %s371 = smul.u32 8, %s25
      %v372 = vld [vmem:[%s358] sm:$0xf]
      %v373 = vld [vmem:[%s358 + $0x4] sm:$0xf]
      %v374 = vld [vmem:[%s358 + $0x8] sm:$0xf]
      %v375 = vld [vmem:[%s358 + $0xc] sm:$0xf]
      %v376 = vld [vmem:[%s358 + $0x10] sm:$0xf]
      %v377 = vld [vmem:[%s358 + $0x14] sm:$0xf]
      %v378 = vld [vmem:[%s358 + $0x18] sm:$0xf]
      %v379 = vld [vmem:[%s358 + $0x1c] sm:$0xf]
      %v380 = vld [vmem:[%s358 + $0x20] sm:$0xf]
      %v381 = vld [vmem:[%s358 + $0x24] sm:$0xf]
      %v382 = vld [vmem:[%s358 + $0x28] sm:$0xf]
      %v383 = vld [vmem:[%s358 + $0x2c] sm:$0xf]
      %v384 = vld [vmem:[%s358 + $0x30] sm:$0xf]
      %v385 = vld [vmem:[%s358 + $0x34] sm:$0xf]
      %v386 = vld [vmem:[%s358 + $0x38] sm:$0xf]
      %v387 = vld [vmem:[%s358 + $0x3c] sm:$0xf]
      %v388 = vld [vmem:[%s358 + $0x40] sm:$0xf]
      %v389 = vld [vmem:[%s358 + $0x44] sm:$0xf]
      %v390 = vld [vmem:[%s358 + $0x48] sm:$0xf]
      %v391 = vld [vmem:[%s358 + $0x4c] sm:$0xf]
      %v392 = vld [vmem:[%s1] sm:$0xff]
      %v393 = vld [vmem:[%s1 + $0x8] sm:$0xff]
      %v394 = vld [vmem:[%s1 + $0x10] sm:$0xff]
      %v395 = vld [vmem:[%s1 + $0x18] sm:$0xff]
      %v396 = vld [vmem:[%s1 + $0x20] sm:$0xff]
      %v397 = vld [vmem:[%s1 + $0x28] sm:$0xff]
      %v398 = vld [vmem:[%s1 + $0x30] sm:$0xff]
      %v399 = vld [vmem:[%s1 + $0x38] sm:$0xff]
      %v400 = vld [vmem:[%s1 + $0x40] sm:$0xff]
      %v401 = vld [vmem:[%s1 + $0x48] sm:$0xff]
      %v402 = vld [vmem:[%s1 + $0x50] sm:$0xff]
      %v403 = vld [vmem:[%s1 + $0x58] sm:$0xff]
      %v404 = vld [vmem:[%s1 + $0x60] sm:$0xff]
      %v405 = vld [vmem:[%s1 + $0x68] sm:$0xff]
      %v406 = vld [vmem:[%s1 + $0x70] sm:$0xff]
      %v407 = vld [vmem:[%s1 + $0x78] sm:$0xff]
      %v428 = vunpack.c.l.b16 %v372
      %v429 = vunpack.c.l.b16 %v373
      %v430 = vunpack.c.l.b16 %v374
      %v431 = vunpack.c.l.b16 %v375
      %v432 = vunpack.c.l.b16 %v376
      %v433 = vunpack.c.l.b16 %v377
      %v434 = vunpack.c.l.b16 %v378
      %v435 = vunpack.c.l.b16 %v379
      %v436 = vunpack.c.l.b16 %v380
      %v437 = vunpack.c.l.b16 %v381
      %v438 = vunpack.c.l.b16 %v382
      %v439 = vunpack.c.l.b16 %v383
      %v440 = vunpack.c.l.b16 %v384
      %v441 = vunpack.c.l.b16 %v385
      %v442 = vunpack.c.l.b16 %v386
      %v443 = vunpack.c.l.b16 %v387
      %v444 = vunpack.c.l.b16 %v388
      %v445 = vunpack.c.l.b16 %v389
      %v446 = vunpack.c.l.b16 %v390
      %v447 = vunpack.c.l.b16 %v391
      %v448 = vpack.c.b16 %v429, %v428
      %v449 = vpack.c.b16 %v431, %v430
      %v450 = vpack.c.b16 %v433, %v432
      %v451 = vpack.c.b16 %v435, %v434
      %v452 = vpack.c.b16 %v437, %v436
      %v453 = vpack.c.b16 %v439, %v438
      %v454 = vpack.c.b16 %v441, %v440
      %v455 = vpack.c.b16 %v443, %v442
      %v456 = vpack.c.b16 %v445, %v444
      %v457 = vpack.c.b16 %v447, %v446
      %v484 = vunpack.c.l.b16 %v392
      %v485 = vunpack.c.h.b16 %v392
      %v486 = vunpack.c.l.b16 %v393
      %v487 = vunpack.c.h.b16 %v393
      %v488 = vunpack.c.l.b16 %v394
      %v489 = vunpack.c.h.b16 %v394
      %v490 = vunpack.c.l.b16 %v395
      %v491 = vunpack.c.h.b16 %v395
      %v492 = vunpack.c.l.b16 %v396
      %v493 = vunpack.c.h.b16 %v396
      %v494 = vunpack.c.l.b16 %v397
      %v495 = vunpack.c.h.b16 %v397
      %v496 = vunpack.c.l.b16 %v398
      %v497 = vunpack.c.h.b16 %v398
      %v498 = vunpack.c.l.b16 %v399
      %v499 = vunpack.c.h.b16 %v399
      %v500 = vunpack.c.l.b16 %v400
      %v501 = vunpack.c.h.b16 %v400
      %v502 = vunpack.c.l.b16 %v401
      %v503 = vunpack.c.h.b16 %v401
      %v504 = vunpack.c.l.b16 %v402
      %v505 = vunpack.c.h.b16 %v402
      %v506 = vunpack.c.l.b16 %v403
      %v507 = vunpack.c.h.b16 %v403
      %v508 = vunpack.c.l.b16 %v404
      %v509 = vunpack.c.h.b16 %v404
      %v510 = vunpack.c.l.b16 %v405
      %v511 = vunpack.c.h.b16 %v405
      %v512 = vunpack.c.l.b16 %v406
      %v513 = vunpack.c.h.b16 %v406
      %v514 = vunpack.c.l.b16 %v407
      %v515 = vunpack.c.h.b16 %v407
      %v516 = vpack.c.b16 %v486, %v484
      %v517 = vpack.c.b16 %v487, %v485
      %v518 = vpack.c.b16 %v490, %v488
      %v519 = vpack.c.b16 %v491, %v489
      %v520 = vpack.c.b16 %v494, %v492
      %v521 = vpack.c.b16 %v495, %v493
      %v522 = vpack.c.b16 %v498, %v496
      %v523 = vpack.c.b16 %v499, %v497
      %v524 = vpack.c.b16 %v502, %v500
      %v525 = vpack.c.b16 %v503, %v501
      %v526 = vpack.c.b16 %v506, %v504
      %v527 = vpack.c.b16 %v507, %v505
      %v528 = vpack.c.b16 %v510, %v508
      %v529 = vpack.c.b16 %v511, %v509
      %v530 = vpack.c.b16 %v514, %v512
      %v531 = vpack.c.b16 %v515, %v513
      %548 = vmatpush.bf16.msra.mxu0 %v530
      %549 = vmatpush.bf16.msra.mxu0 %v528
      %550 = vmatpush.bf16.msra.mxu0 %v526
      %551 = vmatpush.bf16.msra.mxu0 %v524
      %552 = vmatpush.bf16.msra.mxu0 %v522
      %553 = vmatpush.bf16.msra.mxu0 %v520
      %554 = vmatpush.bf16.msra.mxu0 %v518
      %555 = vmatpush.bf16.msra.mxu0 %v516
      %556 = vmatmul.bf16.gmra.mxu0 %v448
      %v557 = vpop.f32.mrf.mxu0
      %v558 = vadd.f32 0.0, %v557
      %v559 = vpop.f32.mrf.mxu0
      %v560 = vadd.f32 0.0, %v559
      %561 = vmatmul.bf16.gmra.mxu0 %v449
      %v562 = vpop.f32.mrf.mxu0
      %v563 = vadd.f32 0.0, %v562
      %v564 = vpop.f32.mrf.mxu0
      %v565 = vadd.f32 0.0, %v564
      %566 = vmatmul.bf16.gmra.mxu0 %v450
      %v567 = vpop.f32.mrf.mxu0
      %v568 = vadd.f32 0.0, %v567
      %v569 = vpop.f32.mrf.mxu0
      %v570 = vadd.f32 0.0, %v569
      %571 = vmatmul.bf16.gmra.mxu0 %v451
      %v572 = vpop.f32.mrf.mxu0
      %v573 = vadd.f32 0.0, %v572
      %v574 = vpop.f32.mrf.mxu0
      %v575 = vadd.f32 0.0, %v574
      %576 = vmatmul.bf16.gmra.mxu0 %v452
      %v577 = vpop.f32.mrf.mxu0
      %v578 = vadd.f32 0.0, %v577
      %v579 = vpop.f32.mrf.mxu0
      %v580 = vadd.f32 0.0, %v579
      %581 = vmatmul.bf16.gmra.mxu0 %v453
      %v582 = vpop.f32.mrf.mxu0
      %v583 = vadd.f32 0.0, %v582
      %v584 = vpop.f32.mrf.mxu0
      %v585 = vadd.f32 0.0, %v584
      %586 = vmatmul.bf16.gmra.mxu0 %v454
      %v587 = vpop.f32.mrf.mxu0
      %v588 = vadd.f32 0.0, %v587
      %v589 = vpop.f32.mrf.mxu0
      %v590 = vadd.f32 0.0, %v589
      %591 = vmatmul.bf16.gmra.mxu0 %v455
      %v592 = vpop.f32.mrf.mxu0
      %v593 = vadd.f32 0.0, %v592
      %v594 = vpop.f32.mrf.mxu0
      %v595 = vadd.f32 0.0, %v594
      %596 = vmatmul.bf16.gmra.mxu0 %v456
      %v597 = vpop.f32.mrf.mxu0
      %v598 = vadd.f32 0.0, %v597
      %v599 = vpop.f32.mrf.mxu0
      %v600 = vadd.f32 0.0, %v599
      %601 = vmatmul.bf16.gmra.mxu0 %v457
      %v602 = vpop.f32.mrf.mxu0
      %v603 = vadd.f32 0.0, %v602
      %v604 = vpop.f32.mrf.mxu0
      %v605 = vadd.f32 0.0, %v604
      %606 = vdwg.mxu0
      %607 = vmatpush.bf16.msra.mxu0 %v531
      %608 = vmatpush.bf16.msra.mxu0 %v529
      %609 = vmatpush.bf16.msra.mxu0 %v527
      %610 = vmatpush.bf16.msra.mxu0 %v525
      %611 = vmatpush.bf16.msra.mxu0 %v523
      %612 = vmatpush.bf16.msra.mxu0 %v521
      %613 = vmatpush.bf16.msra.mxu0 %v519
      %614 = vmatpush.bf16.msra.mxu0 %v517
      %615 = vmatmul.bf16.gmra.mxu0 %v448
      %v616 = vpop.f32.mrf.mxu0
      %v617 = vpop.f32.mrf.mxu0
      %618 = vmatmul.bf16.gmra.mxu0 %v449
      %v619 = vpop.f32.mrf.mxu0
      %v620 = vadd.f32 0.0, %v619
      %v621 = vpop.f32.mrf.mxu0
      %v622 = vadd.f32 0.0, %v621
      %623 = vmatmul.bf16.gmra.mxu0 %v450
      %v624 = vpop.f32.mrf.mxu0
      %v625 = vadd.f32 0.0, %v624
      %v626 = vpop.f32.mrf.mxu0
      %v627 = vadd.f32 0.0, %v626
      %628 = vmatmul.bf16.gmra.mxu0 %v451
      %v629 = vpop.f32.mrf.mxu0
      %v630 = vadd.f32 0.0, %v629
      %v631 = vpop.f32.mrf.mxu0
      %v632 = vadd.f32 0.0, %v631
      %633 = vmatmul.bf16.gmra.mxu0 %v452
      %v634 = vpop.f32.mrf.mxu0
      %v635 = vadd.f32 0.0, %v634
      %v636 = vpop.f32.mrf.mxu0
      %v637 = vadd.f32 0.0, %v636
      %638 = vmatmul.bf16.gmra.mxu0 %v453
      %v639 = vpop.f32.mrf.mxu0
      %v640 = vadd.f32 0.0, %v639
      %v641 = vpop.f32.mrf.mxu0
      %v642 = vadd.f32 0.0, %v641
      %643 = vmatmul.bf16.gmra.mxu0 %v454
      %v644 = vpop.f32.mrf.mxu0
      %v645 = vadd.f32 0.0, %v644
      %v646 = vpop.f32.mrf.mxu0
      %v647 = vadd.f32 0.0, %v646
      %648 = vmatmul.bf16.gmra.mxu0 %v455
      %v649 = vpop.f32.mrf.mxu0
      %v650 = vadd.f32 0.0, %v649
      %v651 = vpop.f32.mrf.mxu0
      %v652 = vadd.f32 0.0, %v651
      %653 = vmatmul.bf16.gmra.mxu0 %v456
      %v654 = vpop.f32.mrf.mxu0
      %v655 = vadd.f32 0.0, %v654
      %v656 = vpop.f32.mrf.mxu0
      %v657 = vadd.f32 0.0, %v656
      %658 = vmatmul.bf16.gmra.mxu0 %v457
      %v659 = vpop.f32.mrf.mxu0
      %v660 = vpop.f32.mrf.mxu0
      %661 = vdwg.mxu0
      %v662 = vld [vmem:[%s2] sm:$0x1]
      %v664 = vperm.slane %v662, 0
      %v666 = vadd.f32 %v558, %v664
      %v667 = vadd.f32 %v560, %v664
      %v668 = vadd.f32 %v563, %v664
      %v669 = vadd.f32 %v565, %v664
      %v670 = vadd.f32 %v568, %v664
      %v671 = vadd.f32 %v570, %v664
      %v672 = vadd.f32 %v573, %v664
      %v673 = vadd.f32 %v575, %v664
      %v674 = vadd.f32 %v578, %v664
      %v675 = vadd.f32 %v580, %v664
      %v676 = vadd.f32 %v583, %v664
      %v677 = vadd.f32 %v585, %v664
      %v678 = vadd.f32 %v588, %v664
      %v679 = vadd.f32 %v590, %v664
      %v680 = vadd.f32 %v593, %v664
      %v681 = vadd.f32 %v595, %v664
      %v682 = vadd.f32 %v598, %v664
      %v683 = vadd.f32 %v600, %v664
      %v684 = vadd.f32 %v603, %v664
      %v685 = vadd.f32 %v605, %v664
      %v686 = vpack.c.bf16 %v667, %v666
      %v687 = vpack.c.bf16 %v669, %v668
      %v688 = vpack.c.bf16 %v671, %v670
      %v689 = vpack.c.bf16 %v673, %v672
      %v690 = vpack.c.bf16 %v675, %v674
      %v691 = vpack.c.bf16 %v677, %v676
      %v692 = vpack.c.bf16 %v679, %v678
      %v693 = vpack.c.bf16 %v681, %v680
      %v694 = vpack.c.bf16 %v683, %v682
      %v695 = vpack.c.bf16 %v685, %v684
      %v696 = vld [vmem:[%s3] sm:$0xf]
      %v697 = vld [vmem:[%s3 + $0x4] sm:$0xf]
      %v698 = vld [vmem:[%s3 + $0x8] sm:$0xf]
      %v699 = vld [vmem:[%s3 + $0xc] sm:$0xf]
      %v700 = vld [vmem:[%s3 + $0x10] sm:$0xf]
      %v701 = vld [vmem:[%s3 + $0x14] sm:$0xf]
      %v702 = vld [vmem:[%s3 + $0x18] sm:$0xf]
      %v703 = vld [vmem:[%s3 + $0x1c] sm:$0xf]
      %v704 = vld [vmem:[%s3 + $0x20] sm:$0xf]
      %v705 = vld [vmem:[%s3 + $0x24] sm:$0xf]
      %v706 = vld [vmem:[%s3 + $0x28] sm:$0xf]
      %v707 = vld [vmem:[%s3 + $0x2c] sm:$0xf]
      %v708 = vld [vmem:[%s3 + $0x30] sm:$0xf]
      %v709 = vld [vmem:[%s3 + $0x34] sm:$0xf]
      %v710 = vld [vmem:[%s3 + $0x38] sm:$0xf]
      %v711 = vld [vmem:[%s3 + $0x3c] sm:$0xf]
      %v728 = vunpack.c.l.b16 %v696
      %v729 = vunpack.c.l.b16 %v697
      %v730 = vunpack.c.l.b16 %v698
      %v731 = vunpack.c.l.b16 %v699
      %v732 = vunpack.c.l.b16 %v700
      %v733 = vunpack.c.l.b16 %v701
      %v734 = vunpack.c.l.b16 %v702
      %v735 = vunpack.c.l.b16 %v703
      %v736 = vunpack.c.l.b16 %v704
      %v737 = vunpack.c.l.b16 %v705
      %v738 = vunpack.c.l.b16 %v706
      %v739 = vunpack.c.l.b16 %v707
      %v740 = vunpack.c.l.b16 %v708
      %v741 = vunpack.c.l.b16 %v709
      %v742 = vunpack.c.l.b16 %v710
      %v743 = vunpack.c.l.b16 %v711
      %v744 = vpack.c.b16 %v729, %v728
      %v745 = vpack.c.b16 %v731, %v730
      %v746 = vpack.c.b16 %v733, %v732
      %v747 = vpack.c.b16 %v735, %v734
      %v748 = vpack.c.b16 %v737, %v736
      %v749 = vpack.c.b16 %v739, %v738
      %v750 = vpack.c.b16 %v741, %v740
      %v751 = vpack.c.b16 %v743, %v742
      %760 = vmatpush.bf16.msra.mxu0 %v751
      %761 = vmatpush.bf16.msra.mxu0 %v750
      %762 = vmatpush.bf16.msra.mxu0 %v749
      %763 = vmatpush.bf16.msra.mxu0 %v748
      %764 = vmatpush.bf16.msra.mxu0 %v747
      %765 = vmatpush.bf16.msra.mxu0 %v746
      %766 = vmatpush.bf16.msra.mxu0 %v745
      %767 = vmatpush.bf16.msra.mxu0 %v744
      %768 = vmatmul.bf16.gmra.mxu0 %v686
      %v769 = vpop.f32.mrf.mxu0
      %v770 = vadd.f32 0.0, %v769
      %v771 = vpop.f32.mrf.mxu0
      %v772 = vadd.f32 0.0, %v771
      %773 = vmatmul.bf16.gmra.mxu0 %v687
      %v774 = vpop.f32.mrf.mxu0
      %v775 = vadd.f32 0.0, %v774
      %v776 = vpop.f32.mrf.mxu0
      %v777 = vadd.f32 0.0, %v776
      %778 = vmatmul.bf16.gmra.mxu0 %v688
      %v779 = vpop.f32.mrf.mxu0
      %v780 = vadd.f32 0.0, %v779
      %v781 = vpop.f32.mrf.mxu0
      %v782 = vadd.f32 0.0, %v781
      %783 = vmatmul.bf16.gmra.mxu0 %v689
      %v784 = vpop.f32.mrf.mxu0
      %v785 = vadd.f32 0.0, %v784
      %v786 = vpop.f32.mrf.mxu0
      %v787 = vadd.f32 0.0, %v786
      %788 = vmatmul.bf16.gmra.mxu0 %v690
      %v789 = vpop.f32.mrf.mxu0
      %v790 = vadd.f32 0.0, %v789
      %v791 = vpop.f32.mrf.mxu0
      %v792 = vadd.f32 0.0, %v791
      %793 = vmatmul.bf16.gmra.mxu0 %v691
      %v794 = vpop.f32.mrf.mxu0
      %v795 = vadd.f32 0.0, %v794
      %v796 = vpop.f32.mrf.mxu0
      %v797 = vadd.f32 0.0, %v796
      %798 = vmatmul.bf16.gmra.mxu0 %v692
      %v799 = vpop.f32.mrf.mxu0
      %v800 = vadd.f32 0.0, %v799
      %v801 = vpop.f32.mrf.mxu0
      %v802 = vadd.f32 0.0, %v801
      %803 = vmatmul.bf16.gmra.mxu0 %v693
      %v804 = vpop.f32.mrf.mxu0
      %v805 = vadd.f32 0.0, %v804
      %v806 = vpop.f32.mrf.mxu0
      %v807 = vadd.f32 0.0, %v806
      %808 = vmatmul.bf16.gmra.mxu0 %v694
      %v809 = vpop.f32.mrf.mxu0
      %v810 = vadd.f32 0.0, %v809
      %v811 = vpop.f32.mrf.mxu0
      %v812 = vadd.f32 0.0, %v811
      %813 = vmatmul.bf16.gmra.mxu0 %v695
      %v814 = vpop.f32.mrf.mxu0
      %v815 = vadd.f32 0.0, %v814
      %v816 = vpop.f32.mrf.mxu0
      %v817 = vadd.f32 0.0, %v816
      %818 = vdwg.mxu0
      %v819 = vsub.f32 0.0, %v770
      %v820 = vsub.f32 0.0, %v772
      %v821 = vsub.f32 0.0, %v775
      %v822 = vsub.f32 0.0, %v777
      %v823 = vsub.f32 0.0, %v780
      %v824 = vsub.f32 0.0, %v782
      %v825 = vsub.f32 0.0, %v785
      %v826 = vsub.f32 0.0, %v787
      %v827 = vsub.f32 0.0, %v790
      %v828 = vsub.f32 0.0, %v792
      %v829 = vsub.f32 0.0, %v795
      %v830 = vsub.f32 0.0, %v797
      %v831 = vsub.f32 0.0, %v800
      %v832 = vsub.f32 0.0, %v802
      %v833 = vsub.f32 0.0, %v805
      %v834 = vsub.f32 0.0, %v807
      %v835 = vsub.f32 0.0, %v810
      %v836 = vsub.f32 0.0, %v812
      %v837 = vsub.f32 0.0, %v815
      %v838 = vsub.f32 0.0, %v817
      %v839 = vmul.f32 %v819, 1.442695
      %v840 = vpow.pop %v839
      %v841 = vmul.f32 %v820, 1.442695
      %v842 = vpow.pop %v841
      %v843 = vmul.f32 %v821, 1.442695
      %v844 = vpow.pop %v843
      %v845 = vmul.f32 %v822, 1.442695
      %v846 = vpow.pop %v845
      %v847 = vmul.f32 %v823, 1.442695
      %v848 = vpow.pop %v847
      %v849 = vmul.f32 %v824, 1.442695
      %v850 = vpow.pop %v849
      %v851 = vmul.f32 %v825, 1.442695
      %v852 = vpow.pop %v851
      %v853 = vmul.f32 %v826, 1.442695
      %v854 = vpow.pop %v853
      %v855 = vmul.f32 %v827, 1.442695
      %v856 = vpow.pop %v855
      %v857 = vmul.f32 %v828, 1.442695
      %v858 = vpow.pop %v857
      %v859 = vmul.f32 %v829, 1.442695
      %v860 = vpow.pop %v859
      %v861 = vmul.f32 %v830, 1.442695
      %v862 = vpow.pop %v861
      %v863 = vmul.f32 %v831, 1.442695
      %v864 = vpow.pop %v863
      %v865 = vmul.f32 %v832, 1.442695
      %v866 = vpow.pop %v865
      %v867 = vmul.f32 %v833, 1.442695
      %v868 = vpow.pop %v867
      %v869 = vmul.f32 %v834, 1.442695
      %v870 = vpow.pop %v869
      %v871 = vmul.f32 %v835, 1.442695
      %v872 = vpow.pop %v871
      %v873 = vmul.f32 %v836, 1.442695
      %v874 = vpow.pop %v873
      %v875 = vmul.f32 %v837, 1.442695
      %v876 = vpow.pop %v875
      %v877 = vmul.f32 %v838, 1.442695
      %v878 = vpow.pop %v877
      %v879 = vadd.f32 %v840, 1.0
      %v880 = vadd.f32 %v842, 1.0
      %v881 = vadd.f32 %v844, 1.0
      %v882 = vadd.f32 %v846, 1.0
      %v883 = vadd.f32 %v848, 1.0
      %v884 = vadd.f32 %v850, 1.0
      %v885 = vadd.f32 %v852, 1.0
      %v886 = vadd.f32 %v854, 1.0
      %v887 = vadd.f32 %v856, 1.0
      %v888 = vadd.f32 %v858, 1.0
      %v889 = vadd.f32 %v860, 1.0
      %v890 = vadd.f32 %v862, 1.0
      %v891 = vadd.f32 %v864, 1.0
      %v892 = vadd.f32 %v866, 1.0
      %v893 = vadd.f32 %v868, 1.0
      %v894 = vadd.f32 %v870, 1.0
      %v895 = vadd.f32 %v872, 1.0
      %v896 = vadd.f32 %v874, 1.0
      %v897 = vadd.f32 %v876, 1.0
      %v898 = vadd.f32 %v878, 1.0
      %v899 = vrcp.pop %v879
      %v900 = vrcp.pop %v880
      %v901 = vrcp.pop %v881
      %v902 = vrcp.pop %v882
      %v903 = vrcp.pop %v883
      %v904 = vrcp.pop %v884
      %v905 = vrcp.pop %v885
      %v906 = vrcp.pop %v886
      %v907 = vrcp.pop %v887
      %v908 = vrcp.pop %v888
      %v909 = vrcp.pop %v889
      %v910 = vrcp.pop %v890
      %v911 = vrcp.pop %v891
      %v912 = vrcp.pop %v892
      %v913 = vrcp.pop %v893
      %v914 = vrcp.pop %v894
      %v915 = vrcp.pop %v895
      %v916 = vrcp.pop %v896
      %v917 = vrcp.pop %v897
      %v918 = vrcp.pop %v898
      %v919 = vmul.f32 %v770, %v899
      %v920 = vmul.f32 %v772, %v900
      %v921 = vmul.f32 %v775, %v901
      %v922 = vmul.f32 %v777, %v902
      %v923 = vmul.f32 %v780, %v903
      %v924 = vmul.f32 %v782, %v904
      %v925 = vmul.f32 %v785, %v905
      %v926 = vmul.f32 %v787, %v906
      %v927 = vmul.f32 %v790, %v907
      %v928 = vmul.f32 %v792, %v908
      %v929 = vmul.f32 %v795, %v909
      %v930 = vmul.f32 %v797, %v910
      %v931 = vmul.f32 %v800, %v911
      %v932 = vmul.f32 %v802, %v912
      %v933 = vmul.f32 %v805, %v913
      %v934 = vmul.f32 %v807, %v914
      %v935 = vmul.f32 %v810, %v915
      %v936 = vmul.f32 %v812, %v916
      %v937 = vmul.f32 %v815, %v917
      %v938 = vmul.f32 %v817, %v918
      %939 = vst [vmem:[#allocation2] sm:$0xff] 0.0
      %940 = vst [vmem:[#allocation2 + $0x20] sm:$0xff] 0.0
      %941 = vst [vmem:[#allocation2 + $0x40] sm:$0xff] 0.0
      %942 = vst [vmem:[#allocation2 + $0x60] sm:$0xff] 0.0
      %943 = vst [vmem:[#allocation2 + $0x80] sm:$0xff] 0.0
      %944 = vst [vmem:[#allocation2 + $0xa0] sm:$0xff] 0.0
      %945 = vst [vmem:[#allocation2 + $0xc0] sm:$0xff] 0.0
      %946 = vst [vmem:[#allocation2 + $0xe0] sm:$0xff] 0.0
      %947 = vst [vmem:[#allocation2 + $0x100] sm:$0xff] 0.0
      %948 = vst [vmem:[#allocation2 + $0x120] sm:$0xff] 0.0
      %949 = vst [vmem:[#allocation2 + $0x18] sm:$0xff] 0.0
      %950 = vst [vmem:[#allocation2 + $0x38] sm:$0xff] 0.0
      %951 = vst [vmem:[#allocation2 + $0x58] sm:$0xff] 0.0
      %952 = vst [vmem:[#allocation2 + $0x78] sm:$0xff] 0.0
      %953 = vst [vmem:[#allocation2 + $0x98] sm:$0xff] 0.0
      %954 = vst [vmem:[#allocation2 + $0xb8] sm:$0xff] 0.0
      %955 = vst [vmem:[#allocation2 + $0xd8] sm:$0xff] 0.0
      %956 = vst [vmem:[#allocation2 + $0xf8] sm:$0xff] 0.0
      %957 = vst [vmem:[#allocation2 + $0x118] sm:$0xff] 0.0
      %958 = vst [vmem:[#allocation2 + $0x138] sm:$0xff] 0.0
      %959 = vst [vmem:[#allocation2 + $0x8] sm:$0xff] %v919
      %960 = vst [vmem:[#allocation2 + $0x10] sm:$0xff] %v920
      %961 = vst [vmem:[#allocation2 + $0x28] sm:$0xff] %v921
      %962 = vst [vmem:[#allocation2 + $0x30] sm:$0xff] %v922
      %963 = vst [vmem:[#allocation2 + $0x48] sm:$0xff] %v923
      %964 = vst [vmem:[#allocation2 + $0x50] sm:$0xff] %v924
      %965 = vst [vmem:[#allocation2 + $0x68] sm:$0xff] %v925
      %966 = vst [vmem:[#allocation2 + $0x70] sm:$0xff] %v926
      %967 = vst [vmem:[#allocation2 + $0x88] sm:$0xff] %v927
      %968 = vst [vmem:[#allocation2 + $0x90] sm:$0xff] %v928
      %969 = vst [vmem:[#allocation2 + $0xa8] sm:$0xff] %v929
      %970 = vst [vmem:[#allocation2 + $0xb0] sm:$0xff] %v930
      %971 = vst [vmem:[#allocation2 + $0xc8] sm:$0xff] %v931
      %972 = vst [vmem:[#allocation2 + $0xd0] sm:$0xff] %v932
      %973 = vst [vmem:[#allocation2 + $0xe8] sm:$0xff] %v933
      %974 = vst [vmem:[#allocation2 + $0xf0] sm:$0xff] %v934
      %975 = vst [vmem:[#allocation2 + $0x108] sm:$0xff] %v935
      %976 = vst [vmem:[#allocation2 + $0x110] sm:$0xff] %v936
      %977 = vst [vmem:[#allocation2 + $0x128] sm:$0xff] %v937
      %978 = vst [vmem:[#allocation2 + $0x130] sm:$0xff] %v938
      %p979 = scmp.eq.s32.totalorder %s25, 0
      // Predicated region
      $region57: #{bottleneck_csp_forward.1} parent=55 // pred_check
        %p980 = pneg %p979
      $region58: #{bottleneck_csp_forward.1} parent=55 // pred_check_branch
        %982 = sbr.rel (%p980) target = $region60
      $region59: #{bottleneck_csp_forward.1} parent=55 // pred_region
        %983 = vst [vmem:[#allocation2 + $0x8] sm:$0xff] 0.0
        %984 = vst [vmem:[#allocation2 + $0x10] sm:$0xff] 0.0
      $region60: #{bottleneck_csp_forward.1} parent=55 // pred_fallthru
        _
      %p985 = scmp.eq.s32.totalorder %s25, 1
      // Predicated region
      $region61: #{bottleneck_csp_forward.1} parent=55 // pred_check
        %p986 = pneg %p985
      $region62: #{bottleneck_csp_forward.1} parent=55 // pred_check_branch
        %988 = sbr.rel (%p986) target = $region64
      $region63: #{bottleneck_csp_forward.1} parent=55 // pred_region
        %s989 = scalar_lea.vmem [#allocation2], 288
        %990 = vst [vmem:[%s989 + $0x8] sm:$0xff] 0.0
        %991 = vst [vmem:[%s989 + $0x10] sm:$0xff] 0.0
      $region64: #{bottleneck_csp_forward.1} parent=55 // pred_fallthru
        _
      %v992 = vld [vmem:[#allocation2 + $0x7] sm:$0xff]
      %v993 = vld [vmem:[#allocation2 + $0xf] sm:$0xff]
      %v994 = vld [vmem:[#allocation2 + $0x27] sm:$0xff]
      %v995 = vld [vmem:[#allocation2 + $0x2f] sm:$0xff]
      %v996 = vld [vmem:[#allocation2 + $0x47] sm:$0xff]
      %v997 = vld [vmem:[#allocation2 + $0x4f] sm:$0xff]
      %v998 = vld [vmem:[#allocation2 + $0x67] sm:$0xff]
      %v999 = vld [vmem:[#allocation2 + $0x6f] sm:$0xff]
      %v1000 = vld [vmem:[#allocation2 + $0x87] sm:$0xff]
      %v1001 = vld [vmem:[#allocation2 + $0x8f] sm:$0xff]
      %v1002 = vld [vmem:[#allocation2 + $0xa7] sm:$0xff]
      %v1003 = vld [vmem:[#allocation2 + $0xaf] sm:$0xff]
      %v1004 = vld [vmem:[#allocation2 + $0xc7] sm:$0xff]
      %v1005 = vld [vmem:[#allocation2 + $0xcf] sm:$0xff]
      %v1006 = vld [vmem:[#allocation2 + $0xe7] sm:$0xff]
      %v1007 = vld [vmem:[#allocation2 + $0xef] sm:$0xff]
      %v1008 = vpack.c.bf16 %v993, %v992
      %v1009 = vpack.c.bf16 %v995, %v994
      %v1010 = vpack.c.bf16 %v997, %v996
      %v1011 = vpack.c.bf16 %v999, %v998
      %v1012 = vpack.c.bf16 %v1001, %v1000
      %v1013 = vpack.c.bf16 %v1003, %v1002
      %v1014 = vpack.c.bf16 %v1005, %v1004
      %v1015 = vpack.c.bf16 %v1007, %v1006
      %v1016 = vld [vmem:[%s4] sm:$0xf]
      %v1017 = vld [vmem:[%s4 + $0x4] sm:$0xf]
      %v1018 = vld [vmem:[%s4 + $0x8] sm:$0xf]
      %v1019 = vld [vmem:[%s4 + $0xc] sm:$0xf]
      %v1020 = vld [vmem:[%s4 + $0x10] sm:$0xf]
      %v1021 = vld [vmem:[%s4 + $0x14] sm:$0xf]
      %v1022 = vld [vmem:[%s4 + $0x18] sm:$0xf]
      %v1023 = vld [vmem:[%s4 + $0x1c] sm:$0xf]
      %v1024 = vld [vmem:[%s4 + $0x20] sm:$0xf]
      %v1025 = vld [vmem:[%s4 + $0x24] sm:$0xf]
      %v1026 = vld [vmem:[%s4 + $0x28] sm:$0xf]
      %v1027 = vld [vmem:[%s4 + $0x2c] sm:$0xf]
      %v1028 = vld [vmem:[%s4 + $0x30] sm:$0xf]
      %v1029 = vld [vmem:[%s4 + $0x34] sm:$0xf]
      %v1030 = vld [vmem:[%s4 + $0x38] sm:$0xf]
      %v1031 = vld [vmem:[%s4 + $0x3c] sm:$0xf]
      %v1032 = vld [vmem:[#allocation2 + $0x8] sm:$0xff]
      %v1033 = vld [vmem:[#allocation2 + $0x10] sm:$0xff]
      %v1034 = vld [vmem:[#allocation2 + $0x28] sm:$0xff]
      %v1035 = vld [vmem:[#allocation2 + $0x30] sm:$0xff]
      %v1036 = vld [vmem:[#allocation2 + $0x48] sm:$0xff]
      %v1037 = vld [vmem:[#allocation2 + $0x50] sm:$0xff]
      %v1038 = vld [vmem:[#allocation2 + $0x68] sm:$0xff]
      %v1039 = vld [vmem:[#allocation2 + $0x70] sm:$0xff]
      %v1040 = vld [vmem:[#allocation2 + $0x88] sm:$0xff]
      %v1041 = vld [vmem:[#allocation2 + $0x90] sm:$0xff]
      %v1042 = vld [vmem:[#allocation2 + $0xa8] sm:$0xff]
      %v1043 = vld [vmem:[#allocation2 + $0xb0] sm:$0xff]
      %v1044 = vld [vmem:[#allocation2 + $0xc8] sm:$0xff]
      %v1045 = vld [vmem:[#allocation2 + $0xd0] sm:$0xff]
      %v1046 = vld [vmem:[#allocation2 + $0xe8] sm:$0xff]
      %v1047 = vld [vmem:[#allocation2 + $0xf0] sm:$0xff]
      %v1048 = vpack.c.bf16 %v1033, %v1032
      %v1049 = vpack.c.bf16 %v1035, %v1034
      %v1050 = vpack.c.bf16 %v1037, %v1036
      %v1051 = vpack.c.bf16 %v1039, %v1038
      %v1052 = vpack.c.bf16 %v1041, %v1040
      %v1053 = vpack.c.bf16 %v1043, %v1042
      %v1054 = vpack.c.bf16 %v1045, %v1044
      %v1055 = vpack.c.bf16 %v1047, %v1046
      %s1056 = scalar_lea.vmem %s4, 64
      %v1057 = vld [vmem:[%s1056] sm:$0xf]
      %v1058 = vld [vmem:[%s1056 + $0x4] sm:$0xf]
      %v1059 = vld [vmem:[%s1056 + $0x8] sm:$0xf]
      %v1060 = vld [vmem:[%s1056 + $0xc] sm:$0xf]
      %v1061 = vld [vmem:[%s1056 + $0x10] sm:$0xf]
      %v1062 = vld [vmem:[%s1056 + $0x14] sm:$0xf]
      %v1063 = vld [vmem:[%s1056 + $0x18] sm:$0xf]
      %v1064 = vld [vmem:[%s1056 + $0x1c] sm:$0xf]
      %v1065 = vld [vmem:[%s1056 + $0x20] sm:$0xf]
      %v1066 = vld [vmem:[%s1056 + $0x24] sm:$0xf]
      %v1067 = vld [vmem:[%s1056 + $0x28] sm:$0xf]
      %v1068 = vld [vmem:[%s1056 + $0x2c] sm:$0xf]
      %v1069 = vld [vmem:[%s1056 + $0x30] sm:$0xf]
      %v1070 = vld [vmem:[%s1056 + $0x34] sm:$0xf]
      %v1071 = vld [vmem:[%s1056 + $0x38] sm:$0xf]
      %v1072 = vld [vmem:[%s1056 + $0x3c] sm:$0xf]
      %v1089 = vunpack.c.l.b16 %v1057
      %v1090 = vunpack.c.l.b16 %v1058
      %v1091 = vunpack.c.l.b16 %v1059
      %v1092 = vunpack.c.l.b16 %v1060
      %v1093 = vunpack.c.l.b16 %v1061
      %v1094 = vunpack.c.l.b16 %v1062
      %v1095 = vunpack.c.l.b16 %v1063
      %v1096 = vunpack.c.l.b16 %v1064
      %v1097 = vunpack.c.l.b16 %v1065
      %v1098 = vunpack.c.l.b16 %v1066
      %v1099 = vunpack.c.l.b16 %v1067
      %v1100 = vunpack.c.l.b16 %v1068
      %v1101 = vunpack.c.l.b16 %v1069
      %v1102 = vunpack.c.l.b16 %v1070
      %v1103 = vunpack.c.l.b16 %v1071
      %v1104 = vunpack.c.l.b16 %v1072
      %v1105 = vpack.c.b16 %v1090, %v1089
      %v1106 = vpack.c.b16 %v1092, %v1091
      %v1107 = vpack.c.b16 %v1094, %v1093
      %v1108 = vpack.c.b16 %v1096, %v1095
      %v1109 = vpack.c.b16 %v1098, %v1097
      %v1110 = vpack.c.b16 %v1100, %v1099
      %v1111 = vpack.c.b16 %v1102, %v1101
      %v1112 = vpack.c.b16 %v1104, %v1103
      %1121 = vmatpush.bf16.msra.mxu0 %v1112
      %1122 = vmatpush.bf16.msra.mxu0 %v1111
      %1123 = vmatpush.bf16.msra.mxu0 %v1110
      %1124 = vmatpush.bf16.msra.mxu0 %v1109
      %1125 = vmatpush.bf16.msra.mxu0 %v1108
      %1126 = vmatpush.bf16.msra.mxu0 %v1107
      %1127 = vmatpush.bf16.msra.mxu0 %v1106
      %1128 = vmatpush.bf16.msra.mxu0 %v1105
      %1129 = vmatmul.bf16.gmra.mxu0 %v1048
      %v1130 = vpop.f32.mrf.mxu0
      %v1131 = vadd.f32 0.0, %v1130
      %v1132 = vpop.f32.mrf.mxu0
      %v1133 = vadd.f32 0.0, %v1132
      %1134 = vmatmul.bf16.gmra.mxu0 %v1049
      %v1135 = vpop.f32.mrf.mxu0
      %v1136 = vadd.f32 0.0, %v1135
      %v1137 = vpop.f32.mrf.mxu0
      %v1138 = vadd.f32 0.0, %v1137
      %1139 = vmatmul.bf16.gmra.mxu0 %v1050
      %v1140 = vpop.f32.mrf.mxu0
      %v1141 = vadd.f32 0.0, %v1140
      %v1142 = vpop.f32.mrf.mxu0
      %v1143 = vadd.f32 0.0, %v1142
      %1144 = vmatmul.bf16.gmra.mxu0 %v1051
      %v1145 = vpop.f32.mrf.mxu0
      %v1146 = vadd.f32 0.0, %v1145
      %v1147 = vpop.f32.mrf.mxu0
      %v1148 = vadd.f32 0.0, %v1147
      %1149 = vmatmul.bf16.gmra.mxu0 %v1052
      %v1150 = vpop.f32.mrf.mxu0
      %v1151 = vadd.f32 0.0, %v1150
      %v1152 = vpop.f32.mrf.mxu0
      %v1153 = vadd.f32 0.0, %v1152
      %1154 = vmatmul.bf16.gmra.mxu0 %v1053
      %v1155 = vpop.f32.mrf.mxu0
      %v1156 = vadd.f32 0.0, %v1155
      %v1157 = vpop.f32.mrf.mxu0
      %v1158 = vadd.f32 0.0, %v1157
      %1159 = vmatmul.bf16.gmra.mxu0 %v1054
      %v1160 = vpop.f32.mrf.mxu0
      %v1161 = vadd.f32 0.0, %v1160
      %v1162 = vpop.f32.mrf.mxu0
      %v1163 = vadd.f32 0.0, %v1162
      %1164 = vmatmul.bf16.gmra.mxu0 %v1055
      %v1165 = vpop.f32.mrf.mxu0
      %v1166 = vadd.f32 0.0, %v1165
      %v1167 = vpop.f32.mrf.mxu0
      %v1168 = vadd.f32 0.0, %v1167
      %1169 = vdwg.mxu0
      %v1186 = vunpack.c.l.b16 %v1016
      %v1187 = vunpack.c.l.b16 %v1017
      %v1188 = vunpack.c.l.b16 %v1018
      %v1189 = vunpack.c.l.b16 %v1019
      %v1190 = vunpack.c.l.b16 %v1020
      %v1191 = vunpack.c.l.b16 %v1021
      %v1192 = vunpack.c.l.b16 %v1022
      %v1193 = vunpack.c.l.b16 %v1023
      %v1194 = vunpack.c.l.b16 %v1024
      %v1195 = vunpack.c.l.b16 %v1025
      %v1196 = vunpack.c.l.b16 %v1026
      %v1197 = vunpack.c.l.b16 %v1027
      %v1198 = vunpack.c.l.b16 %v1028
      %v1199 = vunpack.c.l.b16 %v1029
      %v1200 = vunpack.c.l.b16 %v1030
      %v1201 = vunpack.c.l.b16 %v1031
      %v1202 = vpack.c.b16 %v1187, %v1186
      %v1203 = vpack.c.b16 %v1189, %v1188
      %v1204 = vpack.c.b16 %v1191, %v1190
      %v1205 = vpack.c.b16 %v1193, %v1192
      %v1206 = vpack.c.b16 %v1195, %v1194
      %v1207 = vpack.c.b16 %v1197, %v1196
      %v1208 = vpack.c.b16 %v1199, %v1198
      %v1209 = vpack.c.b16 %v1201, %v1200
      %1218 = vmatpush.bf16.msra.mxu0 %v1209
      %1219 = vmatpush.bf16.msra.mxu0 %v1208
      %1220 = vmatpush.bf16.msra.mxu0 %v1207
      %1221 = vmatpush.bf16.msra.mxu0 %v1206
      %1222 = vmatpush.bf16.msra.mxu0 %v1205
      %1223 = vmatpush.bf16.msra.mxu0 %v1204
      %1224 = vmatpush.bf16.msra.mxu0 %v1203
      %1225 = vmatpush.bf16.msra.mxu0 %v1202
      %1226 = vmatmul.bf16.gmra.mxu0 %v1008
      %v1227 = vpop.f32.mrf.mxu0
      %v1228 = vadd.f32 %v1131, %v1227
      %v1229 = vpop.f32.mrf.mxu0
      %v1230 = vadd.f32 %v1133, %v1229
      %1231 = vmatmul.bf16.gmra.mxu0 %v1009
      %v1232 = vpop.f32.mrf.mxu0
      %v1233 = vadd.f32 %v1136, %v1232
      %v1234 = vpop.f32.mrf.mxu0
      %v1235 = vadd.f32 %v1138, %v1234
      %1236 = vmatmul.bf16.gmra.mxu0 %v1010
      %v1237 = vpop.f32.mrf.mxu0
      %v1238 = vadd.f32 %v1141, %v1237
      %v1239 = vpop.f32.mrf.mxu0
      %v1240 = vadd.f32 %v1143, %v1239
      %1241 = vmatmul.bf16.gmra.mxu0 %v1011
      %v1242 = vpop.f32.mrf.mxu0
      %v1243 = vadd.f32 %v1146, %v1242
      %v1244 = vpop.f32.mrf.mxu0
      %v1245 = vadd.f32 %v1148, %v1244
      %1246 = vmatmul.bf16.gmra.mxu0 %v1012
      %v1247 = vpop.f32.mrf.mxu0
      %v1248 = vadd.f32 %v1151, %v1247
      %v1249 = vpop.f32.mrf.mxu0
      %v1250 = vadd.f32 %v1153, %v1249
      %1251 = vmatmul.bf16.gmra.mxu0 %v1013
      %v1252 = vpop.f32.mrf.mxu0
      %v1253 = vadd.f32 %v1156, %v1252
      %v1254 = vpop.f32.mrf.mxu0
      %v1255 = vadd.f32 %v1158, %v1254
      %1256 = vmatmul.bf16.gmra.mxu0 %v1014
      %v1257 = vpop.f32.mrf.mxu0
      %v1258 = vadd.f32 %v1161, %v1257
      %v1259 = vpop.f32.mrf.mxu0
      %v1260 = vadd.f32 %v1163, %v1259
      %1261 = vmatmul.bf16.gmra.mxu0 %v1015
      %v1262 = vpop.f32.mrf.mxu0
      %v1263 = vadd.f32 %v1166, %v1262
      %v1264 = vpop.f32.mrf.mxu0
      %v1265 = vadd.f32 %v1168, %v1264
      %1266 = vdwg.mxu0
      %v1267 = vld [vmem:[#allocation2 + $0x9] sm:$0xff]
      %v1268 = vld [vmem:[#allocation2 + $0x11] sm:$0xff]
      %v1269 = vld [vmem:[#allocation2 + $0x29] sm:$0xff]
      %v1270 = vld [vmem:[#allocation2 + $0x31] sm:$0xff]
      %v1271 = vld [vmem:[#allocation2 + $0x49] sm:$0xff]
      %v1272 = vld [vmem:[#allocation2 + $0x51] sm:$0xff]
      %v1273 = vld [vmem:[#allocation2 + $0x69] sm:$0xff]
      %v1274 = vld [vmem:[#allocation2 + $0x71] sm:$0xff]
      %v1275 = vld [vmem:[#allocation2 + $0x89] sm:$0xff]
      %v1276 = vld [vmem:[#allocation2 + $0x91] sm:$0xff]
      %v1277 = vld [vmem:[#allocation2 + $0xa9] sm:$0xff]
      %v1278 = vld [vmem:[#allocation2 + $0xb1] sm:$0xff]
      %v1279 = vld [vmem:[#allocation2 + $0xc9] sm:$0xff]
      %v1280 = vld [vmem:[#allocation2 + $0xd1] sm:$0xff]
      %v1281 = vld [vmem:[#allocation2 + $0xe9] sm:$0xff]
      %v1282 = vld [vmem:[#allocation2 + $0xf1] sm:$0xff]
      %v1283 = vpack.c.bf16 %v1268, %v1267
      %v1284 = vpack.c.bf16 %v1270, %v1269
      %v1285 = vpack.c.bf16 %v1272, %v1271
      %v1286 = vpack.c.bf16 %v1274, %v1273
      %v1287 = vpack.c.bf16 %v1276, %v1275
      %v1288 = vpack.c.bf16 %v1278, %v1277
      %v1289 = vpack.c.bf16 %v1280, %v1279
      %v1290 = vpack.c.bf16 %v1282, %v1281
      %s1291 = scalar_lea.vmem %s4, 128
      %v1292 = vld [vmem:[%s1291] sm:$0xf]
      %v1293 = vld [vmem:[%s1291 + $0x4] sm:$0xf]
      %v1294 = vld [vmem:[%s1291 + $0x8] sm:$0xf]
      %v1295 = vld [vmem:[%s1291 + $0xc] sm:$0xf]
      %v1296 = vld [vmem:[%s1291 + $0x10] sm:$0xf]
      %v1297 = vld [vmem:[%s1291 + $0x14] sm:$0xf]
      %v1298 = vld [vmem:[%s1291 + $0x18] sm:$0xf]
      %v1299 = vld [vmem:[%s1291 + $0x1c] sm:$0xf]
      %v1300 = vld [vmem:[%s1291 + $0x20] sm:$0xf]
      %v1301 = vld [vmem:[%s1291 + $0x24] sm:$0xf]
      %v1302 = vld [vmem:[%s1291 + $0x28] sm:$0xf]
      %v1303 = vld [vmem:[%s1291 + $0x2c] sm:$0xf]
      %v1304 = vld [vmem:[%s1291 + $0x30] sm:$0xf]
      %v1305 = vld [vmem:[%s1291 + $0x34] sm:$0xf]
      %v1306 = vld [vmem:[%s1291 + $0x38] sm:$0xf]
      %v1307 = vld [vmem:[%s1291 + $0x3c] sm:$0xf]
      %v1324 = vunpack.c.l.b16 %v1292
      %v1325 = vunpack.c.l.b16 %v1293
      %v1326 = vunpack.c.l.b16 %v1294
      %v1327 = vunpack.c.l.b16 %v1295
      %v1328 = vunpack.c.l.b16 %v1296
      %v1329 = vunpack.c.l.b16 %v1297
      %v1330 = vunpack.c.l.b16 %v1298
      %v1331 = vunpack.c.l.b16 %v1299
      %v1332 = vunpack.c.l.b16 %v1300
      %v1333 = vunpack.c.l.b16 %v1301
      %v1334 = vunpack.c.l.b16 %v1302
      %v1335 = vunpack.c.l.b16 %v1303
      %v1336 = vunpack.c.l.b16 %v1304
      %v1337 = vunpack.c.l.b16 %v1305
      %v1338 = vunpack.c.l.b16 %v1306
      %v1339 = vunpack.c.l.b16 %v1307
      %v1340 = vpack.c.b16 %v1325, %v1324
      %v1341 = vpack.c.b16 %v1327, %v1326
      %v1342 = vpack.c.b16 %v1329, %v1328
      %v1343 = vpack.c.b16 %v1331, %v1330
      %v1344 = vpack.c.b16 %v1333, %v1332
      %v1345 = vpack.c.b16 %v1335, %v1334
      %v1346 = vpack.c.b16 %v1337, %v1336
      %v1347 = vpack.c.b16 %v1339, %v1338
      %1356 = vmatpush.bf16.msra.mxu0 %v1347
      %1357 = vmatpush.bf16.msra.mxu0 %v1346
      %1358 = vmatpush.bf16.msra.mxu0 %v1345
      %1359 = vmatpush.bf16.msra.mxu0 %v1344
      %1360 = vmatpush.bf16.msra.mxu0 %v1343
      %1361 = vmatpush.bf16.msra.mxu0 %v1342
      %1362 = vmatpush.bf16.msra.mxu0 %v1341
      %1363 = vmatpush.bf16.msra.mxu0 %v1340
      %1364 = vmatmul.bf16.gmra.mxu0 %v1283
      %v1365 = vpop.f32.mrf.mxu0
      %v1366 = vadd.f32 0.0, %v1365
      %v1367 = vpop.f32.mrf.mxu0
      %v1368 = vadd.f32 0.0, %v1367
      %1369 = vmatmul.bf16.gmra.mxu0 %v1284
      %v1370 = vpop.f32.mrf.mxu0
      %v1371 = vadd.f32 0.0, %v1370
      %v1372 = vpop.f32.mrf.mxu0
      %v1373 = vadd.f32 0.0, %v1372
      %1374 = vmatmul.bf16.gmra.mxu0 %v1285
      %v1375 = vpop.f32.mrf.mxu0
      %v1376 = vadd.f32 0.0, %v1375
      %v1377 = vpop.f32.mrf.mxu0
      %v1378 = vadd.f32 0.0, %v1377
      %1379 = vmatmul.bf16.gmra.mxu0 %v1286
      %v1380 = vpop.f32.mrf.mxu0
      %v1381 = vadd.f32 0.0, %v1380
      %v1382 = vpop.f32.mrf.mxu0
      %v1383 = vadd.f32 0.0, %v1382
      %1384 = vmatmul.bf16.gmra.mxu0 %v1287
      %v1385 = vpop.f32.mrf.mxu0
      %v1386 = vadd.f32 0.0, %v1385
      %v1387 = vpop.f32.mrf.mxu0
      %v1388 = vadd.f32 0.0, %v1387
      %1389 = vmatmul.bf16.gmra.mxu0 %v1288
      %v1390 = vpop.f32.mrf.mxu0
      %v1391 = vadd.f32 0.0, %v1390
      %v1392 = vpop.f32.mrf.mxu0
      %v1393 = vadd.f32 0.0, %v1392
      %1394 = vmatmul.bf16.gmra.mxu0 %v1289
      %v1395 = vpop.f32.mrf.mxu0
      %v1396 = vadd.f32 0.0, %v1395
      %v1397 = vpop.f32.mrf.mxu0
      %v1398 = vadd.f32 0.0, %v1397
      %1399 = vmatmul.bf16.gmra.mxu0 %v1290
      %v1400 = vpop.f32.mrf.mxu0
      %v1401 = vadd.f32 0.0, %v1400
      %v1402 = vpop.f32.mrf.mxu0
      %v1403 = vadd.f32 0.0, %v1402
      %1404 = vdwg.mxu0
      %v1405 = vadd.f32 %v1228, %v1366
      %v1406 = vadd.f32 %v1230, %v1368
      %v1407 = vadd.f32 %v1233, %v1371
      %v1408 = vadd.f32 %v1235, %v1373
      %v1409 = vadd.f32 %v1238, %v1376
      %v1410 = vadd.f32 %v1240, %v1378
      %v1411 = vadd.f32 %v1243, %v1381
      %v1412 = vadd.f32 %v1245, %v1383
      %v1413 = vadd.f32 %v1248, %v1386
      %v1414 = vadd.f32 %v1250, %v1388
      %v1415 = vadd.f32 %v1253, %v1391
      %v1416 = vadd.f32 %v1255, %v1393
      %v1417 = vadd.f32 %v1258, %v1396
      %v1418 = vadd.f32 %v1260, %v1398
      %v1419 = vadd.f32 %v1263, %v1401
      %v1420 = vadd.f32 %v1265, %v1403
      %s1421 = scalar_lea.vmem [#allocation2], 32
      %v1422 = vld [vmem:[%s1421 + $0x7] sm:$0xff]
      %v1423 = vld [vmem:[%s1421 + $0xf] sm:$0xff]
      %v1424 = vld [vmem:[%s1421 + $0x27] sm:$0xff]
      %v1425 = vld [vmem:[%s1421 + $0x2f] sm:$0xff]
      %v1426 = vld [vmem:[%s1421 + $0x47] sm:$0xff]
      %v1427 = vld [vmem:[%s1421 + $0x4f] sm:$0xff]
      %v1428 = vld [vmem:[%s1421 + $0x67] sm:$0xff]
      %v1429 = vld [vmem:[%s1421 + $0x6f] sm:$0xff]
      %v1430 = vld [vmem:[%s1421 + $0x87] sm:$0xff]
      %v1431 = vld [vmem:[%s1421 + $0x8f] sm:$0xff]
      %v1432 = vld [vmem:[%s1421 + $0xa7] sm:$0xff]
      %v1433 = vld [vmem:[%s1421 + $0xaf] sm:$0xff]
      %v1434 = vld [vmem:[%s1421 + $0xc7] sm:$0xff]
      %v1435 = vld [vmem:[%s1421 + $0xcf] sm:$0xff]
      %v1436 = vld [vmem:[%s1421 + $0xe7] sm:$0xff]
      %v1437 = vld [vmem:[%s1421 + $0xef] sm:$0xff]
      %v1438 = vpack.c.bf16 %v1423, %v1422
      %v1439 = vpack.c.bf16 %v1425, %v1424
      %v1440 = vpack.c.bf16 %v1427, %v1426
      %v1441 = vpack.c.bf16 %v1429, %v1428
      %v1442 = vpack.c.bf16 %v1431, %v1430
      %v1443 = vpack.c.bf16 %v1433, %v1432
      %v1444 = vpack.c.bf16 %v1435, %v1434
      %v1445 = vpack.c.bf16 %v1437, %v1436
      %s1446 = scalar_lea.vmem %s4, 192
      %v1447 = vld [vmem:[%s1446] sm:$0xf]
      %v1448 = vld [vmem:[%s1446 + $0x4] sm:$0xf]
      %v1449 = vld [vmem:[%s1446 + $0x8] sm:$0xf]
      %v1450 = vld [vmem:[%s1446 + $0xc] sm:$0xf]
      %v1451 = vld [vmem:[%s1446 + $0x10] sm:$0xf]
      %v1452 = vld [vmem:[%s1446 + $0x14] sm:$0xf]
      %v1453 = vld [vmem:[%s1446 + $0x18] sm:$0xf]
      %v1454 = vld [vmem:[%s1446 + $0x1c] sm:$0xf]
      %v1455 = vld [vmem:[%s1446 + $0x20] sm:$0xf]
      %v1456 = vld [vmem:[%s1446 + $0x24] sm:$0xf]
      %v1457 = vld [vmem:[%s1446 + $0x28] sm:$0xf]
      %v1458 = vld [vmem:[%s1446 + $0x2c] sm:$0xf]
      %v1459 = vld [vmem:[%s1446 + $0x30] sm:$0xf]
      %v1460 = vld [vmem:[%s1446 + $0x34] sm:$0xf]
      %v1461 = vld [vmem:[%s1446 + $0x38] sm:$0xf]
      %v1462 = vld [vmem:[%s1446 + $0x3c] sm:$0xf]
      %v1479 = vunpack.c.l.b16 %v1447
      %v1480 = vunpack.c.l.b16 %v1448
      %v1481 = vunpack.c.l.b16 %v1449
      %v1482 = vunpack.c.l.b16 %v1450
      %v1483 = vunpack.c.l.b16 %v1451
      %v1484 = vunpack.c.l.b16 %v1452
      %v1485 = vunpack.c.l.b16 %v1453
      %v1486 = vunpack.c.l.b16 %v1454
      %v1487 = vunpack.c.l.b16 %v1455
      %v1488 = vunpack.c.l.b16 %v1456
      %v1489 = vunpack.c.l.b16 %v1457
      %v1490 = vunpack.c.l.b16 %v1458
      %v1491 = vunpack.c.l.b16 %v1459
      %v1492 = vunpack.c.l.b16 %v1460
      %v1493 = vunpack.c.l.b16 %v1461
      %v1494 = vunpack.c.l.b16 %v1462
      %v1495 = vpack.c.b16 %v1480, %v1479
      %v1496 = vpack.c.b16 %v1482, %v1481
      %v1497 = vpack.c.b16 %v1484, %v1483
      %v1498 = vpack.c.b16 %v1486, %v1485
      %v1499 = vpack.c.b16 %v1488, %v1487
      %v1500 = vpack.c.b16 %v1490, %v1489
      %v1501 = vpack.c.b16 %v1492, %v1491
      %v1502 = vpack.c.b16 %v1494, %v1493
      %1511 = vmatpush.bf16.msra.mxu0 %v1502
      %1512 = vmatpush.bf16.msra.mxu0 %v1501
      %1513 = vmatpush.bf16.msra.mxu0 %v1500
      %1514 = vmatpush.bf16.msra.mxu0 %v1499
      %1515 = vmatpush.bf16.msra.mxu0 %v1498
      %1516 = vmatpush.bf16.msra.mxu0 %v1497
      %1517 = vmatpush.bf16.msra.mxu0 %v1496
      %1518 = vmatpush.bf16.msra.mxu0 %v1495
      %1519 = vmatmul.bf16.gmra.mxu0 %v1438
      %v1520 = vpop.f32.mrf.mxu0
      %v1521 = vadd.f32 0.0, %v1520
      %v1522 = vpop.f32.mrf.mxu0
      %v1523 = vadd.f32 0.0, %v1522
      %1524 = vmatmul.bf16.gmra.mxu0 %v1439
      %v1525 = vpop.f32.mrf.mxu0
      %v1526 = vadd.f32 0.0, %v1525
      %v1527 = vpop.f32.mrf.mxu0
      %v1528 = vadd.f32 0.0, %v1527
      %1529 = vmatmul.bf16.gmra.mxu0 %v1440
      %v1530 = vpop.f32.mrf.mxu0
      %v1531 = vadd.f32 0.0, %v1530
      %v1532 = vpop.f32.mrf.mxu0
      %v1533 = vadd.f32 0.0, %v1532
      %1534 = vmatmul.bf16.gmra.mxu0 %v1441
      %v1535 = vpop.f32.mrf.mxu0
      %v1536 = vadd.f32 0.0, %v1535
      %v1537 = vpop.f32.mrf.mxu0
      %v1538 = vadd.f32 0.0, %v1537
      %1539 = vmatmul.bf16.gmra.mxu0 %v1442
      %v1540 = vpop.f32.mrf.mxu0
      %v1541 = vadd.f32 0.0, %v1540
      %v1542 = vpop.f32.mrf.mxu0
      %v1543 = vadd.f32 0.0, %v1542
      %1544 = vmatmul.bf16.gmra.mxu0 %v1443
      %v1545 = vpop.f32.mrf.mxu0
      %v1546 = vadd.f32 0.0, %v1545
      %v1547 = vpop.f32.mrf.mxu0
      %v1548 = vadd.f32 0.0, %v1547
      %1549 = vmatmul.bf16.gmra.mxu0 %v1444
      %v1550 = vpop.f32.mrf.mxu0
      %v1551 = vadd.f32 0.0, %v1550
      %v1552 = vpop.f32.mrf.mxu0
      %v1553 = vadd.f32 0.0, %v1552
      %1554 = vmatmul.bf16.gmra.mxu0 %v1445
      %v1555 = vpop.f32.mrf.mxu0
      %v1556 = vadd.f32 0.0, %v1555
      %v1557 = vpop.f32.mrf.mxu0
      %v1558 = vadd.f32 0.0, %v1557
      %1559 = vdwg.mxu0
      %v1560 = vadd.f32 %v1405, %v1521
      %v1561 = vadd.f32 %v1406, %v1523
      %v1562 = vadd.f32 %v1407, %v1526
      %v1563 = vadd.f32 %v1408, %v1528
      %v1564 = vadd.f32 %v1409, %v1531
      %v1565 = vadd.f32 %v1410, %v1533
      %v1566 = vadd.f32 %v1411, %v1536
      %v1567 = vadd.f32 %v1412, %v1538
      %v1568 = vadd.f32 %v1413, %v1541
      %v1569 = vadd.f32 %v1414, %v1543
      %v1570 = vadd.f32 %v1415, %v1546
      %v1571 = vadd.f32 %v1416, %v1548
      %v1572 = vadd.f32 %v1417, %v1551
      %v1573 = vadd.f32 %v1418, %v1553
      %v1574 = vadd.f32 %v1419, %v1556
      %v1575 = vadd.f32 %v1420, %v1558
      %v1576 = vld [vmem:[%s1421 + $0x8] sm:$0xff]
      %v1577 = vld [vmem:[%s1421 + $0x10] sm:$0xff]
      %v1578 = vld [vmem:[%s1421 + $0x28] sm:$0xff]
      %v1579 = vld [vmem:[%s1421 + $0x30] sm:$0xff]
      %v1580 = vld [vmem:[%s1421 + $0x48] sm:$0xff]
      %v1581 = vld [vmem:[%s1421 + $0x50] sm:$0xff]
      %v1582 = vld [vmem:[%s1421 + $0x68] sm:$0xff]
      %v1583 = vld [vmem:[%s1421 + $0x70] sm:$0xff]
      %v1584 = vld [vmem:[%s1421 + $0x88] sm:$0xff]
      %v1585 = vld [vmem:[%s1421 + $0x90] sm:$0xff]
      %v1586 = vld [vmem:[%s1421 + $0xa8] sm:$0xff]
      %v1587 = vld [vmem:[%s1421 + $0xb0] sm:$0xff]
      %v1588 = vld [vmem:[%s1421 + $0xc8] sm:$0xff]
      %v1589 = vld [vmem:[%s1421 + $0xd0] sm:$0xff]
      %v1590 = vld [vmem:[%s1421 + $0xe8] sm:$0xff]
      %v1591 = vld [vmem:[%s1421 + $0xf0] sm:$0xff]
      %v1592 = vpack.c.bf16 %v1577, %v1576
      %v1593 = vpack.c.bf16 %v1579, %v1578
      %v1594 = vpack.c.bf16 %v1581, %v1580
      %v1595 = vpack.c.bf16 %v1583, %v1582
      %v1596 = vpack.c.bf16 %v1585, %v1584
      %v1597 = vpack.c.bf16 %v1587, %v1586
      %v1598 = vpack.c.bf16 %v1589, %v1588
      %v1599 = vpack.c.bf16 %v1591, %v1590
      %s1600 = scalar_lea.vmem %s4, 256
      %v1601 = vld [vmem:[%s1600] sm:$0xf]
      %v1602 = vld [vmem:[%s1600 + $0x4] sm:$0xf]
      %v1603 = vld [vmem:[%s1600 + $0x8] sm:$0xf]
      %v1604 = vld [vmem:[%s1600 + $0xc] sm:$0xf]
      %v1605 = vld [vmem:[%s1600 + $0x10] sm:$0xf]
      %v1606 = vld [vmem:[%s1600 + $0x14] sm:$0xf]
      %v1607 = vld [vmem:[%s1600 + $0x18] sm:$0xf]
      %v1608 = vld [vmem:[%s1600 + $0x1c] sm:$0xf]
      %v1609 = vld [vmem:[%s1600 + $0x20] sm:$0xf]
      %v1610 = vld [vmem:[%s1600 + $0x24] sm:$0xf]
      %v1611 = vld [vmem:[%s1600 + $0x28] sm:$0xf]
      %v1612 = vld [vmem:[%s1600 + $0x2c] sm:$0xf]
      %v1613 = vld [vmem:[%s1600 + $0x30] sm:$0xf]
      %v1614 = vld [vmem:[%s1600 + $0x34] sm:$0xf]
      %v1615 = vld [vmem:[%s1600 + $0x38] sm:$0xf]
      %v1616 = vld [vmem:[%s1600 + $0x3c] sm:$0xf]
      %v1633 = vunpack.c.l.b16 %v1601
      %v1634 = vunpack.c.l.b16 %v1602
      %v1635 = vunpack.c.l.b16 %v1603
      %v1636 = vunpack.c.l.b16 %v1604
      %v1637 = vunpack.c.l.b16 %v1605
      %v1638 = vunpack.c.l.b16 %v1606
      %v1639 = vunpack.c.l.b16 %v1607
      %v1640 = vunpack.c.l.b16 %v1608
      %v1641 = vunpack.c.l.b16 %v1609
      %v1642 = vunpack.c.l.b16 %v1610
      %v1643 = vunpack.c.l.b16 %v1611
      %v1644 = vunpack.c.l.b16 %v1612
      %v1645 = vunpack.c.l.b16 %v1613
      %v1646 = vunpack.c.l.b16 %v1614
      %v1647 = vunpack.c.l.b16 %v1615
      %v1648 = vunpack.c.l.b16 %v1616
      %v1649 = vpack.c.b16 %v1634, %v1633
      %v1650 = vpack.c.b16 %v1636, %v1635
      %v1651 = vpack.c.b16 %v1638, %v1637
      %v1652 = vpack.c.b16 %v1640, %v1639
      %v1653 = vpack.c.b16 %v1642, %v1641
      %v1654 = vpack.c.b16 %v1644, %v1643
      %v1655 = vpack.c.b16 %v1646, %v1645
      %v1656 = vpack.c.b16 %v1648, %v1647
      %1665 = vmatpush.bf16.msra.mxu0 %v1656
      %1666 = vmatpush.bf16.msra.mxu0 %v1655
      %1667 = vmatpush.bf16.msra.mxu0 %v1654
      %1668 = vmatpush.bf16.msra.mxu0 %v1653
      %1669 = vmatpush.bf16.msra.mxu0 %v1652
      %1670 = vmatpush.bf16.msra.mxu0 %v1651
      %1671 = vmatpush.bf16.msra.mxu0 %v1650
      %1672 = vmatpush.bf16.msra.mxu0 %v1649
      %1673 = vmatmul.bf16.gmra.mxu0 %v1592
      %v1674 = vpop.f32.mrf.mxu0
      %v1675 = vadd.f32 0.0, %v1674
      %v1676 = vpop.f32.mrf.mxu0
      %v1677 = vadd.f32 0.0, %v1676
      %1678 = vmatmul.bf16.gmra.mxu0 %v1593
      %v1679 = vpop.f32.mrf.mxu0
      %v1680 = vadd.f32 0.0, %v1679
      %v1681 = vpop.f32.mrf.mxu0
      %v1682 = vadd.f32 0.0, %v1681
      %1683 = vmatmul.bf16.gmra.mxu0 %v1594
      %v1684 = vpop.f32.mrf.mxu0
      %v1685 = vadd.f32 0.0, %v1684
      %v1686 = vpop.f32.mrf.mxu0
      %v1687 = vadd.f32 0.0, %v1686
      %1688 = vmatmul.bf16.gmra.mxu0 %v1595
      %v1689 = vpop.f32.mrf.mxu0
      %v1690 = vadd.f32 0.0, %v1689
      %v1691 = vpop.f32.mrf.mxu0
      %v1692 = vadd.f32 0.0, %v1691
      %1693 = vmatmul.bf16.gmra.mxu0 %v1596
      %v1694 = vpop.f32.mrf.mxu0
      %v1695 = vadd.f32 0.0, %v1694
      %v1696 = vpop.f32.mrf.mxu0
      %v1697 = vadd.f32 0.0, %v1696
      %1698 = vmatmul.bf16.gmra.mxu0 %v1597
      %v1699 = vpop.f32.mrf.mxu0
      %v1700 = vadd.f32 0.0, %v1699
      %v1701 = vpop.f32.mrf.mxu0
      %v1702 = vadd.f32 0.0, %v1701
      %1703 = vmatmul.bf16.gmra.mxu0 %v1598
      %v1704 = vpop.f32.mrf.mxu0
      %v1705 = vadd.f32 0.0, %v1704
      %v1706 = vpop.f32.mrf.mxu0
      %v1707 = vadd.f32 0.0, %v1706
      %1708 = vmatmul.bf16.gmra.mxu0 %v1599
      %v1709 = vpop.f32.mrf.mxu0
      %v1710 = vadd.f32 0.0, %v1709
      %v1711 = vpop.f32.mrf.mxu0
      %v1712 = vadd.f32 0.0, %v1711
      %1713 = vdwg.mxu0
      %v1714 = vadd.f32 %v1560, %v1675
      %v1715 = vadd.f32 %v1561, %v1677
      %v1716 = vadd.f32 %v1562, %v1680
      %v1717 = vadd.f32 %v1563, %v1682
      %v1718 = vadd.f32 %v1564, %v1685
      %v1719 = vadd.f32 %v1565, %v1687
      %v1720 = vadd.f32 %v1566, %v1690
      %v1721 = vadd.f32 %v1567, %v1692
      %v1722 = vadd.f32 %v1568, %v1695
      %v1723 = vadd.f32 %v1569, %v1697
      %v1724 = vadd.f32 %v1570, %v1700
      %v1725 = vadd.f32 %v1571, %v1702
      %v1726 = vadd.f32 %v1572, %v1705
      %v1727 = vadd.f32 %v1573, %v1707
      %v1728 = vadd.f32 %v1574, %v1710
      %v1729 = vadd.f32 %v1575, %v1712
      %v1730 = vld [vmem:[%s1421 + $0x9] sm:$0xff]
      %v1731 = vld [vmem:[%s1421 + $0x11] sm:$0xff]
      %v1732 = vld [vmem:[%s1421 + $0x29] sm:$0xff]
      %v1733 = vld [vmem:[%s1421 + $0x31] sm:$0xff]
      %v1734 = vld [vmem:[%s1421 + $0x49] sm:$0xff]
      %v1735 = vld [vmem:[%s1421 + $0x51] sm:$0xff]
      %v1736 = vld [vmem:[%s1421 + $0x69] sm:$0xff]
      %v1737 = vld [vmem:[%s1421 + $0x71] sm:$0xff]
      %v1738 = vld [vmem:[%s1421 + $0x89] sm:$0xff]
      %v1739 = vld [vmem:[%s1421 + $0x91] sm:$0xff]
      %v1740 = vld [vmem:[%s1421 + $0xa9] sm:$0xff]
      %v1741 = vld [vmem:[%s1421 + $0xb1] sm:$0xff]
      %v1742 = vld [vmem:[%s1421 + $0xc9] sm:$0xff]
      %v1743 = vld [vmem:[%s1421 + $0xd1] sm:$0xff]
      %v1744 = vld [vmem:[%s1421 + $0xe9] sm:$0xff]
      %v1745 = vld [vmem:[%s1421 + $0xf1] sm:$0xff]
      %v1746 = vpack.c.bf16 %v1731, %v1730
      %v1747 = vpack.c.bf16 %v1733, %v1732
      %v1748 = vpack.c.bf16 %v1735, %v1734
      %v1749 = vpack.c.bf16 %v1737, %v1736
      %v1750 = vpack.c.bf16 %v1739, %v1738
      %v1751 = vpack.c.bf16 %v1741, %v1740
      %v1752 = vpack.c.bf16 %v1743, %v1742
      %v1753 = vpack.c.bf16 %v1745, %v1744
      %s1754 = scalar_lea.vmem %s4, 320
      %v1755 = vld [vmem:[%s1754] sm:$0xf]
      %v1756 = vld [vmem:[%s1754 + $0x4] sm:$0xf]
      %v1757 = vld [vmem:[%s1754 + $0x8] sm:$0xf]
      %v1758 = vld [vmem:[%s1754 + $0xc] sm:$0xf]
      %v1759 = vld [vmem:[%s1754 + $0x10] sm:$0xf]
      %v1760 = vld [vmem:[%s1754 + $0x14] sm:$0xf]
      %v1761 = vld [vmem:[%s1754 + $0x18] sm:$0xf]
      %v1762 = vld [vmem:[%s1754 + $0x1c] sm:$0xf]
      %v1763 = vld [vmem:[%s1754 + $0x20] sm:$0xf]
      %v1764 = vld [vmem:[%s1754 + $0x24] sm:$0xf]
      %v1765 = vld [vmem:[%s1754 + $0x28] sm:$0xf]
      %v1766 = vld [vmem:[%s1754 + $0x2c] sm:$0xf]
      %v1767 = vld [vmem:[%s1754 + $0x30] sm:$0xf]
      %v1768 = vld [vmem:[%s1754 + $0x34] sm:$0xf]
      %v1769 = vld [vmem:[%s1754 + $0x38] sm:$0xf]
      %v1770 = vld [vmem:[%s1754 + $0x3c] sm:$0xf]
      %v1787 = vunpack.c.l.b16 %v1755
      %v1788 = vunpack.c.l.b16 %v1756
      %v1789 = vunpack.c.l.b16 %v1757
      %v1790 = vunpack.c.l.b16 %v1758
      %v1791 = vunpack.c.l.b16 %v1759
      %v1792 = vunpack.c.l.b16 %v1760
      %v1793 = vunpack.c.l.b16 %v1761
      %v1794 = vunpack.c.l.b16 %v1762
      %v1795 = vunpack.c.l.b16 %v1763
      %v1796 = vunpack.c.l.b16 %v1764
      %v1797 = vunpack.c.l.b16 %v1765
      %v1798 = vunpack.c.l.b16 %v1766
      %v1799 = vunpack.c.l.b16 %v1767
      %v1800 = vunpack.c.l.b16 %v1768
      %v1801 = vunpack.c.l.b16 %v1769
      %v1802 = vunpack.c.l.b16 %v1770
      %v1803 = vpack.c.b16 %v1788, %v1787
      %v1804 = vpack.c.b16 %v1790, %v1789
      %v1805 = vpack.c.b16 %v1792, %v1791
      %v1806 = vpack.c.b16 %v1794, %v1793
      %v1807 = vpack.c.b16 %v1796, %v1795
      %v1808 = vpack.c.b16 %v1798, %v1797
      %v1809 = vpack.c.b16 %v1800, %v1799
      %v1810 = vpack.c.b16 %v1802, %v1801
      %1819 = vmatpush.bf16.msra.mxu0 %v1810
      %1820 = vmatpush.bf16.msra.mxu0 %v1809
      %1821 = vmatpush.bf16.msra.mxu0 %v1808
      %1822 = vmatpush.bf16.msra.mxu0 %v1807
      %1823 = vmatpush.bf16.msra.mxu0 %v1806
      %1824 = vmatpush.bf16.msra.mxu0 %v1805
      %1825 = vmatpush.bf16.msra.mxu0 %v1804
      %1826 = vmatpush.bf16.msra.mxu0 %v1803
      %1827 = vmatmul.bf16.gmra.mxu0 %v1746
      %v1828 = vpop.f32.mrf.mxu0
      %v1829 = vadd.f32 0.0, %v1828
      %v1830 = vpop.f32.mrf.mxu0
      %v1831 = vadd.f32 0.0, %v1830
      %1832 = vmatmul.bf16.gmra.mxu0 %v1747
      %v1833 = vpop.f32.mrf.mxu0
      %v1834 = vadd.f32 0.0, %v1833
      %v1835 = vpop.f32.mrf.mxu0
      %v1836 = vadd.f32 0.0, %v1835
      %1837 = vmatmul.bf16.gmra.mxu0 %v1748
      %v1838 = vpop.f32.mrf.mxu0
      %v1839 = vadd.f32 0.0, %v1838
      %v1840 = vpop.f32.mrf.mxu0
      %v1841 = vadd.f32 0.0, %v1840
      %1842 = vmatmul.bf16.gmra.mxu0 %v1749
      %v1843 = vpop.f32.mrf.mxu0
      %v1844 = vadd.f32 0.0, %v1843
      %v1845 = vpop.f32.mrf.mxu0
      %v1846 = vadd.f32 0.0, %v1845
      %1847 = vmatmul.bf16.gmra.mxu0 %v1750
      %v1848 = vpop.f32.mrf.mxu0
      %v1849 = vadd.f32 0.0, %v1848
      %v1850 = vpop.f32.mrf.mxu0
      %v1851 = vadd.f32 0.0, %v1850
      %1852 = vmatmul.bf16.gmra.mxu0 %v1751
      %v1853 = vpop.f32.mrf.mxu0
      %v1854 = vadd.f32 0.0, %v1853
      %v1855 = vpop.f32.mrf.mxu0
      %v1856 = vadd.f32 0.0, %v1855
      %1857 = vmatmul.bf16.gmra.mxu0 %v1752
      %v1858 = vpop.f32.mrf.mxu0
      %v1859 = vadd.f32 0.0, %v1858
      %v1860 = vpop.f32.mrf.mxu0
      %v1861 = vadd.f32 0.0, %v1860
      %1862 = vmatmul.bf16.gmra.mxu0 %v1753
      %v1863 = vpop.f32.mrf.mxu0
      %v1864 = vadd.f32 0.0, %v1863
      %v1865 = vpop.f32.mrf.mxu0
      %v1866 = vadd.f32 0.0, %v1865
      %1867 = vdwg.mxu0
      %v1868 = vadd.f32 %v1714, %v1829
      %v1869 = vadd.f32 %v1715, %v1831
      %v1870 = vadd.f32 %v1716, %v1834
      %v1871 = vadd.f32 %v1717, %v1836
      %v1872 = vadd.f32 %v1718, %v1839
      %v1873 = vadd.f32 %v1719, %v1841
      %v1874 = vadd.f32 %v1720, %v1844
      %v1875 = vadd.f32 %v1721, %v1846
      %v1876 = vadd.f32 %v1722, %v1849
      %v1877 = vadd.f32 %v1723, %v1851
      %v1878 = vadd.f32 %v1724, %v1854
      %v1879 = vadd.f32 %v1725, %v1856
      %v1880 = vadd.f32 %v1726, %v1859
      %v1881 = vadd.f32 %v1727, %v1861
      %v1882 = vadd.f32 %v1728, %v1864
      %v1883 = vadd.f32 %v1729, %v1866
      %s1884 = scalar_lea.vmem [#allocation2], 64
      %v1885 = vld [vmem:[%s1884 + $0x7] sm:$0xff]
      %v1886 = vld [vmem:[%s1884 + $0xf] sm:$0xff]
      %v1887 = vld [vmem:[%s1884 + $0x27] sm:$0xff]
      %v1888 = vld [vmem:[%s1884 + $0x2f] sm:$0xff]
      %v1889 = vld [vmem:[%s1884 + $0x47] sm:$0xff]
      %v1890 = vld [vmem:[%s1884 + $0x4f] sm:$0xff]
      %v1891 = vld [vmem:[%s1884 + $0x67] sm:$0xff]
      %v1892 = vld [vmem:[%s1884 + $0x6f] sm:$0xff]
      %v1893 = vld [vmem:[%s1884 + $0x87] sm:$0xff]
      %v1894 = vld [vmem:[%s1884 + $0x8f] sm:$0xff]
      %v1895 = vld [vmem:[%s1884 + $0xa7] sm:$0xff]
      %v1896 = vld [vmem:[%s1884 + $0xaf] sm:$0xff]
      %v1897 = vld [vmem:[%s1884 + $0xc7] sm:$0xff]
      %v1898 = vld [vmem:[%s1884 + $0xcf] sm:$0xff]
      %v1899 = vld [vmem:[%s1884 + $0xe7] sm:$0xff]
      %v1900 = vld [vmem:[%s1884 + $0xef] sm:$0xff]
      %v1901 = vpack.c.bf16 %v1886, %v1885
      %v1902 = vpack.c.bf16 %v1888, %v1887
      %v1903 = vpack.c.bf16 %v1890, %v1889
      %v1904 = vpack.c.bf16 %v1892, %v1891
      %v1905 = vpack.c.bf16 %v1894, %v1893
      %v1906 = vpack.c.bf16 %v1896, %v1895
      %v1907 = vpack.c.bf16 %v1898, %v1897
      %v1908 = vpack.c.bf16 %v1900, %v1899
      %s1909 = scalar_lea.vmem %s4, 384
      %v1910 = vld [vmem:[%s1909] sm:$0xf]
      %v1911 = vld [vmem:[%s1909 + $0x4] sm:$0xf]
      %v1912 = vld [vmem:[%s1909 + $0x8] sm:$0xf]
      %v1913 = vld [vmem:[%s1909 + $0xc] sm:$0xf]
      %v1914 = vld [vmem:[%s1909 + $0x10] sm:$0xf]
      %v1915 = vld [vmem:[%s1909 + $0x14] sm:$0xf]
      %v1916 = vld [vmem:[%s1909 + $0x18] sm:$0xf]
      %v1917 = vld [vmem:[%s1909 + $0x1c] sm:$0xf]
      %v1918 = vld [vmem:[%s1909 + $0x20] sm:$0xf]
      %v1919 = vld [vmem:[%s1909 + $0x24] sm:$0xf]
      %v1920 = vld [vmem:[%s1909 + $0x28] sm:$0xf]
      %v1921 = vld [vmem:[%s1909 + $0x2c] sm:$0xf]
      %v1922 = vld [vmem:[%s1909 + $0x30] sm:$0xf]
      %v1923 = vld [vmem:[%s1909 + $0x34] sm:$0xf]
      %v1924 = vld [vmem:[%s1909 + $0x38] sm:$0xf]
      %v1925 = vld [vmem:[%s1909 + $0x3c] sm:$0xf]
      %v1942 = vunpack.c.l.b16 %v1910
      %v1943 = vunpack.c.l.b16 %v1911
      %v1944 = vunpack.c.l.b16 %v1912
      %v1945 = vunpack.c.l.b16 %v1913
      %v1946 = vunpack.c.l.b16 %v1914
      %v1947 = vunpack.c.l.b16 %v1915
      %v1948 = vunpack.c.l.b16 %v1916
      %v1949 = vunpack.c.l.b16 %v1917
      %v1950 = vunpack.c.l.b16 %v1918
      %v1951 = vunpack.c.l.b16 %v1919
      %v1952 = vunpack.c.l.b16 %v1920
      %v1953 = vunpack.c.l.b16 %v1921
      %v1954 = vunpack.c.l.b16 %v1922
      %v1955 = vunpack.c.l.b16 %v1923
      %v1956 = vunpack.c.l.b16 %v1924
      %v1957 = vunpack.c.l.b16 %v1925
      %v1958 = vpack.c.b16 %v1943, %v1942
      %v1959 = vpack.c.b16 %v1945, %v1944
      %v1960 = vpack.c.b16 %v1947, %v1946
      %v1961 = vpack.c.b16 %v1949, %v1948
      %v1962 = vpack.c.b16 %v1951, %v1950
      %v1963 = vpack.c.b16 %v1953, %v1952
      %v1964 = vpack.c.b16 %v1955, %v1954
      %v1965 = vpack.c.b16 %v1957, %v1956
      %1974 = vmatpush.bf16.msra.mxu0 %v1965
      %1975 = vmatpush.bf16.msra.mxu0 %v1964
      %1976 = vmatpush.bf16.msra.mxu0 %v1963
      %1977 = vmatpush.bf16.msra.mxu0 %v1962
      %1978 = vmatpush.bf16.msra.mxu0 %v1961
      %1979 = vmatpush.bf16.msra.mxu0 %v1960
      %1980 = vmatpush.bf16.msra.mxu0 %v1959
      %1981 = vmatpush.bf16.msra.mxu0 %v1958
      %1982 = vmatmul.bf16.gmra.mxu0 %v1901
      %v1983 = vpop.f32.mrf.mxu0
      %v1984 = vadd.f32 0.0, %v1983
      %v1985 = vpop.f32.mrf.mxu0
      %v1986 = vadd.f32 0.0, %v1985
      %1987 = vmatmul.bf16.gmra.mxu0 %v1902
      %v1988 = vpop.f32.mrf.mxu0
      %v1989 = vadd.f32 0.0, %v1988
      %v1990 = vpop.f32.mrf.mxu0
      %v1991 = vadd.f32 0.0, %v1990
      %1992 = vmatmul.bf16.gmra.mxu0 %v1903
      %v1993 = vpop.f32.mrf.mxu0
      %v1994 = vadd.f32 0.0, %v1993
      %v1995 = vpop.f32.mrf.mxu0
      %v1996 = vadd.f32 0.0, %v1995
      %1997 = vmatmul.bf16.gmra.mxu0 %v1904
      %v1998 = vpop.f32.mrf.mxu0
      %v1999 = vadd.f32 0.0, %v1998
      %v2000 = vpop.f32.mrf.mxu0
      %v2001 = vadd.f32 0.0, %v2000
      %2002 = vmatmul.bf16.gmra.mxu0 %v1905
      %v2003 = vpop.f32.mrf.mxu0
      %v2004 = vadd.f32 0.0, %v2003
      %v2005 = vpop.f32.mrf.mxu0
      %v2006 = vadd.f32 0.0, %v2005
      %2007 = vmatmul.bf16.gmra.mxu0 %v1906
      %v2008 = vpop.f32.mrf.mxu0
      %v2009 = vadd.f32 0.0, %v2008
      %v2010 = vpop.f32.mrf.mxu0
      %v2011 = vadd.f32 0.0, %v2010
      %2012 = vmatmul.bf16.gmra.mxu0 %v1907
      %v2013 = vpop.f32.mrf.mxu0
      %v2014 = vadd.f32 0.0, %v2013
      %v2015 = vpop.f32.mrf.mxu0
      %v2016 = vadd.f32 0.0, %v2015
      %2017 = vmatmul.bf16.gmra.mxu0 %v1908
      %v2018 = vpop.f32.mrf.mxu0
      %v2019 = vadd.f32 0.0, %v2018
      %v2020 = vpop.f32.mrf.mxu0
      %v2021 = vadd.f32 0.0, %v2020
      %2022 = vdwg.mxu0
      %v2023 = vadd.f32 %v1868, %v1984
      %v2024 = vadd.f32 %v1869, %v1986
      %v2025 = vadd.f32 %v1870, %v1989
      %v2026 = vadd.f32 %v1871, %v1991
      %v2027 = vadd.f32 %v1872, %v1994
      %v2028 = vadd.f32 %v1873, %v1996
      %v2029 = vadd.f32 %v1874, %v1999
      %v2030 = vadd.f32 %v1875, %v2001
      %v2031 = vadd.f32 %v1876, %v2004
      %v2032 = vadd.f32 %v1877, %v2006
      %v2033 = vadd.f32 %v1878, %v2009
      %v2034 = vadd.f32 %v1879, %v2011
      %v2035 = vadd.f32 %v1880, %v2014
      %v2036 = vadd.f32 %v1881, %v2016
      %v2037 = vadd.f32 %v1882, %v2019
      %v2038 = vadd.f32 %v1883, %v2021
      %v2039 = vld [vmem:[%s1884 + $0x8] sm:$0xff]
      %v2040 = vld [vmem:[%s1884 + $0x10] sm:$0xff]
      %v2041 = vld [vmem:[%s1884 + $0x28] sm:$0xff]
      %v2042 = vld [vmem:[%s1884 + $0x30] sm:$0xff]
      %v2043 = vld [vmem:[%s1884 + $0x48] sm:$0xff]
      %v2044 = vld [vmem:[%s1884 + $0x50] sm:$0xff]
      %v2045 = vld [vmem:[%s1884 + $0x68] sm:$0xff]
      %v2046 = vld [vmem:[%s1884 + $0x70] sm:$0xff]
      %v2047 = vld [vmem:[%s1884 + $0x88] sm:$0xff]
      %v2048 = vld [vmem:[%s1884 + $0x90] sm:$0xff]
      %v2049 = vld [vmem:[%s1884 + $0xa8] sm:$0xff]
      %v2050 = vld [vmem:[%s1884 + $0xb0] sm:$0xff]
      %v2051 = vld [vmem:[%s1884 + $0xc8] sm:$0xff]
      %v2052 = vld [vmem:[%s1884 + $0xd0] sm:$0xff]
      %v2053 = vld [vmem:[%s1884 + $0xe8] sm:$0xff]
      %v2054 = vld [vmem:[%s1884 + $0xf0] sm:$0xff]
      %v2055 = vpack.c.bf16 %v2040, %v2039
      %v2056 = vpack.c.bf16 %v2042, %v2041
      %v2057 = vpack.c.bf16 %v2044, %v2043
      %v2058 = vpack.c.bf16 %v2046, %v2045
      %v2059 = vpack.c.bf16 %v2048, %v2047
      %v2060 = vpack.c.bf16 %v2050, %v2049
      %v2061 = vpack.c.bf16 %v2052, %v2051
      %v2062 = vpack.c.bf16 %v2054, %v2053
      %s2063 = scalar_lea.vmem %s4, 448
      %v2064 = vld [vmem:[%s2063] sm:$0xf]
      %v2065 = vld [vmem:[%s2063 + $0x4] sm:$0xf]
      %v2066 = vld [vmem:[%s2063 + $0x8] sm:$0xf]
      %v2067 = vld [vmem:[%s2063 + $0xc] sm:$0xf]
      %v2068 = vld [vmem:[%s2063 + $0x10] sm:$0xf]
      %v2069 = vld [vmem:[%s2063 + $0x14] sm:$0xf]
      %v2070 = vld [vmem:[%s2063 + $0x18] sm:$0xf]
      %v2071 = vld [vmem:[%s2063 + $0x1c] sm:$0xf]
      %v2072 = vld [vmem:[%s2063 + $0x20] sm:$0xf]
      %v2073 = vld [vmem:[%s2063 + $0x24] sm:$0xf]
      %v2074 = vld [vmem:[%s2063 + $0x28] sm:$0xf]
      %v2075 = vld [vmem:[%s2063 + $0x2c] sm:$0xf]
      %v2076 = vld [vmem:[%s2063 + $0x30] sm:$0xf]
      %v2077 = vld [vmem:[%s2063 + $0x34] sm:$0xf]
      %v2078 = vld [vmem:[%s2063 + $0x38] sm:$0xf]
      %v2079 = vld [vmem:[%s2063 + $0x3c] sm:$0xf]
      %v2096 = vunpack.c.l.b16 %v2064
      %v2097 = vunpack.c.l.b16 %v2065
      %v2098 = vunpack.c.l.b16 %v2066
      %v2099 = vunpack.c.l.b16 %v2067
      %v2100 = vunpack.c.l.b16 %v2068
      %v2101 = vunpack.c.l.b16 %v2069
      %v2102 = vunpack.c.l.b16 %v2070
      %v2103 = vunpack.c.l.b16 %v2071
      %v2104 = vunpack.c.l.b16 %v2072
      %v2105 = vunpack.c.l.b16 %v2073
      %v2106 = vunpack.c.l.b16 %v2074
      %v2107 = vunpack.c.l.b16 %v2075
      %v2108 = vunpack.c.l.b16 %v2076
      %v2109 = vunpack.c.l.b16 %v2077
      %v2110 = vunpack.c.l.b16 %v2078
      %v2111 = vunpack.c.l.b16 %v2079
      %v2112 = vpack.c.b16 %v2097, %v2096
      %v2113 = vpack.c.b16 %v2099, %v2098
      %v2114 = vpack.c.b16 %v2101, %v2100
      %v2115 = vpack.c.b16 %v2103, %v2102
      %v2116 = vpack.c.b16 %v2105, %v2104
      %v2117 = vpack.c.b16 %v2107, %v2106
      %v2118 = vpack.c.b16 %v2109, %v2108
      %v2119 = vpack.c.b16 %v2111, %v2110
      %2128 = vmatpush.bf16.msra.mxu0 %v2119
      %2129 = vmatpush.bf16.msra.mxu0 %v2118
      %2130 = vmatpush.bf16.msra.mxu0 %v2117
      %2131 = vmatpush.bf16.msra.mxu0 %v2116
      %2132 = vmatpush.bf16.msra.mxu0 %v2115
      %2133 = vmatpush.bf16.msra.mxu0 %v2114
      %2134 = vmatpush.bf16.msra.mxu0 %v2113
      %2135 = vmatpush.bf16.msra.mxu0 %v2112
      %2136 = vmatmul.bf16.gmra.mxu0 %v2055
      %v2137 = vpop.f32.mrf.mxu0
      %v2138 = vadd.f32 0.0, %v2137
      %v2139 = vpop.f32.mrf.mxu0
      %v2140 = vadd.f32 0.0, %v2139
      %2141 = vmatmul.bf16.gmra.mxu0 %v2056
      %v2142 = vpop.f32.mrf.mxu0
      %v2143 = vadd.f32 0.0, %v2142
      %v2144 = vpop.f32.mrf.mxu0
      %v2145 = vadd.f32 0.0, %v2144
      %2146 = vmatmul.bf16.gmra.mxu0 %v2057
      %v2147 = vpop.f32.mrf.mxu0
      %v2148 = vadd.f32 0.0, %v2147
      %v2149 = vpop.f32.mrf.mxu0
      %v2150 = vadd.f32 0.0, %v2149
      %2151 = vmatmul.bf16.gmra.mxu0 %v2058
      %v2152 = vpop.f32.mrf.mxu0
      %v2153 = vadd.f32 0.0, %v2152
      %v2154 = vpop.f32.mrf.mxu0
      %v2155 = vadd.f32 0.0, %v2154
      %2156 = vmatmul.bf16.gmra.mxu0 %v2059
      %v2157 = vpop.f32.mrf.mxu0
      %v2158 = vadd.f32 0.0, %v2157
      %v2159 = vpop.f32.mrf.mxu0
      %v2160 = vadd.f32 0.0, %v2159
      %2161 = vmatmul.bf16.gmra.mxu0 %v2060
      %v2162 = vpop.f32.mrf.mxu0
      %v2163 = vadd.f32 0.0, %v2162
      %v2164 = vpop.f32.mrf.mxu0
      %v2165 = vadd.f32 0.0, %v2164
      %2166 = vmatmul.bf16.gmra.mxu0 %v2061
      %v2167 = vpop.f32.mrf.mxu0
      %v2168 = vadd.f32 0.0, %v2167
      %v2169 = vpop.f32.mrf.mxu0
      %v2170 = vadd.f32 0.0, %v2169
      %2171 = vmatmul.bf16.gmra.mxu0 %v2062
      %v2172 = vpop.f32.mrf.mxu0
      %v2173 = vadd.f32 0.0, %v2172
      %v2174 = vpop.f32.mrf.mxu0
      %v2175 = vadd.f32 0.0, %v2174
      %2176 = vdwg.mxu0
      %v2177 = vadd.f32 %v2023, %v2138
      %v2178 = vadd.f32 %v2024, %v2140
      %v2179 = vadd.f32 %v2025, %v2143
      %v2180 = vadd.f32 %v2026, %v2145
      %v2181 = vadd.f32 %v2027, %v2148
      %v2182 = vadd.f32 %v2028, %v2150
      %v2183 = vadd.f32 %v2029, %v2153
      %v2184 = vadd.f32 %v2030, %v2155
      %v2185 = vadd.f32 %v2031, %v2158
      %v2186 = vadd.f32 %v2032, %v2160
      %v2187 = vadd.f32 %v2033, %v2163
      %v2188 = vadd.f32 %v2034, %v2165
      %v2189 = vadd.f32 %v2035, %v2168
      %v2190 = vadd.f32 %v2036, %v2170
      %v2191 = vadd.f32 %v2037, %v2173
      %v2192 = vadd.f32 %v2038, %v2175
      %v2193 = vld [vmem:[%s1884 + $0x9] sm:$0xff]
      %v2194 = vld [vmem:[%s1884 + $0x11] sm:$0xff]
      %v2195 = vld [vmem:[%s1884 + $0x29] sm:$0xff]
      %v2196 = vld [vmem:[%s1884 + $0x31] sm:$0xff]
      %v2197 = vld [vmem:[%s1884 + $0x49] sm:$0xff]
      %v2198 = vld [vmem:[%s1884 + $0x51] sm:$0xff]
      %v2199 = vld [vmem:[%s1884 + $0x69] sm:$0xff]
      %v2200 = vld [vmem:[%s1884 + $0x71] sm:$0xff]
      %v2201 = vld [vmem:[%s1884 + $0x89] sm:$0xff]
      %v2202 = vld [vmem:[%s1884 + $0x91] sm:$0xff]
      %v2203 = vld [vmem:[%s1884 + $0xa9] sm:$0xff]
      %v2204 = vld [vmem:[%s1884 + $0xb1] sm:$0xff]
      %v2205 = vld [vmem:[%s1884 + $0xc9] sm:$0xff]
      %v2206 = vld [vmem:[%s1884 + $0xd1] sm:$0xff]
      %v2207 = vld [vmem:[%s1884 + $0xe9] sm:$0xff]
      %v2208 = vld [vmem:[%s1884 + $0xf1] sm:$0xff]
      %v2209 = vpack.c.bf16 %v2194, %v2193
      %v2210 = vpack.c.bf16 %v2196, %v2195
      %v2211 = vpack.c.bf16 %v2198, %v2197
      %v2212 = vpack.c.bf16 %v2200, %v2199
      %v2213 = vpack.c.bf16 %v2202, %v2201
      %v2214 = vpack.c.bf16 %v2204, %v2203
      %v2215 = vpack.c.bf16 %v2206, %v2205
      %v2216 = vpack.c.bf16 %v2208, %v2207
      %s2217 = scalar_lea.vmem %s4, 512
      %v2218 = vld [vmem:[%s2217] sm:$0xf]
      %v2219 = vld [vmem:[%s2217 + $0x4] sm:$0xf]
      %v2220 = vld [vmem:[%s2217 + $0x8] sm:$0xf]
      %v2221 = vld [vmem:[%s2217 + $0xc] sm:$0xf]
      %v2222 = vld [vmem:[%s2217 + $0x10] sm:$0xf]
      %v2223 = vld [vmem:[%s2217 + $0x14] sm:$0xf]
      %v2224 = vld [vmem:[%s2217 + $0x18] sm:$0xf]
      %v2225 = vld [vmem:[%s2217 + $0x1c] sm:$0xf]
      %v2226 = vld [vmem:[%s2217 + $0x20] sm:$0xf]
      %v2227 = vld [vmem:[%s2217 + $0x24] sm:$0xf]
      %v2228 = vld [vmem:[%s2217 + $0x28] sm:$0xf]
      %v2229 = vld [vmem:[%s2217 + $0x2c] sm:$0xf]
      %v2230 = vld [vmem:[%s2217 + $0x30] sm:$0xf]
      %v2231 = vld [vmem:[%s2217 + $0x34] sm:$0xf]
      %v2232 = vld [vmem:[%s2217 + $0x38] sm:$0xf]
      %v2233 = vld [vmem:[%s2217 + $0x3c] sm:$0xf]
      %v2250 = vunpack.c.l.b16 %v2218
      %v2251 = vunpack.c.l.b16 %v2219
      %v2252 = vunpack.c.l.b16 %v2220
      %v2253 = vunpack.c.l.b16 %v2221
      %v2254 = vunpack.c.l.b16 %v2222
      %v2255 = vunpack.c.l.b16 %v2223
      %v2256 = vunpack.c.l.b16 %v2224
      %v2257 = vunpack.c.l.b16 %v2225
      %v2258 = vunpack.c.l.b16 %v2226
      %v2259 = vunpack.c.l.b16 %v2227
      %v2260 = vunpack.c.l.b16 %v2228
      %v2261 = vunpack.c.l.b16 %v2229
      %v2262 = vunpack.c.l.b16 %v2230
      %v2263 = vunpack.c.l.b16 %v2231
      %v2264 = vunpack.c.l.b16 %v2232
      %v2265 = vunpack.c.l.b16 %v2233
      %v2266 = vpack.c.b16 %v2251, %v2250
      %v2267 = vpack.c.b16 %v2253, %v2252
      %v2268 = vpack.c.b16 %v2255, %v2254
      %v2269 = vpack.c.b16 %v2257, %v2256
      %v2270 = vpack.c.b16 %v2259, %v2258
      %v2271 = vpack.c.b16 %v2261, %v2260
      %v2272 = vpack.c.b16 %v2263, %v2262
      %v2273 = vpack.c.b16 %v2265, %v2264
      %2282 = vmatpush.bf16.msra.mxu0 %v2273
      %2283 = vmatpush.bf16.msra.mxu0 %v2272
      %2284 = vmatpush.bf16.msra.mxu0 %v2271
      %2285 = vmatpush.bf16.msra.mxu0 %v2270
      %2286 = vmatpush.bf16.msra.mxu0 %v2269
      %2287 = vmatpush.bf16.msra.mxu0 %v2268
      %2288 = vmatpush.bf16.msra.mxu0 %v2267
      %2289 = vmatpush.bf16.msra.mxu0 %v2266
      %2290 = vmatmul.bf16.gmra.mxu0 %v2209
      %v2291 = vpop.f32.mrf.mxu0
      %v2292 = vadd.f32 0.0, %v2291
      %v2293 = vpop.f32.mrf.mxu0
      %v2294 = vadd.f32 0.0, %v2293
      %2295 = vmatmul.bf16.gmra.mxu0 %v2210
      %v2296 = vpop.f32.mrf.mxu0
      %v2297 = vadd.f32 0.0, %v2296
      %v2298 = vpop.f32.mrf.mxu0
      %v2299 = vadd.f32 0.0, %v2298
      %2300 = vmatmul.bf16.gmra.mxu0 %v2211
      %v2301 = vpop.f32.mrf.mxu0
      %v2302 = vadd.f32 0.0, %v2301
      %v2303 = vpop.f32.mrf.mxu0
      %v2304 = vadd.f32 0.0, %v2303
      %2305 = vmatmul.bf16.gmra.mxu0 %v2212
      %v2306 = vpop.f32.mrf.mxu0
      %v2307 = vadd.f32 0.0, %v2306
      %v2308 = vpop.f32.mrf.mxu0
      %v2309 = vadd.f32 0.0, %v2308
      %2310 = vmatmul.bf16.gmra.mxu0 %v2213
      %v2311 = vpop.f32.mrf.mxu0
      %v2312 = vadd.f32 0.0, %v2311
      %v2313 = vpop.f32.mrf.mxu0
      %v2314 = vadd.f32 0.0, %v2313
      %2315 = vmatmul.bf16.gmra.mxu0 %v2214
      %v2316 = vpop.f32.mrf.mxu0
      %v2317 = vadd.f32 0.0, %v2316
      %v2318 = vpop.f32.mrf.mxu0
      %v2319 = vadd.f32 0.0, %v2318
      %2320 = vmatmul.bf16.gmra.mxu0 %v2215
      %v2321 = vpop.f32.mrf.mxu0
      %v2322 = vadd.f32 0.0, %v2321
      %v2323 = vpop.f32.mrf.mxu0
      %v2324 = vadd.f32 0.0, %v2323
      %2325 = vmatmul.bf16.gmra.mxu0 %v2216
      %v2326 = vpop.f32.mrf.mxu0
      %v2327 = vadd.f32 0.0, %v2326
      %v2328 = vpop.f32.mrf.mxu0
      %v2329 = vadd.f32 0.0, %v2328
      %2330 = vdwg.mxu0
      %v2331 = vadd.f32 %v2177, %v2292
      %v2332 = vadd.f32 %v2178, %v2294
      %v2333 = vadd.f32 %v2179, %v2297
      %v2334 = vadd.f32 %v2180, %v2299
      %v2335 = vadd.f32 %v2181, %v2302
      %v2336 = vadd.f32 %v2182, %v2304
      %v2337 = vadd.f32 %v2183, %v2307
      %v2338 = vadd.f32 %v2184, %v2309
      %v2339 = vadd.f32 %v2185, %v2312
      %v2340 = vadd.f32 %v2186, %v2314
      %v2341 = vadd.f32 %v2187, %v2317
      %v2342 = vadd.f32 %v2188, %v2319
      %v2343 = vadd.f32 %v2189, %v2322
      %v2344 = vadd.f32 %v2190, %v2324
      %v2345 = vadd.f32 %v2191, %v2327
      %v2346 = vadd.f32 %v2192, %v2329
      %v2347 = vsub.f32 0.0, %v2331
      %v2348 = vsub.f32 0.0, %v2332
      %v2349 = vsub.f32 0.0, %v2333
      %v2350 = vsub.f32 0.0, %v2334
      %v2351 = vsub.f32 0.0, %v2335
      %v2352 = vsub.f32 0.0, %v2336
      %v2353 = vsub.f32 0.0, %v2337
      %v2354 = vsub.f32 0.0, %v2338
      %v2355 = vsub.f32 0.0, %v2339
      %v2356 = vsub.f32 0.0, %v2340
      %v2357 = vsub.f32 0.0, %v2341
      %v2358 = vsub.f32 0.0, %v2342
      %v2359 = vsub.f32 0.0, %v2343
      %v2360 = vsub.f32 0.0, %v2344
      %v2361 = vsub.f32 0.0, %v2345
      %v2362 = vsub.f32 0.0, %v2346
      %v2363 = vmul.f32 %v2347, 1.442695
      %v2364 = vpow.pop %v2363
      %v2365 = vmul.f32 %v2348, 1.442695
      %v2366 = vpow.pop %v2365
      %v2367 = vmul.f32 %v2349, 1.442695
      %v2368 = vpow.pop %v2367
      %v2369 = vmul.f32 %v2350, 1.442695
      %v2370 = vpow.pop %v2369
      %v2371 = vmul.f32 %v2351, 1.442695
      %v2372 = vpow.pop %v2371
      %v2373 = vmul.f32 %v2352, 1.442695
      %v2374 = vpow.pop %v2373
      %v2375 = vmul.f32 %v2353, 1.442695
      %v2376 = vpow.pop %v2375
      %v2377 = vmul.f32 %v2354, 1.442695
      %v2378 = vpow.pop %v2377
      %v2379 = vmul.f32 %v2355, 1.442695
      %v2380 = vpow.pop %v2379
      %v2381 = vmul.f32 %v2356, 1.442695
      %v2382 = vpow.pop %v2381
      %v2383 = vmul.f32 %v2357, 1.442695
      %v2384 = vpow.pop %v2383
      %v2385 = vmul.f32 %v2358, 1.442695
      %v2386 = vpow.pop %v2385
      %v2387 = vmul.f32 %v2359, 1.442695
      %v2388 = vpow.pop %v2387
      %v2389 = vmul.f32 %v2360, 1.442695
      %v2390 = vpow.pop %v2389
      %v2391 = vmul.f32 %v2361, 1.442695
      %v2392 = vpow.pop %v2391
      %v2393 = vmul.f32 %v2362, 1.442695
      %v2394 = vpow.pop %v2393
      %v2395 = vadd.f32 %v2364, 1.0
      %v2396 = vadd.f32 %v2366, 1.0
      %v2397 = vadd.f32 %v2368, 1.0
      %v2398 = vadd.f32 %v2370, 1.0
      %v2399 = vadd.f32 %v2372, 1.0
      %v2400 = vadd.f32 %v2374, 1.0
      %v2401 = vadd.f32 %v2376, 1.0
      %v2402 = vadd.f32 %v2378, 1.0
      %v2403 = vadd.f32 %v2380, 1.0
      %v2404 = vadd.f32 %v2382, 1.0
      %v2405 = vadd.f32 %v2384, 1.0
      %v2406 = vadd.f32 %v2386, 1.0
      %v2407 = vadd.f32 %v2388, 1.0
      %v2408 = vadd.f32 %v2390, 1.0
      %v2409 = vadd.f32 %v2392, 1.0
      %v2410 = vadd.f32 %v2394, 1.0
      %v2411 = vrcp.pop %v2395
      %v2412 = vrcp.pop %v2396
      %v2413 = vrcp.pop %v2397
      %v2414 = vrcp.pop %v2398
      %v2415 = vrcp.pop %v2399
      %v2416 = vrcp.pop %v2400
      %v2417 = vrcp.pop %v2401
      %v2418 = vrcp.pop %v2402
      %v2419 = vrcp.pop %v2403
      %v2420 = vrcp.pop %v2404
      %v2421 = vrcp.pop %v2405
      %v2422 = vrcp.pop %v2406
      %v2423 = vrcp.pop %v2407
      %v2424 = vrcp.pop %v2408
      %v2425 = vrcp.pop %v2409
      %v2426 = vrcp.pop %v2410
      %v2427 = vmul.f32 %v2331, %v2411
      %v2428 = vmul.f32 %v2332, %v2412
      %v2429 = vmul.f32 %v2333, %v2413
      %v2430 = vmul.f32 %v2334, %v2414
      %v2431 = vmul.f32 %v2335, %v2415
      %v2432 = vmul.f32 %v2336, %v2416
      %v2433 = vmul.f32 %v2337, %v2417
      %v2434 = vmul.f32 %v2338, %v2418
      %v2435 = vmul.f32 %v2339, %v2419
      %v2436 = vmul.f32 %v2340, %v2420
      %v2437 = vmul.f32 %v2341, %v2421
      %v2438 = vmul.f32 %v2342, %v2422
      %v2439 = vmul.f32 %v2343, %v2423
      %v2440 = vmul.f32 %v2344, %v2424
      %v2441 = vmul.f32 %v2345, %v2425
      %v2442 = vmul.f32 %v2346, %v2426
      %v2443 = vadd.f32 %v2427, %v668
      %v2444 = vadd.f32 %v2428, %v669
      %v2445 = vadd.f32 %v2429, %v670
      %v2446 = vadd.f32 %v2430, %v671
      %v2447 = vadd.f32 %v2431, %v672
      %v2448 = vadd.f32 %v2432, %v673
      %v2449 = vadd.f32 %v2433, %v674
      %v2450 = vadd.f32 %v2434, %v675
      %v2451 = vadd.f32 %v2435, %v676
      %v2452 = vadd.f32 %v2436, %v677
      %v2453 = vadd.f32 %v2437, %v678
      %v2454 = vadd.f32 %v2438, %v679
      %v2455 = vadd.f32 %v2439, %v680
      %v2456 = vadd.f32 %v2440, %v681
      %v2457 = vadd.f32 %v2441, %v682
      %v2458 = vadd.f32 %v2442, %v683
      %v2459 = vpack.c.bf16 %v2444, %v2443
      %v2460 = vpack.c.bf16 %v2446, %v2445
      %v2461 = vpack.c.bf16 %v2448, %v2447
      %v2462 = vpack.c.bf16 %v2450, %v2449
      %v2463 = vpack.c.bf16 %v2452, %v2451
      %v2464 = vpack.c.bf16 %v2454, %v2453
      %v2465 = vpack.c.bf16 %v2456, %v2455
      %v2466 = vpack.c.bf16 %v2458, %v2457
      %v2467 = vld [vmem:[%s5] sm:$0xf]
      %v2468 = vld [vmem:[%s5 + $0x4] sm:$0xf]
      %v2469 = vld [vmem:[%s5 + $0x8] sm:$0xf]
      %v2470 = vld [vmem:[%s5 + $0xc] sm:$0xf]
      %v2471 = vld [vmem:[%s5 + $0x10] sm:$0xf]
      %v2472 = vld [vmem:[%s5 + $0x14] sm:$0xf]
      %v2473 = vld [vmem:[%s5 + $0x18] sm:$0xf]
      %v2474 = vld [vmem:[%s5 + $0x1c] sm:$0xf]
      %v2475 = vld [vmem:[%s5 + $0x20] sm:$0xf]
      %v2476 = vld [vmem:[%s5 + $0x24] sm:$0xf]
      %v2477 = vld [vmem:[%s5 + $0x28] sm:$0xf]
      %v2478 = vld [vmem:[%s5 + $0x2c] sm:$0xf]
      %v2479 = vld [vmem:[%s5 + $0x30] sm:$0xf]
      %v2480 = vld [vmem:[%s5 + $0x34] sm:$0xf]
      %v2481 = vld [vmem:[%s5 + $0x38] sm:$0xf]
      %v2482 = vld [vmem:[%s5 + $0x3c] sm:$0xf]
      %v2483 = vld [vmem:[%s6] sm:$0x1]
      %v2485 = vperm.slane %v2483, 0
      %v2503 = vunpack.c.l.b16 %v2467
      %v2504 = vunpack.c.l.b16 %v2468
      %v2505 = vunpack.c.l.b16 %v2469
      %v2506 = vunpack.c.l.b16 %v2470
      %v2507 = vunpack.c.l.b16 %v2471
      %v2508 = vunpack.c.l.b16 %v2472
      %v2509 = vunpack.c.l.b16 %v2473
      %v2510 = vunpack.c.l.b16 %v2474
      %v2511 = vunpack.c.l.b16 %v2475
      %v2512 = vunpack.c.l.b16 %v2476
      %v2513 = vunpack.c.l.b16 %v2477
      %v2514 = vunpack.c.l.b16 %v2478
      %v2515 = vunpack.c.l.b16 %v2479
      %v2516 = vunpack.c.l.b16 %v2480
      %v2517 = vunpack.c.l.b16 %v2481
      %v2518 = vunpack.c.l.b16 %v2482
      %v2519 = vpack.c.b16 %v2504, %v2503
      %v2520 = vpack.c.b16 %v2506, %v2505
      %v2521 = vpack.c.b16 %v2508, %v2507
      %v2522 = vpack.c.b16 %v2510, %v2509
      %v2523 = vpack.c.b16 %v2512, %v2511
      %v2524 = vpack.c.b16 %v2514, %v2513
      %v2525 = vpack.c.b16 %v2516, %v2515
      %v2526 = vpack.c.b16 %v2518, %v2517
      %2535 = vmatpush.bf16.msra.mxu0 %v2526
      %2536 = vmatpush.bf16.msra.mxu0 %v2525
      %2537 = vmatpush.bf16.msra.mxu0 %v2524
      %2538 = vmatpush.bf16.msra.mxu0 %v2523
      %2539 = vmatpush.bf16.msra.mxu0 %v2522
      %2540 = vmatpush.bf16.msra.mxu0 %v2521
      %2541 = vmatpush.bf16.msra.mxu0 %v2520
      %2542 = vmatpush.bf16.msra.mxu0 %v2519
      %2543 = vmatmul.bf16.gmra.mxu0 %v2459
      %v2544 = vpop.f32.mrf.mxu0
      %v2545 = vadd.f32 %v2485, %v2544
      %v2546 = vpop.f32.mrf.mxu0
      %v2547 = vadd.f32 %v2485, %v2546
      %2548 = vmatmul.bf16.gmra.mxu0 %v2460
      %v2549 = vpop.f32.mrf.mxu0
      %v2550 = vadd.f32 %v2485, %v2549
      %v2551 = vpop.f32.mrf.mxu0
      %v2552 = vadd.f32 %v2485, %v2551
      %2553 = vmatmul.bf16.gmra.mxu0 %v2461
      %v2554 = vpop.f32.mrf.mxu0
      %v2555 = vadd.f32 %v2485, %v2554
      %v2556 = vpop.f32.mrf.mxu0
      %v2557 = vadd.f32 %v2485, %v2556
      %2558 = vmatmul.bf16.gmra.mxu0 %v2462
      %v2559 = vpop.f32.mrf.mxu0
      %v2560 = vadd.f32 %v2485, %v2559
      %v2561 = vpop.f32.mrf.mxu0
      %v2562 = vadd.f32 %v2485, %v2561
      %2563 = vmatmul.bf16.gmra.mxu0 %v2463
      %v2564 = vpop.f32.mrf.mxu0
      %v2565 = vadd.f32 %v2485, %v2564
      %v2566 = vpop.f32.mrf.mxu0
      %v2567 = vadd.f32 %v2485, %v2566
      %2568 = vmatmul.bf16.gmra.mxu0 %v2464
      %v2569 = vpop.f32.mrf.mxu0
      %v2570 = vadd.f32 %v2485, %v2569
      %v2571 = vpop.f32.mrf.mxu0
      %v2572 = vadd.f32 %v2485, %v2571
      %2573 = vmatmul.bf16.gmra.mxu0 %v2465
      %v2574 = vpop.f32.mrf.mxu0
      %v2575 = vadd.f32 %v2485, %v2574
      %v2576 = vpop.f32.mrf.mxu0
      %v2577 = vadd.f32 %v2485, %v2576
      %2578 = vmatmul.bf16.gmra.mxu0 %v2466
      %v2579 = vpop.f32.mrf.mxu0
      %v2580 = vadd.f32 %v2485, %v2579
      %v2581 = vpop.f32.mrf.mxu0
      %v2582 = vadd.f32 %v2485, %v2581
      %2583 = vdwg.mxu0
      %vm2584 = vcmp.ge.f32.partialorder %v2545, 0.0
      %vm2585 = vcmp.ge.f32.partialorder %v2547, 0.0
      %vm2586 = vcmp.ge.f32.partialorder %v2550, 0.0
      %vm2587 = vcmp.ge.f32.partialorder %v2552, 0.0
      %vm2588 = vcmp.ge.f32.partialorder %v2555, 0.0
      %vm2589 = vcmp.ge.f32.partialorder %v2557, 0.0
      %vm2590 = vcmp.ge.f32.partialorder %v2560, 0.0
      %vm2591 = vcmp.ge.f32.partialorder %v2562, 0.0
      %vm2592 = vcmp.ge.f32.partialorder %v2565, 0.0
      %vm2593 = vcmp.ge.f32.partialorder %v2567, 0.0
      %vm2594 = vcmp.ge.f32.partialorder %v2570, 0.0
      %vm2595 = vcmp.ge.f32.partialorder %v2572, 0.0
      %vm2596 = vcmp.ge.f32.partialorder %v2575, 0.0
      %vm2597 = vcmp.ge.f32.partialorder %v2577, 0.0
      %vm2598 = vcmp.ge.f32.partialorder %v2580, 0.0
      %vm2599 = vcmp.ge.f32.partialorder %v2582, 0.0
      %v2600 = vmul.f32 %v2545, 0.1
      %v2601 = vmul.f32 %v2547, 0.1
      %v2602 = vmul.f32 %v2550, 0.1
      %v2603 = vmul.f32 %v2552, 0.1
      %v2604 = vmul.f32 %v2555, 0.1
      %v2605 = vmul.f32 %v2557, 0.1
      %v2606 = vmul.f32 %v2560, 0.1
      %v2607 = vmul.f32 %v2562, 0.1
      %v2608 = vmul.f32 %v2565, 0.1
      %v2609 = vmul.f32 %v2567, 0.1
      %v2610 = vmul.f32 %v2570, 0.1
      %v2611 = vmul.f32 %v2572, 0.1
      %v2612 = vmul.f32 %v2575, 0.1
      %v2613 = vmul.f32 %v2577, 0.1
      %v2614 = vmul.f32 %v2580, 0.1
      %v2615 = vmul.f32 %v2582, 0.1
      %v2616 = vsel %vm2584, %v2545, %v2600
      %v2617 = vsel %vm2585, %v2547, %v2601
      %v2618 = vsel %vm2586, %v2550, %v2602
      %v2619 = vsel %vm2587, %v2552, %v2603
      %v2620 = vsel %vm2588, %v2555, %v2604
      %v2621 = vsel %vm2589, %v2557, %v2605
      %v2622 = vsel %vm2590, %v2560, %v2606
      %v2623 = vsel %vm2591, %v2562, %v2607
      %v2624 = vsel %vm2592, %v2565, %v2608
      %v2625 = vsel %vm2593, %v2567, %v2609
      %v2626 = vsel %vm2594, %v2570, %v2610
      %v2627 = vsel %vm2595, %v2572, %v2611
      %v2628 = vsel %vm2596, %v2575, %v2612
      %v2629 = vsel %vm2597, %v2577, %v2613
      %v2630 = vsel %vm2598, %v2580, %v2614
      %v2631 = vsel %vm2599, %v2582, %v2615
      %v2632 = vld [vmem:[%s7] sm:$0x1]
      %v2634 = vperm.slane %v2632, 0
      %v2636 = vadd.f32 %v620, %v2634
      %v2637 = vadd.f32 %v622, %v2634
      %v2638 = vadd.f32 %v625, %v2634
      %v2639 = vadd.f32 %v627, %v2634
      %v2640 = vadd.f32 %v630, %v2634
      %v2641 = vadd.f32 %v632, %v2634
      %v2642 = vadd.f32 %v635, %v2634
      %v2643 = vadd.f32 %v637, %v2634
      %v2644 = vadd.f32 %v640, %v2634
      %v2645 = vadd.f32 %v642, %v2634
      %v2646 = vadd.f32 %v645, %v2634
      %v2647 = vadd.f32 %v647, %v2634
      %v2648 = vadd.f32 %v650, %v2634
      %v2649 = vadd.f32 %v652, %v2634
      %v2650 = vadd.f32 %v655, %v2634
      %v2651 = vadd.f32 %v657, %v2634
      %vm2652 = vcmp.ge.f32.partialorder %v2636, 0.0
      %vm2653 = vcmp.ge.f32.partialorder %v2637, 0.0
      %vm2654 = vcmp.ge.f32.partialorder %v2638, 0.0
      %vm2655 = vcmp.ge.f32.partialorder %v2639, 0.0
      %vm2656 = vcmp.ge.f32.partialorder %v2640, 0.0
      %vm2657 = vcmp.ge.f32.partialorder %v2641, 0.0
      %vm2658 = vcmp.ge.f32.partialorder %v2642, 0.0
      %vm2659 = vcmp.ge.f32.partialorder %v2643, 0.0
      %vm2660 = vcmp.ge.f32.partialorder %v2644, 0.0
      %vm2661 = vcmp.ge.f32.partialorder %v2645, 0.0
      %vm2662 = vcmp.ge.f32.partialorder %v2646, 0.0
      %vm2663 = vcmp.ge.f32.partialorder %v2647, 0.0
      %vm2664 = vcmp.ge.f32.partialorder %v2648, 0.0
      %vm2665 = vcmp.ge.f32.partialorder %v2649, 0.0
      %vm2666 = vcmp.ge.f32.partialorder %v2650, 0.0
      %vm2667 = vcmp.ge.f32.partialorder %v2651, 0.0
      %v2668 = vmul.f32 %v2636, 0.1
      %v2669 = vmul.f32 %v2637, 0.1
      %v2670 = vmul.f32 %v2638, 0.1
      %v2671 = vmul.f32 %v2639, 0.1
      %v2672 = vmul.f32 %v2640, 0.1
      %v2673 = vmul.f32 %v2641, 0.1
      %v2674 = vmul.f32 %v2642, 0.1
      %v2675 = vmul.f32 %v2643, 0.1
      %v2676 = vmul.f32 %v2644, 0.1
      %v2677 = vmul.f32 %v2645, 0.1
      %v2678 = vmul.f32 %v2646, 0.1
      %v2679 = vmul.f32 %v2647, 0.1
      %v2680 = vmul.f32 %v2648, 0.1
      %v2681 = vmul.f32 %v2649, 0.1
      %v2682 = vmul.f32 %v2650, 0.1
      %v2683 = vmul.f32 %v2651, 0.1
      %v2684 = vsel %vm2652, %v2636, %v2668
      %v2685 = vsel %vm2653, %v2637, %v2669
      %v2686 = vsel %vm2654, %v2638, %v2670
      %v2687 = vsel %vm2655, %v2639, %v2671
      %v2688 = vsel %vm2656, %v2640, %v2672
      %v2689 = vsel %vm2657, %v2641, %v2673
      %v2690 = vsel %vm2658, %v2642, %v2674
      %v2691 = vsel %vm2659, %v2643, %v2675
      %v2692 = vsel %vm2660, %v2644, %v2676
      %v2693 = vsel %vm2661, %v2645, %v2677
      %v2694 = vsel %vm2662, %v2646, %v2678
      %v2695 = vsel %vm2663, %v2647, %v2679
      %v2696 = vsel %vm2664, %v2648, %v2680
      %v2697 = vsel %vm2665, %v2649, %v2681
      %v2698 = vsel %vm2666, %v2650, %v2682
      %v2699 = vsel %vm2667, %v2651, %v2683
      %v2700 = vpack.c.bf16 %v2617, %v2616
      %v2701 = vpack.c.bf16 %v2619, %v2618
      %v2702 = vpack.c.bf16 %v2621, %v2620
      %v2703 = vpack.c.bf16 %v2623, %v2622
      %v2704 = vpack.c.bf16 %v2625, %v2624
      %v2705 = vpack.c.bf16 %v2627, %v2626
      %v2706 = vpack.c.bf16 %v2629, %v2628
      %v2707 = vpack.c.bf16 %v2631, %v2630
      %v2708 = vld [vmem:[%s8] sm:$0xf]
      %v2709 = vld [vmem:[%s8 + $0x4] sm:$0xf]
      %v2710 = vld [vmem:[%s8 + $0x8] sm:$0xf]
      %v2711 = vld [vmem:[%s8 + $0xc] sm:$0xf]
      %v2712 = vld [vmem:[%s8 + $0x10] sm:$0xf]
      %v2713 = vld [vmem:[%s8 + $0x14] sm:$0xf]
      %v2714 = vld [vmem:[%s8 + $0x18] sm:$0xf]
      %v2715 = vld [vmem:[%s8 + $0x1c] sm:$0xf]
      %v2716 = vld [vmem:[%s8 + $0x20] sm:$0xf]
      %v2717 = vld [vmem:[%s8 + $0x24] sm:$0xf]
      %v2718 = vld [vmem:[%s8 + $0x28] sm:$0xf]
      %v2719 = vld [vmem:[%s8 + $0x2c] sm:$0xf]
      %v2720 = vld [vmem:[%s8 + $0x30] sm:$0xf]
      %v2721 = vld [vmem:[%s8 + $0x34] sm:$0xf]
      %v2722 = vld [vmem:[%s8 + $0x38] sm:$0xf]
      %v2723 = vld [vmem:[%s8 + $0x3c] sm:$0xf]
      %v2724 = vpack.c.bf16 %v2685, %v2684
      %v2725 = vpack.c.bf16 %v2687, %v2686
      %v2726 = vpack.c.bf16 %v2689, %v2688
      %v2727 = vpack.c.bf16 %v2691, %v2690
      %v2728 = vpack.c.bf16 %v2693, %v2692
      %v2729 = vpack.c.bf16 %v2695, %v2694
      %v2730 = vpack.c.bf16 %v2697, %v2696
      %v2731 = vpack.c.bf16 %v2699, %v2698
      %s2732 = scalar_lea.vmem %s8, 64
      %v2733 = vld [vmem:[%s2732] sm:$0xf]
      %v2734 = vld [vmem:[%s2732 + $0x4] sm:$0xf]
      %v2735 = vld [vmem:[%s2732 + $0x8] sm:$0xf]
      %v2736 = vld [vmem:[%s2732 + $0xc] sm:$0xf]
      %v2737 = vld [vmem:[%s2732 + $0x10] sm:$0xf]
      %v2738 = vld [vmem:[%s2732 + $0x14] sm:$0xf]
      %v2739 = vld [vmem:[%s2732 + $0x18] sm:$0xf]
      %v2740 = vld [vmem:[%s2732 + $0x1c] sm:$0xf]
      %v2741 = vld [vmem:[%s2732 + $0x20] sm:$0xf]
      %v2742 = vld [vmem:[%s2732 + $0x24] sm:$0xf]
      %v2743 = vld [vmem:[%s2732 + $0x28] sm:$0xf]
      %v2744 = vld [vmem:[%s2732 + $0x2c] sm:$0xf]
      %v2745 = vld [vmem:[%s2732 + $0x30] sm:$0xf]
      %v2746 = vld [vmem:[%s2732 + $0x34] sm:$0xf]
      %v2747 = vld [vmem:[%s2732 + $0x38] sm:$0xf]
      %v2748 = vld [vmem:[%s2732 + $0x3c] sm:$0xf]
      %v2765 = vunpack.c.l.b16 %v2733
      %v2766 = vunpack.c.l.b16 %v2734
      %v2767 = vunpack.c.l.b16 %v2735
      %v2768 = vunpack.c.l.b16 %v2736
      %v2769 = vunpack.c.l.b16 %v2737
      %v2770 = vunpack.c.l.b16 %v2738
      %v2771 = vunpack.c.l.b16 %v2739
      %v2772 = vunpack.c.l.b16 %v2740
      %v2773 = vunpack.c.l.b16 %v2741
      %v2774 = vunpack.c.l.b16 %v2742
      %v2775 = vunpack.c.l.b16 %v2743
      %v2776 = vunpack.c.l.b16 %v2744
      %v2777 = vunpack.c.l.b16 %v2745
      %v2778 = vunpack.c.l.b16 %v2746
      %v2779 = vunpack.c.l.b16 %v2747
      %v2780 = vunpack.c.l.b16 %v2748
      %v2781 = vpack.c.b16 %v2766, %v2765
      %v2782 = vpack.c.b16 %v2768, %v2767
      %v2783 = vpack.c.b16 %v2770, %v2769
      %v2784 = vpack.c.b16 %v2772, %v2771
      %v2785 = vpack.c.b16 %v2774, %v2773
      %v2786 = vpack.c.b16 %v2776, %v2775
      %v2787 = vpack.c.b16 %v2778, %v2777
      %v2788 = vpack.c.b16 %v2780, %v2779
      %2797 = vmatpush.bf16.msra.mxu0 %v2788
      %2798 = vmatpush.bf16.msra.mxu0 %v2787
      %2799 = vmatpush.bf16.msra.mxu0 %v2786
      %2800 = vmatpush.bf16.msra.mxu0 %v2785
      %2801 = vmatpush.bf16.msra.mxu0 %v2784
      %2802 = vmatpush.bf16.msra.mxu0 %v2783
      %2803 = vmatpush.bf16.msra.mxu0 %v2782
      %2804 = vmatpush.bf16.msra.mxu0 %v2781
      %2805 = vmatmul.bf16.gmra.mxu0 %v2724
      %v2806 = vpop.f32.mrf.mxu0
      %v2807 = vadd.f32 0.0, %v2806
      %v2808 = vpop.f32.mrf.mxu0
      %v2809 = vadd.f32 0.0, %v2808
      %2810 = vmatmul.bf16.gmra.mxu0 %v2725
      %v2811 = vpop.f32.mrf.mxu0
      %v2812 = vadd.f32 0.0, %v2811
      %v2813 = vpop.f32.mrf.mxu0
      %v2814 = vadd.f32 0.0, %v2813
      %2815 = vmatmul.bf16.gmra.mxu0 %v2726
      %v2816 = vpop.f32.mrf.mxu0
      %v2817 = vadd.f32 0.0, %v2816
      %v2818 = vpop.f32.mrf.mxu0
      %v2819 = vadd.f32 0.0, %v2818
      %2820 = vmatmul.bf16.gmra.mxu0 %v2727
      %v2821 = vpop.f32.mrf.mxu0
      %v2822 = vadd.f32 0.0, %v2821
      %v2823 = vpop.f32.mrf.mxu0
      %v2824 = vadd.f32 0.0, %v2823
      %2825 = vmatmul.bf16.gmra.mxu0 %v2728
      %v2826 = vpop.f32.mrf.mxu0
      %v2827 = vadd.f32 0.0, %v2826
      %v2828 = vpop.f32.mrf.mxu0
      %v2829 = vadd.f32 0.0, %v2828
      %2830 = vmatmul.bf16.gmra.mxu0 %v2729
      %v2831 = vpop.f32.mrf.mxu0
      %v2832 = vadd.f32 0.0, %v2831
      %v2833 = vpop.f32.mrf.mxu0
      %v2834 = vadd.f32 0.0, %v2833
      %2835 = vmatmul.bf16.gmra.mxu0 %v2730
      %v2836 = vpop.f32.mrf.mxu0
      %v2837 = vadd.f32 0.0, %v2836
      %v2838 = vpop.f32.mrf.mxu0
      %v2839 = vadd.f32 0.0, %v2838
      %2840 = vmatmul.bf16.gmra.mxu0 %v2731
      %v2841 = vpop.f32.mrf.mxu0
      %v2842 = vadd.f32 0.0, %v2841
      %v2843 = vpop.f32.mrf.mxu0
      %v2844 = vadd.f32 0.0, %v2843
      %2845 = vdwg.mxu0
      %v2862 = vunpack.c.l.b16 %v2708
      %v2863 = vunpack.c.l.b16 %v2709
      %v2864 = vunpack.c.l.b16 %v2710
      %v2865 = vunpack.c.l.b16 %v2711
      %v2866 = vunpack.c.l.b16 %v2712
      %v2867 = vunpack.c.l.b16 %v2713
      %v2868 = vunpack.c.l.b16 %v2714
      %v2869 = vunpack.c.l.b16 %v2715
      %v2870 = vunpack.c.l.b16 %v2716
      %v2871 = vunpack.c.l.b16 %v2717
      %v2872 = vunpack.c.l.b16 %v2718
      %v2873 = vunpack.c.l.b16 %v2719
      %v2874 = vunpack.c.l.b16 %v2720
      %v2875 = vunpack.c.l.b16 %v2721
      %v2876 = vunpack.c.l.b16 %v2722
      %v2877 = vunpack.c.l.b16 %v2723
      %v2878 = vpack.c.b16 %v2863, %v2862
      %v2879 = vpack.c.b16 %v2865, %v2864
      %v2880 = vpack.c.b16 %v2867, %v2866
      %v2881 = vpack.c.b16 %v2869, %v2868
      %v2882 = vpack.c.b16 %v2871, %v2870
      %v2883 = vpack.c.b16 %v2873, %v2872
      %v2884 = vpack.c.b16 %v2875, %v2874
      %v2885 = vpack.c.b16 %v2877, %v2876
      %2894 = vmatpush.bf16.msra.mxu0 %v2885
      %2895 = vmatpush.bf16.msra.mxu0 %v2884
      %2896 = vmatpush.bf16.msra.mxu0 %v2883
      %2897 = vmatpush.bf16.msra.mxu0 %v2882
      %2898 = vmatpush.bf16.msra.mxu0 %v2881
      %2899 = vmatpush.bf16.msra.mxu0 %v2880
      %2900 = vmatpush.bf16.msra.mxu0 %v2879
      %2901 = vmatpush.bf16.msra.mxu0 %v2878
      %2902 = vmatmul.bf16.gmra.mxu0 %v2700
      %v2903 = vpop.f32.mrf.mxu0
      %v2904 = vadd.f32 %v2807, %v2903
      %v2905 = vpop.f32.mrf.mxu0
      %v2906 = vadd.f32 %v2809, %v2905
      %2907 = vmatmul.bf16.gmra.mxu0 %v2701
      %v2908 = vpop.f32.mrf.mxu0
      %v2909 = vadd.f32 %v2812, %v2908
      %v2910 = vpop.f32.mrf.mxu0
      %v2911 = vadd.f32 %v2814, %v2910
      %2912 = vmatmul.bf16.gmra.mxu0 %v2702
      %v2913 = vpop.f32.mrf.mxu0
      %v2914 = vadd.f32 %v2817, %v2913
      %v2915 = vpop.f32.mrf.mxu0
      %v2916 = vadd.f32 %v2819, %v2915
      %2917 = vmatmul.bf16.gmra.mxu0 %v2703
      %v2918 = vpop.f32.mrf.mxu0
      %v2919 = vadd.f32 %v2822, %v2918
      %v2920 = vpop.f32.mrf.mxu0
      %v2921 = vadd.f32 %v2824, %v2920
      %2922 = vmatmul.bf16.gmra.mxu0 %v2704
      %v2923 = vpop.f32.mrf.mxu0
      %v2924 = vadd.f32 %v2827, %v2923
      %v2925 = vpop.f32.mrf.mxu0
      %v2926 = vadd.f32 %v2829, %v2925
      %2927 = vmatmul.bf16.gmra.mxu0 %v2705
      %v2928 = vpop.f32.mrf.mxu0
      %v2929 = vadd.f32 %v2832, %v2928
      %v2930 = vpop.f32.mrf.mxu0
      %v2931 = vadd.f32 %v2834, %v2930
      %2932 = vmatmul.bf16.gmra.mxu0 %v2706
      %v2933 = vpop.f32.mrf.mxu0
      %v2934 = vadd.f32 %v2837, %v2933
      %v2935 = vpop.f32.mrf.mxu0
      %v2936 = vadd.f32 %v2839, %v2935
      %2937 = vmatmul.bf16.gmra.mxu0 %v2707
      %v2938 = vpop.f32.mrf.mxu0
      %v2939 = vadd.f32 %v2842, %v2938
      %v2940 = vpop.f32.mrf.mxu0
      %v2941 = vadd.f32 %v2844, %v2940
      %2942 = vdwg.mxu0
      %v2943 = vsub.f32 0.0, %v2904
      %v2944 = vsub.f32 0.0, %v2906
      %v2945 = vsub.f32 0.0, %v2909
      %v2946 = vsub.f32 0.0, %v2911
      %v2947 = vsub.f32 0.0, %v2914
      %v2948 = vsub.f32 0.0, %v2916
      %v2949 = vsub.f32 0.0, %v2919
      %v2950 = vsub.f32 0.0, %v2921
      %v2951 = vsub.f32 0.0, %v2924
      %v2952 = vsub.f32 0.0, %v2926
      %v2953 = vsub.f32 0.0, %v2929
      %v2954 = vsub.f32 0.0, %v2931
      %v2955 = vsub.f32 0.0, %v2934
      %v2956 = vsub.f32 0.0, %v2936
      %v2957 = vsub.f32 0.0, %v2939
      %v2958 = vsub.f32 0.0, %v2941
      %v2959 = vmul.f32 %v2943, 1.442695
      %v2960 = vpow.pop %v2959
      %v2961 = vmul.f32 %v2944, 1.442695
      %v2962 = vpow.pop %v2961
      %v2963 = vmul.f32 %v2945, 1.442695
      %v2964 = vpow.pop %v2963
      %v2965 = vmul.f32 %v2946, 1.442695
      %v2966 = vpow.pop %v2965
      %v2967 = vmul.f32 %v2947, 1.442695
      %v2968 = vpow.pop %v2967
      %v2969 = vmul.f32 %v2948, 1.442695
      %v2970 = vpow.pop %v2969
      %v2971 = vmul.f32 %v2949, 1.442695
      %v2972 = vpow.pop %v2971
      %v2973 = vmul.f32 %v2950, 1.442695
      %v2974 = vpow.pop %v2973
      %v2975 = vmul.f32 %v2951, 1.442695
      %v2976 = vpow.pop %v2975
      %v2977 = vmul.f32 %v2952, 1.442695
      %v2978 = vpow.pop %v2977
      %v2979 = vmul.f32 %v2953, 1.442695
      %v2980 = vpow.pop %v2979
      %v2981 = vmul.f32 %v2954, 1.442695
      %v2982 = vpow.pop %v2981
      %v2983 = vmul.f32 %v2955, 1.442695
      %v2984 = vpow.pop %v2983
      %v2985 = vmul.f32 %v2956, 1.442695
      %v2986 = vpow.pop %v2985
      %v2987 = vmul.f32 %v2957, 1.442695
      %v2988 = vpow.pop %v2987
      %v2989 = vmul.f32 %v2958, 1.442695
      %v2990 = vpow.pop %v2989
      %v2991 = vadd.f32 %v2960, 1.0
      %v2992 = vadd.f32 %v2962, 1.0
      %v2993 = vadd.f32 %v2964, 1.0
      %v2994 = vadd.f32 %v2966, 1.0
      %v2995 = vadd.f32 %v2968, 1.0
      %v2996 = vadd.f32 %v2970, 1.0
      %v2997 = vadd.f32 %v2972, 1.0
      %v2998 = vadd.f32 %v2974, 1.0
      %v2999 = vadd.f32 %v2976, 1.0
      %v3000 = vadd.f32 %v2978, 1.0
      %v3001 = vadd.f32 %v2980, 1.0
      %v3002 = vadd.f32 %v2982, 1.0
      %v3003 = vadd.f32 %v2984, 1.0
      %v3004 = vadd.f32 %v2986, 1.0
      %v3005 = vadd.f32 %v2988, 1.0
      %v3006 = vadd.f32 %v2990, 1.0
      %v3007 = vrcp.pop %v2991
      %v3008 = vmul.f32 %v2991, %v3007
      %v3009 = vsub.f32 1.0, %v3008
      %v3010 = vmul.f32 %v3007, %v3009
      %v3011 = vadd.f32 %v3007, %v3010
      %vm3012 = vweird.f32 %v2991
      %vm3013 = vweird.f32 %v3007
      %vm3014 = vmor %vm3012, %vm3013
      %v3015 = vsel %vm3014, %v3007, %v3011
      %v3016 = vand.u32 2147483647, %v2991
      %vm3017 = vcmp.eq.f32.partialorder %v3016, 8.507059e+37
      %v3018 = vand.u32 %v2991, 2147483648
      %v3019 = vor.u32 1.1754944e-38, %v3018
      %v3020 = vsel %vm3017, %v3019, %v3015
      %v3021 = vmul.f32 %v2904, %v3020
      %v3022 = vrcp.pop %v2992
      %v3023 = vmul.f32 %v2992, %v3022
      %v3024 = vsub.f32 1.0, %v3023
      %v3025 = vmul.f32 %v3022, %v3024
      %v3026 = vadd.f32 %v3022, %v3025
      %vm3027 = vweird.f32 %v2992
      %vm3028 = vweird.f32 %v3022
      %vm3029 = vmor %vm3027, %vm3028
      %v3030 = vsel %vm3029, %v3022, %v3026
      %v3031 = vand.u32 2147483647, %v2992
      %vm3032 = vcmp.eq.f32.partialorder %v3031, 8.507059e+37
      %v3033 = vand.u32 %v2992, 2147483648
      %v3034 = vor.u32 1.1754944e-38, %v3033
      %v3035 = vsel %vm3032, %v3034, %v3030
      %v3036 = vmul.f32 %v2906, %v3035
      %v3037 = vrcp.pop %v2993
      %v3038 = vmul.f32 %v2993, %v3037
      %v3039 = vsub.f32 1.0, %v3038
      %v3040 = vmul.f32 %v3037, %v3039
      %v3041 = vadd.f32 %v3037, %v3040
      %vm3042 = vweird.f32 %v2993
      %vm3043 = vweird.f32 %v3037
      %vm3044 = vmor %vm3042, %vm3043
      %v3045 = vsel %vm3044, %v3037, %v3041
      %v3046 = vand.u32 2147483647, %v2993
      %vm3047 = vcmp.eq.f32.partialorder %v3046, 8.507059e+37
      %v3048 = vand.u32 %v2993, 2147483648
      %v3049 = vor.u32 1.1754944e-38, %v3048
      %v3050 = vsel %vm3047, %v3049, %v3045
      %v3051 = vmul.f32 %v2909, %v3050
      %v3052 = vrcp.pop %v2994
      %v3053 = vmul.f32 %v2994, %v3052
      %v3054 = vsub.f32 1.0, %v3053
      %v3055 = vmul.f32 %v3052, %v3054
      %v3056 = vadd.f32 %v3052, %v3055
      %vm3057 = vweird.f32 %v2994
      %vm3058 = vweird.f32 %v3052
      %vm3059 = vmor %vm3057, %vm3058
      %v3060 = vsel %vm3059, %v3052, %v3056
      %v3061 = vand.u32 2147483647, %v2994
      %vm3062 = vcmp.eq.f32.partialorder %v3061, 8.507059e+37
      %v3063 = vand.u32 %v2994, 2147483648
      %v3064 = vor.u32 1.1754944e-38, %v3063
      %v3065 = vsel %vm3062, %v3064, %v3060
      %v3066 = vmul.f32 %v2911, %v3065
      %v3067 = vrcp.pop %v2995
      %v3068 = vmul.f32 %v2995, %v3067
      %v3069 = vsub.f32 1.0, %v3068
      %v3070 = vmul.f32 %v3067, %v3069
      %v3071 = vadd.f32 %v3067, %v3070
      %vm3072 = vweird.f32 %v2995
      %vm3073 = vweird.f32 %v3067
      %vm3074 = vmor %vm3072, %vm3073
      %v3075 = vsel %vm3074, %v3067, %v3071
      %v3076 = vand.u32 2147483647, %v2995
      %vm3077 = vcmp.eq.f32.partialorder %v3076, 8.507059e+37
      %v3078 = vand.u32 %v2995, 2147483648
      %v3079 = vor.u32 1.1754944e-38, %v3078
      %v3080 = vsel %vm3077, %v3079, %v3075
      %v3081 = vmul.f32 %v2914, %v3080
      %v3082 = vrcp.pop %v2996
      %v3083 = vmul.f32 %v2996, %v3082
      %v3084 = vsub.f32 1.0, %v3083
      %v3085 = vmul.f32 %v3082, %v3084
      %v3086 = vadd.f32 %v3082, %v3085
      %vm3087 = vweird.f32 %v2996
      %vm3088 = vweird.f32 %v3082
      %vm3089 = vmor %vm3087, %vm3088
      %v3090 = vsel %vm3089, %v3082, %v3086
      %v3091 = vand.u32 2147483647, %v2996
      %vm3092 = vcmp.eq.f32.partialorder %v3091, 8.507059e+37
      %v3093 = vand.u32 %v2996, 2147483648
      %v3094 = vor.u32 1.1754944e-38, %v3093
      %v3095 = vsel %vm3092, %v3094, %v3090
      %v3096 = vmul.f32 %v2916, %v3095
      %v3097 = vrcp.pop %v2997
      %v3098 = vmul.f32 %v2997, %v3097
      %v3099 = vsub.f32 1.0, %v3098
      %v3100 = vmul.f32 %v3097, %v3099
      %v3101 = vadd.f32 %v3097, %v3100
      %vm3102 = vweird.f32 %v2997
      %vm3103 = vweird.f32 %v3097
      %vm3104 = vmor %vm3102, %vm3103
      %v3105 = vsel %vm3104, %v3097, %v3101
      %v3106 = vand.u32 2147483647, %v2997
      %vm3107 = vcmp.eq.f32.partialorder %v3106, 8.507059e+37
      %v3108 = vand.u32 %v2997, 2147483648
      %v3109 = vor.u32 1.1754944e-38, %v3108
      %v3110 = vsel %vm3107, %v3109, %v3105
      %v3111 = vmul.f32 %v2919, %v3110
      %v3112 = vrcp.pop %v2998
      %v3113 = vmul.f32 %v2998, %v3112
      %v3114 = vsub.f32 1.0, %v3113
      %v3115 = vmul.f32 %v3112, %v3114
      %v3116 = vadd.f32 %v3112, %v3115
      %vm3117 = vweird.f32 %v2998
      %vm3118 = vweird.f32 %v3112
      %vm3119 = vmor %vm3117, %vm3118
      %v3120 = vsel %vm3119, %v3112, %v3116
      %v3121 = vand.u32 2147483647, %v2998
      %vm3122 = vcmp.eq.f32.partialorder %v3121, 8.507059e+37
      %v3123 = vand.u32 %v2998, 2147483648
      %v3124 = vor.u32 1.1754944e-38, %v3123
      %v3125 = vsel %vm3122, %v3124, %v3120
      %v3126 = vmul.f32 %v2921, %v3125
      %v3127 = vrcp.pop %v2999
      %v3128 = vmul.f32 %v2999, %v3127
      %v3129 = vsub.f32 1.0, %v3128
      %v3130 = vmul.f32 %v3127, %v3129
      %v3131 = vadd.f32 %v3127, %v3130
      %vm3132 = vweird.f32 %v2999
      %vm3133 = vweird.f32 %v3127
      %vm3134 = vmor %vm3132, %vm3133
      %v3135 = vsel %vm3134, %v3127, %v3131
      %v3136 = vand.u32 2147483647, %v2999
      %vm3137 = vcmp.eq.f32.partialorder %v3136, 8.507059e+37
      %v3138 = vand.u32 %v2999, 2147483648
      %v3139 = vor.u32 1.1754944e-38, %v3138
      %v3140 = vsel %vm3137, %v3139, %v3135
      %v3141 = vmul.f32 %v2924, %v3140
      %v3142 = vrcp.pop %v3000
      %v3143 = vmul.f32 %v3000, %v3142
      %v3144 = vsub.f32 1.0, %v3143
      %v3145 = vmul.f32 %v3142, %v3144
      %v3146 = vadd.f32 %v3142, %v3145
      %vm3147 = vweird.f32 %v3000
      %vm3148 = vweird.f32 %v3142
      %vm3149 = vmor %vm3147, %vm3148
      %v3150 = vsel %vm3149, %v3142, %v3146
      %v3151 = vand.u32 2147483647, %v3000
      %vm3152 = vcmp.eq.f32.partialorder %v3151, 8.507059e+37
      %v3153 = vand.u32 %v3000, 2147483648
      %v3154 = vor.u32 1.1754944e-38, %v3153
      %v3155 = vsel %vm3152, %v3154, %v3150
      %v3156 = vmul.f32 %v2926, %v3155
      %v3157 = vrcp.pop %v3001
      %v3158 = vmul.f32 %v3001, %v3157
      %v3159 = vsub.f32 1.0, %v3158
      %v3160 = vmul.f32 %v3157, %v3159
      %v3161 = vadd.f32 %v3157, %v3160
      %vm3162 = vweird.f32 %v3001
      %vm3163 = vweird.f32 %v3157
      %vm3164 = vmor %vm3162, %vm3163
      %v3165 = vsel %vm3164, %v3157, %v3161
      %v3166 = vand.u32 2147483647, %v3001
      %vm3167 = vcmp.eq.f32.partialorder %v3166, 8.507059e+37
      %v3168 = vand.u32 %v3001, 2147483648
      %v3169 = vor.u32 1.1754944e-38, %v3168
      %v3170 = vsel %vm3167, %v3169, %v3165
      %v3171 = vmul.f32 %v2929, %v3170
      %v3172 = vrcp.pop %v3002
      %v3173 = vmul.f32 %v3002, %v3172
      %v3174 = vsub.f32 1.0, %v3173
      %v3175 = vmul.f32 %v3172, %v3174
      %v3176 = vadd.f32 %v3172, %v3175
      %vm3177 = vweird.f32 %v3002
      %vm3178 = vweird.f32 %v3172
      %vm3179 = vmor %vm3177, %vm3178
      %v3180 = vsel %vm3179, %v3172, %v3176
      %v3181 = vand.u32 2147483647, %v3002
      %vm3182 = vcmp.eq.f32.partialorder %v3181, 8.507059e+37
      %v3183 = vand.u32 %v3002, 2147483648
      %v3184 = vor.u32 1.1754944e-38, %v3183
      %v3185 = vsel %vm3182, %v3184, %v3180
      %v3186 = vmul.f32 %v2931, %v3185
      %v3187 = vrcp.pop %v3003
      %v3188 = vmul.f32 %v3003, %v3187
      %v3189 = vsub.f32 1.0, %v3188
      %v3190 = vmul.f32 %v3187, %v3189
      %v3191 = vadd.f32 %v3187, %v3190
      %vm3192 = vweird.f32 %v3003
      %vm3193 = vweird.f32 %v3187
      %vm3194 = vmor %vm3192, %vm3193
      %v3195 = vsel %vm3194, %v3187, %v3191
      %v3196 = vand.u32 2147483647, %v3003
      %vm3197 = vcmp.eq.f32.partialorder %v3196, 8.507059e+37
      %v3198 = vand.u32 %v3003, 2147483648
      %v3199 = vor.u32 1.1754944e-38, %v3198
      %v3200 = vsel %vm3197, %v3199, %v3195
      %v3201 = vmul.f32 %v2934, %v3200
      %v3202 = vrcp.pop %v3004
      %v3203 = vmul.f32 %v3004, %v3202
      %v3204 = vsub.f32 1.0, %v3203
      %v3205 = vmul.f32 %v3202, %v3204
      %v3206 = vadd.f32 %v3202, %v3205
      %vm3207 = vweird.f32 %v3004
      %vm3208 = vweird.f32 %v3202
      %vm3209 = vmor %vm3207, %vm3208
      %v3210 = vsel %vm3209, %v3202, %v3206
      %v3211 = vand.u32 2147483647, %v3004
      %vm3212 = vcmp.eq.f32.partialorder %v3211, 8.507059e+37
      %v3213 = vand.u32 %v3004, 2147483648
      %v3214 = vor.u32 1.1754944e-38, %v3213
      %v3215 = vsel %vm3212, %v3214, %v3210
      %v3216 = vmul.f32 %v2936, %v3215
      %v3217 = vrcp.pop %v3005
      %v3218 = vmul.f32 %v3005, %v3217
      %v3219 = vsub.f32 1.0, %v3218
      %v3220 = vmul.f32 %v3217, %v3219
      %v3221 = vadd.f32 %v3217, %v3220
      %vm3222 = vweird.f32 %v3005
      %vm3223 = vweird.f32 %v3217
      %vm3224 = vmor %vm3222, %vm3223
      %v3225 = vsel %vm3224, %v3217, %v3221
      %v3226 = vand.u32 2147483647, %v3005
      %vm3227 = vcmp.eq.f32.partialorder %v3226, 8.507059e+37
      %v3228 = vand.u32 %v3005, 2147483648
      %v3229 = vor.u32 1.1754944e-38, %v3228
      %v3230 = vsel %vm3227, %v3229, %v3225
      %v3231 = vmul.f32 %v2939, %v3230
      %v3232 = vrcp.pop %v3006
      %v3233 = vmul.f32 %v3006, %v3232
      %v3234 = vsub.f32 1.0, %v3233
      %v3235 = vmul.f32 %v3232, %v3234
      %v3236 = vadd.f32 %v3232, %v3235
      %vm3237 = vweird.f32 %v3006
      %vm3238 = vweird.f32 %v3232
      %vm3239 = vmor %vm3237, %vm3238
      %v3240 = vsel %vm3239, %v3232, %v3236
      %v3241 = vand.u32 2147483647, %v3006
      %vm3242 = vcmp.eq.f32.partialorder %v3241, 8.507059e+37
      %v3243 = vand.u32 %v3006, 2147483648
      %v3244 = vor.u32 1.1754944e-38, %v3243
      %v3245 = vsel %vm3242, %v3244, %v3240
      %v3246 = vmul.f32 %v2941, %v3245
      %v3247 = vpack.c.bf16 %v3021, %v3021
      %v3248 = vpack.c.bf16 %v3036, %v3036
      %v3249 = vpack.c.bf16 %v3051, %v3051
      %v3250 = vpack.c.bf16 %v3066, %v3066
      %v3251 = vpack.c.bf16 %v3081, %v3081
      %v3252 = vpack.c.bf16 %v3096, %v3096
      %v3253 = vpack.c.bf16 %v3111, %v3111
      %v3254 = vpack.c.bf16 %v3126, %v3126
      %v3255 = vpack.c.bf16 %v3141, %v3141
      %v3256 = vpack.c.bf16 %v3156, %v3156
      %v3257 = vpack.c.bf16 %v3171, %v3171
      %v3258 = vpack.c.bf16 %v3186, %v3186
      %v3259 = vpack.c.bf16 %v3201, %v3201
      %v3260 = vpack.c.bf16 %v3216, %v3216
      %v3261 = vpack.c.bf16 %v3231, %v3231
      %v3262 = vpack.c.bf16 %v3246, %v3246
      %3263 = vst [vmem:[%s370] sm:$0xf] %v3247
      %3264 = vst [vmem:[%s370 + $0x4] sm:$0xf] %v3248
      %3265 = vst [vmem:[%s370 + $0x8] sm:$0xf] %v3249
      %3266 = vst [vmem:[%s370 + $0xc] sm:$0xf] %v3250
      %3267 = vst [vmem:[%s370 + $0x10] sm:$0xf] %v3251
      %3268 = vst [vmem:[%s370 + $0x14] sm:$0xf] %v3252
      %3269 = vst [vmem:[%s370 + $0x18] sm:$0xf] %v3253
      %3270 = vst [vmem:[%s370 + $0x1c] sm:$0xf] %v3254
      %3271 = vst [vmem:[%s370 + $0x20] sm:$0xf] %v3255
      %3272 = vst [vmem:[%s370 + $0x24] sm:$0xf] %v3256
      %3273 = vst [vmem:[%s370 + $0x28] sm:$0xf] %v3257
      %3274 = vst [vmem:[%s370 + $0x2c] sm:$0xf] %v3258
      %3275 = vst [vmem:[%s370 + $0x30] sm:$0xf] %v3259
      %3276 = vst [vmem:[%s370 + $0x34] sm:$0xf] %v3260
      %3277 = vst [vmem:[%s370 + $0x38] sm:$0xf] %v3261
      %3278 = vst [vmem:[%s370 + $0x3c] sm:$0xf] %v3262
      %s3279 = smul.u32 8, %s25
      %p3280 = scmp.lt.s32.totalorder %s24, 1
      %s3281 = scalar_select %p3280, %s24, 1
      %p3282 = scmp.lt.s32.totalorder %s3279, 15
      %s3283 = scalar_select %p3282, %s3279, 15
      %s3284 = smul.addr %s3283, 2
      %s3285 = smul.addr %s3281, 32
      %s3286 = sadd.s32 %s3284, %s3285
      %s3287 = smul.addr %s3286, 4
      %s3288 = scalar_lea.vmem %s9, %s3287
      // Predicated region
      $region65: #{bottleneck_csp_forward.1} parent=55 // pred_check
        %p3289 = pneg %p250
      $region66: #{bottleneck_csp_forward.1} parent=55 // pred_check_branch
        %3291 = sbr.rel (%p3289) target = $region68
      $region67: #{bottleneck_csp_forward.1} parent=55 // pred_region
        %s3292 = smul.u32 8, %s25
      $region68: #{bottleneck_csp_forward.1} parent=55 // pred_fallthru
        _
    $region56: #{bottleneck_csp_forward.1} parent=5 // pred_fallthru
      _
    %p3293 = scmp.le.s32.totalorder 2, %s15
    // Predicated region
    $region69: #{bottleneck_csp_forward.1} parent=5 // pred_check
      %p3294 = pneg %p3293
    $region70: #{bottleneck_csp_forward.1} parent=5 // pred_check_branch
      %3296 = sbr.rel (%p3294) target = $region72
    $region71: #{bottleneck_csp_forward.1} parent=5 // pred_region
      %s3297 = ssub.s32 %s15, 2
      // Predicated region
      $region73: #{bottleneck_csp_forward.1} parent=71 // pred_check
        %p3298 = pneg %p256
      $region74: #{bottleneck_csp_forward.1} parent=71 // pred_check_branch
        %3300 = sbr.rel (%p3298) target = $region76
      $region75: #{bottleneck_csp_forward.1} parent=71 // pred_region
        %s3301 = smul.u32 8, %s27
        %p3302 = scmp.lt.s32.totalorder %s26, 1
        %s3303 = scalar_select %p3302, %s26, 1
        %p3304 = scmp.lt.s32.totalorder %s3301, 15
        %s3305 = scalar_select %p3304, %s3301, 15
        %s3306 = smul.addr %s3305, 2
        %s3307 = smul.addr %s3303, 32
        %s3308 = sadd.s32 %s3306, %s3307
        %s3309 = smul.addr %s3308, 4
        %s3310 = scalar_lea.vmem %s9, %s3309
      $region76: #{bottleneck_csp_forward.1} parent=71 // pred_fallthru
        _
    $region72: #{bottleneck_csp_forward.1} parent=5 // pred_fallthru
      _
  $region6: #{bottleneck_csp_forward.1} parent=0 // loop_footer
    %s19 = sadd.s32 1, %s15
  $region7: #{bottleneck_csp_forward.1} parent=0 // loop_footer_branch
    %14 = sbr.rel target = $region3
  $region8: #{bottleneck_csp_forward.1} parent=0 // loop_exit
    _

</llo_original>
